<compile_context>
chip_gen: v6e
topology: v6e:2x2x1
jax: 0.10.0
libtpu: 0.0.40
codegen_flags: <defaults>
</compile_context>

<pallas_src>
import functools

import jax
import jax.numpy as jnp
from jax import lax
from jax.experimental import pallas as pl
from jax.experimental.pallas import tpu as pltpu  # noqa: F401  (TPU backend / memory spaces)

LEAKY_SLOPE = 0.2
LN_EPS = 1e-5


def _leaky(x):
    return jnp.where(x > 0, x, LEAKY_SLOPE * x)


# ----------------------------- Single fused Pallas kernel -----------------------------

def _stripgcm_kernel(
        x_ref, wf_ref, bf_ref, mavg_ref,
        wc1_ref, bc1_ref,
        ih_head_ref, ih_m1_ref, ih_m2_ref, ih_tail_ref, ih_adj_ref,
        iv_head_ref, iv_m1_ref, iv_m2_ref, iv_tail_ref, iv_adj_ref,
        wfu1_ref, bfu1_ref,
        wc2_ref, bc2_ref,
        eh_head_ref, eh_m1_ref, eh_m2_ref, eh_tail_ref, eh_adj_ref,
        ev_head_ref, ev_m1_ref, ev_m2_ref, ev_tail_ref, ev_adj_ref,
        wfu2_ref, bfu2_ref,
        out_ref, *, n_res, half_rows):
    """Whole StripGCM forward.  All activations are (rows, HW=128) lane-dense slabs."""

    def mm(a, b):
        return jnp.dot(a, b, preferred_element_type=jnp.float32)

    def ln_conv_act(y, wc, bc):
        # LayerNorm over channels (per batch, per pixel) via block-averaging matmuls;
        # gamma/beta are pre-folded into (wc, bc) by prepare_operands().
        mavg = mavg_ref[...]
        mu = mm(mavg, y)
        d = y - mu
        var = mm(mavg, d * d)
        n = d * lax.rsqrt(var + LN_EPS)
        return _leaky(mm(wc, n) + bc)

    def gcm(z, head_ref, m1_ref, m2_ref, tail_ref, adj_ref):
        # GraphConvModule: every GraphConvolution is a left kron(I, W^T) multiply and
        # a right kron(., adj^T) multiply on the lane-dense slab.
        adj_r = adj_ref[...]
        u = mm(mm(head_ref[...], z), adj_r)                       # head (no activation)
        for i in range(n_res):                                     # static unroll
            v = _leaky(mm(mm(m1_ref[i], u), adj_r))
            v = mm(mm(m2_ref[i], v), adj_r)
            u = u + v                                              # ResGCN skip
        return _leaky(mm(mm(tail_ref[...], u), adj_r))             # tail + activation

    # firstconv (1x1) -- batch folded into rows via block-diagonal weight
    y0 = mm(wf_ref[...], x_ref[...]) + bf_ref[...]

    # ---- IntraStripGCM ----
    z1 = ln_conv_act(y0, wc1_ref[...], bc1_ref[...])               # rows: [h-half | v-half]
    gh = gcm(z1[:half_rows], ih_head_ref, ih_m1_ref, ih_m2_ref, ih_tail_ref, ih_adj_ref)
    gv = gcm(z1[half_rows:], iv_head_ref, iv_m1_ref, iv_m2_ref, iv_tail_ref, iv_adj_ref)
    g1 = jnp.concatenate([gh, gv], axis=0)
    a1 = mm(wfu1_ref[...], g1) + bfu1_ref[...] + y0                # fuse conv + residual

    # ---- InterStripGCM ----
    z2 = ln_conv_act(a1, wc2_ref[...], bc2_ref[...])
    gh2 = gcm(z2[:half_rows], eh_head_ref, eh_m1_ref, eh_m2_ref, eh_tail_ref, eh_adj_ref)
    gv2 = gcm(z2[half_rows:], ev_head_ref, ev_m1_ref, ev_m2_ref, ev_tail_ref, ev_adj_ref)
    g2 = jnp.concatenate([gh2, gv2], axis=0)
    out_ref[...] = mm(wfu2_ref[...], g2) + bfu2_ref[...] + a1      # fuse conv + residual


# ----------------------------- One-time operand preparation -----------------------------

def prepare_operands(params, adj, B, H, W):
    """Fold all parameters into the lane-dense / batch-folded operands.

    Done once, outside the per-step forward (pure constant folding)."""
    C = params["first_w"].shape[0]
    C2 = C // 2
    eye_b = jnp.eye(B, dtype=jnp.float32)
    eye_h = jnp.eye(H, dtype=jnp.float32)
    eye_w = jnp.eye(W, dtype=jnp.float32)

    def col(v):
        return jnp.tile(v, B).reshape(-1, 1)

    def fold_ln_conv(p):
        # LN gamma folded into the 1x1 conv weight, beta into its bias; rows permuted so
        # the h-half channels (all batches) come first, then the v-half channels.
        w_eff = p["conv_w"] * p["ln_g"][None, :]
        b_eff = p["conv_w"] @ p["ln_b"] + p["conv_b"]
        w_perm = jnp.concatenate(
            [jnp.kron(eye_b, w_eff[:C2]), jnp.kron(eye_b, w_eff[C2:])], axis=0)
        b_perm = jnp.concatenate(
            [jnp.tile(b_eff[:C2], B), jnp.tile(b_eff[C2:], B)]).reshape(-1, 1)
        return w_perm, b_perm

    def fold_fuse(p):
        # Single matmul over the row-stacked [gh ; gv] slab.
        w_blk = jnp.concatenate(
            [jnp.kron(eye_b, p["fuse_w"][:, :C2]), jnp.kron(eye_b, p["fuse_w"][:, C2:])],
            axis=1)
        return w_blk, col(p["fuse_b"])

    def fold_gcm(p, adj_right):
        # Left operands: kron(I_{B*C2}, W^T). Right operand: (HW, HW) kron with adj^T.
        eye_r = jnp.eye(B * C2, dtype=jnp.float32)
        m_head = jnp.kron(eye_r, p["w_head"].T)                        # (B*C2*g, B*C2)
        m1s = jnp.stack([jnp.kron(eye_r, w.T) for w in p["w1s"]])      # (n_res, ., .)
        m2s = jnp.stack([jnp.kron(eye_r, w.T) for w in p["w2s"]])
        m_tail = jnp.kron(eye_r, p["w_tail"].T)                        # (B*C2, B*C2*g)
        return (m_head, m1s, m2s, m_tail, adj_right)

    pI, pE = params["intra"], params["inter"]
    wc1, bc1 = fold_ln_conv(pI)
    wc2, bc2 = fold_ln_conv(pE)
    wfu1, bfu1 = fold_fuse(pI)
    wfu2, bfu2 = fold_fuse(pE)

    return {
        "wf": jnp.kron(eye_b, params["first_w"]),                       # (B*C, B*Cin)
        "bf": col(params["first_b"]),
        "mavg": jnp.kron(eye_b, jnp.full((C, C), 1.0 / C, jnp.float32)),
        "wc1": wc1, "bc1": bc1,
        # Intra: h-branch mixes along W, v-branch along H.
        "gcm_ih": fold_gcm(pI["gcm_h"], jnp.kron(eye_h, adj["intra_adj_h"].T)),
        "gcm_iv": fold_gcm(pI["gcm_v"], jnp.kron(adj["intra_adj_v"].T, eye_w)),
        "wfu1": wfu1, "bfu1": bfu1,
        "wc2": wc2, "bc2": bc2,
        # Inter: h-branch mixes along H, v-branch along W.
        "gcm_eh": fold_gcm(pE["gcm_h"], jnp.kron(adj["inter_adj_h"].T, eye_w)),
        "gcm_ev": fold_gcm(pE["gcm_v"], jnp.kron(eye_h, adj["inter_adj_v"].T)),
        "wfu2": wfu2, "bfu2": bfu2,
    }


# ----------------------------- Forward wrapper -----------------------------

def stripgcm_forward(ops, x):
    """x: (B, Cin, H, W) NCHW (same convention as the PyTorch module). Returns (B, C, H, W)."""
    B, Cin, H, W = x.shape
    HW = H * W
    n_rows = ops["wf"].shape[0]            # B * C
    C = n_rows // B
    half_rows = ops["gcm_ih"][3].shape[0]  # B * C2   (static from shape)
    n_res = ops["gcm_ih"][1].shape[0]      # number of ResGCN blocks (static from shape)

    kernel = functools.partial(_stripgcm_kernel, n_res=n_res, half_rows=half_rows)
    operands = (
        x.reshape(B * Cin, HW),
        ops["wf"], ops["bf"], ops["mavg"],
        ops["wc1"], ops["bc1"],
        *ops["gcm_ih"], *ops["gcm_iv"],
        ops["wfu1"], ops["bfu1"],
        ops["wc2"], ops["bc2"],
        *ops["gcm_eh"], *ops["gcm_ev"],
        ops["wfu2"], ops["bfu2"],
    )
    # No grid: every operand is a full-array VMEM block (everything fits with huge margin
    # on v5e/v6e/v7x), so the whole forward is a single kernel invocation.
    out = pl.pallas_call(
        kernel,
        out_shape=jax.ShapeDtypeStruct((n_rows, HW), jnp.float32),
    )(*operands)
    return out.reshape(B, C, H, W)


# ----------------------------- Pure-JAX reference (mirrors PyTorch) -----------------------------

def _layer_norm_ref(x, gamma, beta):
    B, C, H, W = x.shape
    t = x.reshape(B, C, H * W).transpose(0, 2, 1)
    mu = jnp.mean(t, axis=-1, keepdims=True)
    var = jnp.mean((t - mu) ** 2, axis=-1, keepdims=True)
    t = (t - mu) / jnp.sqrt(var + LN_EPS) * gamma + beta
    return t.transpose(0, 2, 1).reshape(B, C, H, W)


def _conv1x1_ref(x, w, b=None):
    y = jnp.einsum("oc,bchw->bohw", w, x, precision="highest")
    if b is not None:
        y = y + b.reshape(1, -1, 1, 1)
    return y


def _gcm_ref(x, adj, p):
    # x: (B', M, L), adj: (L, L)
    s = jnp.einsum("lk,bmk->bml", adj, x, precision="highest")
    u = s[..., None] * p["w_head"].reshape(1, 1, 1, -1)
    for w1, w2 in zip(p["w1s"], p["w2s"]):
        v = jnp.einsum("bmkg,gj->bmkj", u, w1, precision="highest")
        v = jnp.einsum("lk,bmkj->bmlj", adj, v, precision="highest")
        v = _leaky(v)
        v = jnp.einsum("bmkg,gj->bmkj", v, w2, precision="highest")
        v = jnp.einsum("lk,bmkj->bmlj", adj, v, precision="highest")
        u = u + v
    t = jnp.einsum("bmkg,gj->bmkj", u, p["w_tail"], precision="highest")
    t = jnp.einsum("lk,bmkj->bmlj", adj, t, precision="highest")
    return _leaky(t)[..., 0]


def _intra_ref(x, adj, p):
    B, C, H, W = x.shape
    C2 = C // 2
    res = x
    z = _conv1x1_ref(_layer_norm_ref(x, p["ln_g"], p["ln_b"]), p["conv_w"], p["conv_b"])
    fh, fv = _leaky(z[:, :C2]), _leaky(z[:, C2:])
    fh = fh.transpose(0, 2, 1, 3).reshape(B * H, C2, W)
    fv = fv.transpose(0, 3, 1, 2).reshape(B * W, C2, H)
    gh = _gcm_ref(fh, adj["intra_adj_h"], p["gcm_h"])
    gv = _gcm_ref(fv, adj["intra_adj_v"], p["gcm_v"])
    gh = gh.reshape(B, H, C2, W).transpose(0, 2, 1, 3)
    gv = gv.reshape(B, W, C2, H).transpose(0, 2, 3, 1)
    attn = _conv1x1_ref(jnp.concatenate([gh, gv], axis=1), p["fuse_w"], p["fuse_b"])
    return attn + res


def _inter_ref(x, adj, p):
    B, C, H, W = x.shape
    C2 = C // 2
    res = x
    z = _conv1x1_ref(_layer_norm_ref(x, p["ln_g"], p["ln_b"]), p["conv_w"], p["conv_b"])
    fh, fv = _leaky(z[:, :C2]), _leaky(z[:, C2:])
    fh = fh.transpose(0, 1, 3, 2).reshape(B, C2 * W, H)
    fv = fv.reshape(B, C2 * H, W)
    gh = _gcm_ref(fh, adj["inter_adj_h"], p["gcm_h"])
    gv = _gcm_ref(fv, adj["inter_adj_v"], p["gcm_v"])
    gh = gh.reshape(B, C2, W, H).transpose(0, 1, 3, 2)
    gv = gv.reshape(B, C2, H, W)
    attn = _conv1x1_ref(jnp.concatenate([gh, gv], axis=1), p["fuse_w"], p["fuse_b"])
    return attn + res


def stripgcm_ref(params, x, adj):
    r = _conv1x1_ref(x, params["first_w"], params["first_b"])
    r = _intra_ref(r, adj, params["intra"])
    r = _inter_ref(r, adj, params["inter"])
    return r


# ----------------------------- Parameter init -----------------------------

def make_params(key, in_feature, n_features, n_graph_features, n_resgcn):
    C, g = n_features, n_graph_features
    keys = iter(jax.random.split(key, 128))

    def nrm(shape, scale):
        return scale * jax.random.normal(next(keys), shape, jnp.float32)

    def gcm():
        return {
            "w_head": nrm((1, g), 0.4),
            "w1s": [nrm((g, g), 0.4) for _ in range(n_resgcn)],
            "w2s": [nrm((g, g), 0.4) for _ in range(n_resgcn)],
            "w_tail": nrm((g, 1), 0.4),
        }

    def strip_module():
        return {
            "ln_g": 1.0 + nrm((C,), 0.1),
            "ln_b": nrm((C,), 0.1),
            "conv_w": nrm((C, C), 0.3),
            "conv_b": nrm((C,), 0.05),
            "fuse_w": nrm((C, C), 0.3),
            "fuse_b": nrm((C,), 0.05),
            "gcm_h": gcm(),
            "gcm_v": gcm(),
        }

    return {
        "first_w": nrm((C, in_feature), 0.3),
        "first_b": nrm((C,), 0.05),
        "intra": strip_module(),
        "inter": strip_module(),
    }


# ----------------------------- Main -----------------------------

if __name__ == "__main__":
    B, in_feature, n_features, n_graph_features, n_resgcn = 2, 16, 8, 4, 2
    H, W = 16, 8   # H*W = 128 -> full lane width for every activation slab

    key = jax.random.PRNGKey(0)
    kp, kx, k1, k2, k3, k4 = jax.random.split(key, 6)
    params = make_params(kp, in_feature, n_features, n_graph_features, n_resgcn)
    x = 0.5 * jax.random.normal(kx, (B, in_feature, H, W), jnp.float32)
    adj = {
        "intra_adj_h": 0.3 * jax.random.normal(k1, (W, W), jnp.float32),
        "intra_adj_v": 0.3 * jax.random.normal(k2, (H, H), jnp.float32),
        "inter_adj_h": 0.3 * jax.random.normal(k3, (H, H), jnp.float32),
        "inter_adj_v": 0.3 * jax.random.normal(k4, (W, W), jnp.float32),
    }

    # One-time parameter preprocessing (hoisted out of the per-step forward).
    ops = prepare_operands(params, adj, B, H, W)

    forward = jax.jit(stripgcm_forward)
    out = jax.block_until_ready(forward(ops, x))

    ref = stripgcm_ref(params, x, adj)
    assert out.shape == (B, n_features, H, W), out.shape
    max_err = float(jnp.max(jnp.abs(out - ref)))
    assert max_err < 1e-3, f"max abs error {max_err}"

    print("KERNEL_OK")
</pallas_src>

<mosaic_0001>
module attributes {stable_mosaic.version = 11 : i64} {
  func.func @_stripgcm_kernel(%arg0: memref<32x128xf32, #tpu.memory_space<vmem>>, %arg1: memref<16x32xf32, #tpu.memory_space<vmem>>, %arg2: memref<16x1xf32, #tpu.memory_space<vmem>>, %arg3: memref<16x16xf32, #tpu.memory_space<vmem>>, %arg4: memref<16x16xf32, #tpu.memory_space<vmem>>, %arg5: memref<16x1xf32, #tpu.memory_space<vmem>>, %arg6: memref<32x8xf32, #tpu.memory_space<vmem>>, %arg7: memref<2x32x32xf32, #tpu.memory_space<vmem>>, %arg8: memref<2x32x32xf32, #tpu.memory_space<vmem>>, %arg9: memref<8x32xf32, #tpu.memory_space<vmem>>, %arg10: memref<128x128xf32, #tpu.memory_space<vmem>>, %arg11: memref<32x8xf32, #tpu.memory_space<vmem>>, %arg12: memref<2x32x32xf32, #tpu.memory_space<vmem>>, %arg13: memref<2x32x32xf32, #tpu.memory_space<vmem>>, %arg14: memref<8x32xf32, #tpu.memory_space<vmem>>, %arg15: memref<128x128xf32, #tpu.memory_space<vmem>>, %arg16: memref<16x16xf32, #tpu.memory_space<vmem>>, %arg17: memref<16x1xf32, #tpu.memory_space<vmem>>, %arg18: memref<16x16xf32, #tpu.memory_space<vmem>>, %arg19: memref<16x1xf32, #tpu.memory_space<vmem>>, %arg20: memref<32x8xf32, #tpu.memory_space<vmem>>, %arg21: memref<2x32x32xf32, #tpu.memory_space<vmem>>, %arg22: memref<2x32x32xf32, #tpu.memory_space<vmem>>, %arg23: memref<8x32xf32, #tpu.memory_space<vmem>>, %arg24: memref<128x128xf32, #tpu.memory_space<vmem>>, %arg25: memref<32x8xf32, #tpu.memory_space<vmem>>, %arg26: memref<2x32x32xf32, #tpu.memory_space<vmem>>, %arg27: memref<2x32x32xf32, #tpu.memory_space<vmem>>, %arg28: memref<8x32xf32, #tpu.memory_space<vmem>>, %arg29: memref<128x128xf32, #tpu.memory_space<vmem>>, %arg30: memref<16x16xf32, #tpu.memory_space<vmem>>, %arg31: memref<16x1xf32, #tpu.memory_space<vmem>>, %arg32: memref<16x128xf32, #tpu.memory_space<vmem>>) attributes {dimension_semantics = [], scalar_prefetch = 0 : i64, scratch_operands = 0 : i64, tpu.core_type = #tpu.core_type<tc>} {
    %c0 = arith.constant 0 : index
    %c0_0 = arith.constant 0 : index
    %0 = vector.load %arg1[%c0, %c0_0] : memref<16x32xf32, #tpu.memory_space<vmem>>, vector<16x32xf32>
    %c0_1 = arith.constant 0 : index
    %c0_2 = arith.constant 0 : index
    %1 = vector.load %arg0[%c0_1, %c0_2] : memref<32x128xf32, #tpu.memory_space<vmem>>, vector<32x128xf32>
    %cst = arith.constant dense<0.000000e+00> : vector<16x128xf32>
    %2 = tpu.matmul %0, %1, %cst {dimension_numbers = #tpu.dot_dimension_numbers<[1], [0], [0], [1], [0, 0, 1, 1], [], []>} : vector<16x32xf32>, vector<32x128xf32>, vector<16x128xf32> -> vector<16x128xf32>
    %c0_3 = arith.constant 0 : index
    %c0_4 = arith.constant 0 : index
    %3 = vector.load %arg2[%c0_3, %c0_4] : memref<16x1xf32, #tpu.memory_space<vmem>>, vector<16x1xf32>
    %4 = vector.broadcast %3 : vector<16x1xf32> to vector<16x128xf32>
    %5 = arith.addf %2, %4 : vector<16x128xf32>
    %c0_5 = arith.constant 0 : index
    %c0_6 = arith.constant 0 : index
    %6 = vector.load %arg4[%c0_5, %c0_6] : memref<16x16xf32, #tpu.memory_space<vmem>>, vector<16x16xf32>
    %c0_7 = arith.constant 0 : index
    %c0_8 = arith.constant 0 : index
    %7 = vector.load %arg5[%c0_7, %c0_8] : memref<16x1xf32, #tpu.memory_space<vmem>>, vector<16x1xf32>
    %c0_9 = arith.constant 0 : index
    %c0_10 = arith.constant 0 : index
    %8 = vector.load %arg3[%c0_9, %c0_10] : memref<16x16xf32, #tpu.memory_space<vmem>>, vector<16x16xf32>
    %cst_11 = arith.constant dense<0.000000e+00> : vector<16x128xf32>
    %9 = tpu.matmul %8, %5, %cst_11 {dimension_numbers = #tpu.dot_dimension_numbers<[1], [0], [0], [1], [0, 0, 1, 1], [], []>} : vector<16x16xf32>, vector<16x128xf32>, vector<16x128xf32> -> vector<16x128xf32>
    %10 = arith.subf %5, %9 : vector<16x128xf32>
    %11 = arith.mulf %10, %10 : vector<16x128xf32>
    %cst_12 = arith.constant dense<0.000000e+00> : vector<16x128xf32>
    %12 = tpu.matmul %8, %11, %cst_12 {dimension_numbers = #tpu.dot_dimension_numbers<[1], [0], [0], [1], [0, 0, 1, 1], [], []>} : vector<16x16xf32>, vector<16x128xf32>, vector<16x128xf32> -> vector<16x128xf32>
    %cst_13 = arith.constant 9.99999974E-6 : f32
    %13 = vector.broadcast %cst_13 : f32 to vector<16x128xf32>
    %14 = arith.addf %12, %13 : vector<16x128xf32>
    %15 = math.rsqrt %14 : vector<16x128xf32>
    %16 = arith.mulf %10, %15 : vector<16x128xf32>
    %cst_14 = arith.constant dense<0.000000e+00> : vector<16x128xf32>
    %17 = tpu.matmul %6, %16, %cst_14 {dimension_numbers = #tpu.dot_dimension_numbers<[1], [0], [0], [1], [0, 0, 1, 1], [], []>} : vector<16x16xf32>, vector<16x128xf32>, vector<16x128xf32> -> vector<16x128xf32>
    %18 = vector.broadcast %7 : vector<16x1xf32> to vector<16x128xf32>
    %19 = arith.addf %17, %18 : vector<16x128xf32>
    %cst_15 = arith.constant 0.000000e+00 : f32
    %20 = vector.broadcast %cst_15 : f32 to vector<16x128xf32>
    %21 = arith.cmpf ogt, %19, %20 : vector<16x128xf32>
    %cst_16 = arith.constant 2.000000e-01 : f32
    %22 = vector.broadcast %cst_16 : f32 to vector<16x128xf32>
    %23 = arith.mulf %22, %19 : vector<16x128xf32>
    %24 = arith.select %21, %19, %23 : vector<16x128xi1>, vector<16x128xf32>
    %25 = vector.extract_strided_slice %24 {offsets = [0, 0], sizes = [8, 128], strides = [1, 1]} : vector<16x128xf32> to vector<8x128xf32>
    %c0_17 = arith.constant 0 : index
    %c0_18 = arith.constant 0 : index
    %26 = vector.load %arg10[%c0_17, %c0_18] : memref<128x128xf32, #tpu.memory_space<vmem>>, vector<128x128xf32>
    %c0_19 = arith.constant 0 : index
    %c0_20 = arith.constant 0 : index
    %27 = vector.load %arg6[%c0_19, %c0_20] : memref<32x8xf32, #tpu.memory_space<vmem>>, vector<32x8xf32>
    %cst_21 = arith.constant dense<0.000000e+00> : vector<32x128xf32>
    %28 = tpu.matmul %27, %25, %cst_21 {dimension_numbers = #tpu.dot_dimension_numbers<[1], [0], [0], [1], [0, 0, 1, 1], [], []>} : vector<32x8xf32>, vector<8x128xf32>, vector<32x128xf32> -> vector<32x128xf32>
    %cst_22 = arith.constant dense<0.000000e+00> : vector<32x128xf32>
    %29 = tpu.matmul %28, %26, %cst_22 {dimension_numbers = #tpu.dot_dimension_numbers<[1], [0], [0], [1], [0, 0, 1, 1], [], []>} : vector<32x128xf32>, vector<128x128xf32>, vector<32x128xf32> -> vector<32x128xf32>
    %c0_23 = arith.constant 0 : index
    %c0_24 = arith.constant 0 : index
    %c0_25 = arith.constant 0 : index
    %30 = vector.load %arg7[%c0_23, %c0_24, %c0_25] : memref<2x32x32xf32, #tpu.memory_space<vmem>>, vector<1x32x32xf32>
    %31 = vector.shape_cast %30 : vector<1x32x32xf32> to vector<32x32xf32>
    %cst_26 = arith.constant dense<0.000000e+00> : vector<32x128xf32>
    %32 = tpu.matmul %31, %29, %cst_26 {dimension_numbers = #tpu.dot_dimension_numbers<[1], [0], [0], [1], [0, 0, 1, 1], [], []>} : vector<32x32xf32>, vector<32x128xf32>, vector<32x128xf32> -> vector<32x128xf32>
    %cst_27 = arith.constant dense<0.000000e+00> : vector<32x128xf32>
    %33 = tpu.matmul %32, %26, %cst_27 {dimension_numbers = #tpu.dot_dimension_numbers<[1], [0], [0], [1], [0, 0, 1, 1], [], []>} : vector<32x128xf32>, vector<128x128xf32>, vector<32x128xf32> -> vector<32x128xf32>
    %cst_28 = arith.constant 0.000000e+00 : f32
    %34 = vector.broadcast %cst_28 : f32 to vector<32x128xf32>
    %35 = arith.cmpf ogt, %33, %34 : vector<32x128xf32>
    %cst_29 = arith.constant 2.000000e-01 : f32
    %36 = vector.broadcast %cst_29 : f32 to vector<32x128xf32>
    %37 = arith.mulf %36, %33 : vector<32x128xf32>
    %38 = arith.select %35, %33, %37 : vector<32x128xi1>, vector<32x128xf32>
    %c0_30 = arith.constant 0 : index
    %c0_31 = arith.constant 0 : index
    %c0_32 = arith.constant 0 : index
    %39 = vector.load %arg8[%c0_30, %c0_31, %c0_32] : memref<2x32x32xf32, #tpu.memory_space<vmem>>, vector<1x32x32xf32>
    %40 = vector.shape_cast %39 : vector<1x32x32xf32> to vector<32x32xf32>
    %cst_33 = arith.constant dense<0.000000e+00> : vector<32x128xf32>
    %41 = tpu.matmul %40, %38, %cst_33 {dimension_numbers = #tpu.dot_dimension_numbers<[1], [0], [0], [1], [0, 0, 1, 1], [], []>} : vector<32x32xf32>, vector<32x128xf32>, vector<32x128xf32> -> vector<32x128xf32>
    %cst_34 = arith.constant dense<0.000000e+00> : vector<32x128xf32>
    %42 = tpu.matmul %41, %26, %cst_34 {dimension_numbers = #tpu.dot_dimension_numbers<[1], [0], [0], [1], [0, 0, 1, 1], [], []>} : vector<32x128xf32>, vector<128x128xf32>, vector<32x128xf32> -> vector<32x128xf32>
    %43 = arith.addf %29, %42 : vector<32x128xf32>
    %c1 = arith.constant 1 : index
    %c0_35 = arith.constant 0 : index
    %c0_36 = arith.constant 0 : index
    %44 = vector.load %arg7[%c1, %c0_35, %c0_36] : memref<2x32x32xf32, #tpu.memory_space<vmem>>, vector<1x32x32xf32>
    %45 = vector.shape_cast %44 : vector<1x32x32xf32> to vector<32x32xf32>
    %cst_37 = arith.constant dense<0.000000e+00> : vector<32x128xf32>
    %46 = tpu.matmul %45, %43, %cst_37 {dimension_numbers = #tpu.dot_dimension_numbers<[1], [0], [0], [1], [0, 0, 1, 1], [], []>} : vector<32x32xf32>, vector<32x128xf32>, vector<32x128xf32> -> vector<32x128xf32>
    %cst_38 = arith.constant dense<0.000000e+00> : vector<32x128xf32>
    %47 = tpu.matmul %46, %26, %cst_38 {dimension_numbers = #tpu.dot_dimension_numbers<[1], [0], [0], [1], [0, 0, 1, 1], [], []>} : vector<32x128xf32>, vector<128x128xf32>, vector<32x128xf32> -> vector<32x128xf32>
    %cst_39 = arith.constant 0.000000e+00 : f32
    %48 = vector.broadcast %cst_39 : f32 to vector<32x128xf32>
    %49 = arith.cmpf ogt, %47, %48 : vector<32x128xf32>
    %cst_40 = arith.constant 2.000000e-01 : f32
    %50 = vector.broadcast %cst_40 : f32 to vector<32x128xf32>
    %51 = arith.mulf %50, %47 : vector<32x128xf32>
    %52 = arith.select %49, %47, %51 : vector<32x128xi1>, vector<32x128xf32>
    %c1_41 = arith.constant 1 : index
    %c0_42 = arith.constant 0 : index
    %c0_43 = arith.constant 0 : index
    %53 = vector.load %arg8[%c1_41, %c0_42, %c0_43] : memref<2x32x32xf32, #tpu.memory_space<vmem>>, vector<1x32x32xf32>
    %54 = vector.shape_cast %53 : vector<1x32x32xf32> to vector<32x32xf32>
    %cst_44 = arith.constant dense<0.000000e+00> : vector<32x128xf32>
    %55 = tpu.matmul %54, %52, %cst_44 {dimension_numbers = #tpu.dot_dimension_numbers<[1], [0], [0], [1], [0, 0, 1, 1], [], []>} : vector<32x32xf32>, vector<32x128xf32>, vector<32x128xf32> -> vector<32x128xf32>
    %cst_45 = arith.constant dense<0.000000e+00> : vector<32x128xf32>
    %56 = tpu.matmul %55, %26, %cst_45 {dimension_numbers = #tpu.dot_dimension_numbers<[1], [0], [0], [1], [0, 0, 1, 1], [], []>} : vector<32x128xf32>, vector<128x128xf32>, vector<32x128xf32> -> vector<32x128xf32>
    %57 = arith.addf %43, %56 : vector<32x128xf32>
    %c0_46 = arith.constant 0 : index
    %c0_47 = arith.constant 0 : index
    %58 = vector.load %arg9[%c0_46, %c0_47] : memref<8x32xf32, #tpu.memory_space<vmem>>, vector<8x32xf32>
    %cst_48 = arith.constant dense<0.000000e+00> : vector<8x128xf32>
    %59 = tpu.matmul %58, %57, %cst_48 {dimension_numbers = #tpu.dot_dimension_numbers<[1], [0], [0], [1], [0, 0, 1, 1], [], []>} : vector<8x32xf32>, vector<32x128xf32>, vector<8x128xf32> -> vector<8x128xf32>
    %cst_49 = arith.constant dense<0.000000e+00> : vector<8x128xf32>
    %60 = tpu.matmul %59, %26, %cst_49 {dimension_numbers = #tpu.dot_dimension_numbers<[1], [0], [0], [1], [0, 0, 1, 1], [], []>} : vector<8x128xf32>, vector<128x128xf32>, vector<8x128xf32> -> vector<8x128xf32>
    %cst_50 = arith.constant 0.000000e+00 : f32
    %61 = vector.broadcast %cst_50 : f32 to vector<8x128xf32>
    %62 = arith.cmpf ogt, %60, %61 : vector<8x128xf32>
    %cst_51 = arith.constant 2.000000e-01 : f32
    %63 = vector.broadcast %cst_51 : f32 to vector<8x128xf32>
    %64 = arith.mulf %63, %60 : vector<8x128xf32>
    %65 = arith.select %62, %60, %64 : vector<8x128xi1>, vector<8x128xf32>
    %66 = vector.extract_strided_slice %24 {offsets = [8, 0], sizes = [8, 128], strides = [1, 1]} : vector<16x128xf32> to vector<8x128xf32>
    %c0_52 = arith.constant 0 : index
    %c0_53 = arith.constant 0 : index
    %67 = vector.load %arg15[%c0_52, %c0_53] : memref<128x128xf32, #tpu.memory_space<vmem>>, vector<128x128xf32>
    %c0_54 = arith.constant 0 : index
    %c0_55 = arith.constant 0 : index
    %68 = vector.load %arg11[%c0_54, %c0_55] : memref<32x8xf32, #tpu.memory_space<vmem>>, vector<32x8xf32>
    %cst_56 = arith.constant dense<0.000000e+00> : vector<32x128xf32>
    %69 = tpu.matmul %68, %66, %cst_56 {dimension_numbers = #tpu.dot_dimension_numbers<[1], [0], [0], [1], [0, 0, 1, 1], [], []>} : vector<32x8xf32>, vector<8x128xf32>, vector<32x128xf32> -> vector<32x128xf32>
    %cst_57 = arith.constant dense<0.000000e+00> : vector<32x128xf32>
    %70 = tpu.matmul %69, %67, %cst_57 {dimension_numbers = #tpu.dot_dimension_numbers<[1], [0], [0], [1], [0, 0, 1, 1], [], []>} : vector<32x128xf32>, vector<128x128xf32>, vector<32x128xf32> -> vector<32x128xf32>
    %c0_58 = arith.constant 0 : index
    %c0_59 = arith.constant 0 : index
    %c0_60 = arith.constant 0 : index
    %71 = vector.load %arg12[%c0_58, %c0_59, %c0_60] : memref<2x32x32xf32, #tpu.memory_space<vmem>>, vector<1x32x32xf32>
    %72 = vector.shape_cast %71 : vector<1x32x32xf32> to vector<32x32xf32>
    %cst_61 = arith.constant dense<0.000000e+00> : vector<32x128xf32>
    %73 = tpu.matmul %72, %70, %cst_61 {dimension_numbers = #tpu.dot_dimension_numbers<[1], [0], [0], [1], [0, 0, 1, 1], [], []>} : vector<32x32xf32>, vector<32x128xf32>, vector<32x128xf32> -> vector<32x128xf32>
    %cst_62 = arith.constant dense<0.000000e+00> : vector<32x128xf32>
    %74 = tpu.matmul %73, %67, %cst_62 {dimension_numbers = #tpu.dot_dimension_numbers<[1], [0], [0], [1], [0, 0, 1, 1], [], []>} : vector<32x128xf32>, vector<128x128xf32>, vector<32x128xf32> -> vector<32x128xf32>
    %cst_63 = arith.constant 0.000000e+00 : f32
    %75 = vector.broadcast %cst_63 : f32 to vector<32x128xf32>
    %76 = arith.cmpf ogt, %74, %75 : vector<32x128xf32>
    %cst_64 = arith.constant 2.000000e-01 : f32
    %77 = vector.broadcast %cst_64 : f32 to vector<32x128xf32>
    %78 = arith.mulf %77, %74 : vector<32x128xf32>
    %79 = arith.select %76, %74, %78 : vector<32x128xi1>, vector<32x128xf32>
    %c0_65 = arith.constant 0 : index
    %c0_66 = arith.constant 0 : index
    %c0_67 = arith.constant 0 : index
    %80 = vector.load %arg13[%c0_65, %c0_66, %c0_67] : memref<2x32x32xf32, #tpu.memory_space<vmem>>, vector<1x32x32xf32>
    %81 = vector.shape_cast %80 : vector<1x32x32xf32> to vector<32x32xf32>
    %cst_68 = arith.constant dense<0.000000e+00> : vector<32x128xf32>
    %82 = tpu.matmul %81, %79, %cst_68 {dimension_numbers = #tpu.dot_dimension_numbers<[1], [0], [0], [1], [0, 0, 1, 1], [], []>} : vector<32x32xf32>, vector<32x128xf32>, vector<32x128xf32> -> vector<32x128xf32>
    %cst_69 = arith.constant dense<0.000000e+00> : vector<32x128xf32>
    %83 = tpu.matmul %82, %67, %cst_69 {dimension_numbers = #tpu.dot_dimension_numbers<[1], [0], [0], [1], [0, 0, 1, 1], [], []>} : vector<32x128xf32>, vector<128x128xf32>, vector<32x128xf32> -> vector<32x128xf32>
    %84 = arith.addf %70, %83 : vector<32x128xf32>
    %c1_70 = arith.constant 1 : index
    %c0_71 = arith.constant 0 : index
    %c0_72 = arith.constant 0 : index
    %85 = vector.load %arg12[%c1_70, %c0_71, %c0_72] : memref<2x32x32xf32, #tpu.memory_space<vmem>>, vector<1x32x32xf32>
    %86 = vector.shape_cast %85 : vector<1x32x32xf32> to vector<32x32xf32>
    %cst_73 = arith.constant dense<0.000000e+00> : vector<32x128xf32>
    %87 = tpu.matmul %86, %84, %cst_73 {dimension_numbers = #tpu.dot_dimension_numbers<[1], [0], [0], [1], [0, 0, 1, 1], [], []>} : vector<32x32xf32>, vector<32x128xf32>, vector<32x128xf32> -> vector<32x128xf32>
    %cst_74 = arith.constant dense<0.000000e+00> : vector<32x128xf32>
    %88 = tpu.matmul %87, %67, %cst_74 {dimension_numbers = #tpu.dot_dimension_numbers<[1], [0], [0], [1], [0, 0, 1, 1], [], []>} : vector<32x128xf32>, vector<128x128xf32>, vector<32x128xf32> -> vector<32x128xf32>
    %cst_75 = arith.constant 0.000000e+00 : f32
    %89 = vector.broadcast %cst_75 : f32 to vector<32x128xf32>
    %90 = arith.cmpf ogt, %88, %89 : vector<32x128xf32>
    %cst_76 = arith.constant 2.000000e-01 : f32
    %91 = vector.broadcast %cst_76 : f32 to vector<32x128xf32>
    %92 = arith.mulf %91, %88 : vector<32x128xf32>
    %93 = arith.select %90, %88, %92 : vector<32x128xi1>, vector<32x128xf32>
    %c1_77 = arith.constant 1 : index
    %c0_78 = arith.constant 0 : index
    %c0_79 = arith.constant 0 : index
    %94 = vector.load %arg13[%c1_77, %c0_78, %c0_79] : memref<2x32x32xf32, #tpu.memory_space<vmem>>, vector<1x32x32xf32>
    %95 = vector.shape_cast %94 : vector<1x32x32xf32> to vector<32x32xf32>
    %cst_80 = arith.constant dense<0.000000e+00> : vector<32x128xf32>
    %96 = tpu.matmul %95, %93, %cst_80 {dimension_numbers = #tpu.dot_dimension_numbers<[1], [0], [0], [1], [0, 0, 1, 1], [], []>} : vector<32x32xf32>, vector<32x128xf32>, vector<32x128xf32> -> vector<32x128xf32>
    %cst_81 = arith.constant dense<0.000000e+00> : vector<32x128xf32>
    %97 = tpu.matmul %96, %67, %cst_81 {dimension_numbers = #tpu.dot_dimension_numbers<[1], [0], [0], [1], [0, 0, 1, 1], [], []>} : vector<32x128xf32>, vector<128x128xf32>, vector<32x128xf32> -> vector<32x128xf32>
    %98 = arith.addf %84, %97 : vector<32x128xf32>
    %c0_82 = arith.constant 0 : index
    %c0_83 = arith.constant 0 : index
    %99 = vector.load %arg14[%c0_82, %c0_83] : memref<8x32xf32, #tpu.memory_space<vmem>>, vector<8x32xf32>
    %cst_84 = arith.constant dense<0.000000e+00> : vector<8x128xf32>
    %100 = tpu.matmul %99, %98, %cst_84 {dimension_numbers = #tpu.dot_dimension_numbers<[1], [0], [0], [1], [0, 0, 1, 1], [], []>} : vector<8x32xf32>, vector<32x128xf32>, vector<8x128xf32> -> vector<8x128xf32>
    %cst_85 = arith.constant dense<0.000000e+00> : vector<8x128xf32>
    %101 = tpu.matmul %100, %67, %cst_85 {dimension_numbers = #tpu.dot_dimension_numbers<[1], [0], [0], [1], [0, 0, 1, 1], [], []>} : vector<8x128xf32>, vector<128x128xf32>, vector<8x128xf32> -> vector<8x128xf32>
    %cst_86 = arith.constant 0.000000e+00 : f32
    %102 = vector.broadcast %cst_86 : f32 to vector<8x128xf32>
    %103 = arith.cmpf ogt, %101, %102 : vector<8x128xf32>
    %cst_87 = arith.constant 2.000000e-01 : f32
    %104 = vector.broadcast %cst_87 : f32 to vector<8x128xf32>
    %105 = arith.mulf %104, %101 : vector<8x128xf32>
    %106 = arith.select %103, %101, %105 : vector<8x128xi1>, vector<8x128xf32>
    %107 = tpu.concatenate %65, %106 in 0 : vector<8x128xf32>, vector<8x128xf32> -> vector<16x128xf32>
    %c0_88 = arith.constant 0 : index
    %c0_89 = arith.constant 0 : index
    %108 = vector.load %arg16[%c0_88, %c0_89] : memref<16x16xf32, #tpu.memory_space<vmem>>, vector<16x16xf32>
    %cst_90 = arith.constant dense<0.000000e+00> : vector<16x128xf32>
    %109 = tpu.matmul %108, %107, %cst_90 {dimension_numbers = #tpu.dot_dimension_numbers<[1], [0], [0], [1], [0, 0, 1, 1], [], []>} : vector<16x16xf32>, vector<16x128xf32>, vector<16x128xf32> -> vector<16x128xf32>
    %c0_91 = arith.constant 0 : index
    %c0_92 = arith.constant 0 : index
    %110 = vector.load %arg17[%c0_91, %c0_92] : memref<16x1xf32, #tpu.memory_space<vmem>>, vector<16x1xf32>
    %111 = vector.broadcast %110 : vector<16x1xf32> to vector<16x128xf32>
    %112 = arith.addf %109, %111 : vector<16x128xf32>
    %113 = arith.addf %112, %5 : vector<16x128xf32>
    %c0_93 = arith.constant 0 : index
    %c0_94 = arith.constant 0 : index
    %114 = vector.load %arg18[%c0_93, %c0_94] : memref<16x16xf32, #tpu.memory_space<vmem>>, vector<16x16xf32>
    %c0_95 = arith.constant 0 : index
    %c0_96 = arith.constant 0 : index
    %115 = vector.load %arg19[%c0_95, %c0_96] : memref<16x1xf32, #tpu.memory_space<vmem>>, vector<16x1xf32>
    %c0_97 = arith.constant 0 : index
    %c0_98 = arith.constant 0 : index
    %116 = vector.load %arg3[%c0_97, %c0_98] : memref<16x16xf32, #tpu.memory_space<vmem>>, vector<16x16xf32>
    %cst_99 = arith.constant dense<0.000000e+00> : vector<16x128xf32>
    %117 = tpu.matmul %116, %113, %cst_99 {dimension_numbers = #tpu.dot_dimension_numbers<[1], [0], [0], [1], [0, 0, 1, 1], [], []>} : vector<16x16xf32>, vector<16x128xf32>, vector<16x128xf32> -> vector<16x128xf32>
    %118 = arith.subf %113, %117 : vector<16x128xf32>
    %119 = arith.mulf %118, %118 : vector<16x128xf32>
    %cst_100 = arith.constant dense<0.000000e+00> : vector<16x128xf32>
    %120 = tpu.matmul %116, %119, %cst_100 {dimension_numbers = #tpu.dot_dimension_numbers<[1], [0], [0], [1], [0, 0, 1, 1], [], []>} : vector<16x16xf32>, vector<16x128xf32>, vector<16x128xf32> -> vector<16x128xf32>
    %cst_101 = arith.constant 9.99999974E-6 : f32
    %121 = vector.broadcast %cst_101 : f32 to vector<16x128xf32>
    %122 = arith.addf %120, %121 : vector<16x128xf32>
    %123 = math.rsqrt %122 : vector<16x128xf32>
    %124 = arith.mulf %118, %123 : vector<16x128xf32>
    %cst_102 = arith.constant dense<0.000000e+00> : vector<16x128xf32>
    %125 = tpu.matmul %114, %124, %cst_102 {dimension_numbers = #tpu.dot_dimension_numbers<[1], [0], [0], [1], [0, 0, 1, 1], [], []>} : vector<16x16xf32>, vector<16x128xf32>, vector<16x128xf32> -> vector<16x128xf32>
    %126 = vector.broadcast %115 : vector<16x1xf32> to vector<16x128xf32>
    %127 = arith.addf %125, %126 : vector<16x128xf32>
    %cst_103 = arith.constant 0.000000e+00 : f32
    %128 = vector.broadcast %cst_103 : f32 to vector<16x128xf32>
    %129 = arith.cmpf ogt, %127, %128 : vector<16x128xf32>
    %cst_104 = arith.constant 2.000000e-01 : f32
    %130 = vector.broadcast %cst_104 : f32 to vector<16x128xf32>
    %131 = arith.mulf %130, %127 : vector<16x128xf32>
    %132 = arith.select %129, %127, %131 : vector<16x128xi1>, vector<16x128xf32>
    %133 = vector.extract_strided_slice %132 {offsets = [0, 0], sizes = [8, 128], strides = [1, 1]} : vector<16x128xf32> to vector<8x128xf32>
    %c0_105 = arith.constant 0 : index
    %c0_106 = arith.constant 0 : index
    %134 = vector.load %arg24[%c0_105, %c0_106] : memref<128x128xf32, #tpu.memory_space<vmem>>, vector<128x128xf32>
    %c0_107 = arith.constant 0 : index
    %c0_108 = arith.constant 0 : index
    %135 = vector.load %arg20[%c0_107, %c0_108] : memref<32x8xf32, #tpu.memory_space<vmem>>, vector<32x8xf32>
    %cst_109 = arith.constant dense<0.000000e+00> : vector<32x128xf32>
    %136 = tpu.matmul %135, %133, %cst_109 {dimension_numbers = #tpu.dot_dimension_numbers<[1], [0], [0], [1], [0, 0, 1, 1], [], []>} : vector<32x8xf32>, vector<8x128xf32>, vector<32x128xf32> -> vector<32x128xf32>
    %cst_110 = arith.constant dense<0.000000e+00> : vector<32x128xf32>
    %137 = tpu.matmul %136, %134, %cst_110 {dimension_numbers = #tpu.dot_dimension_numbers<[1], [0], [0], [1], [0, 0, 1, 1], [], []>} : vector<32x128xf32>, vector<128x128xf32>, vector<32x128xf32> -> vector<32x128xf32>
    %c0_111 = arith.constant 0 : index
    %c0_112 = arith.constant 0 : index
    %c0_113 = arith.constant 0 : index
    %138 = vector.load %arg21[%c0_111, %c0_112, %c0_113] : memref<2x32x32xf32, #tpu.memory_space<vmem>>, vector<1x32x32xf32>
    %139 = vector.shape_cast %138 : vector<1x32x32xf32> to vector<32x32xf32>
    %cst_114 = arith.constant dense<0.000000e+00> : vector<32x128xf32>
    %140 = tpu.matmul %139, %137, %cst_114 {dimension_numbers = #tpu.dot_dimension_numbers<[1], [0], [0], [1], [0, 0, 1, 1], [], []>} : vector<32x32xf32>, vector<32x128xf32>, vector<32x128xf32> -> vector<32x128xf32>
    %cst_115 = arith.constant dense<0.000000e+00> : vector<32x128xf32>
    %141 = tpu.matmul %140, %134, %cst_115 {dimension_numbers = #tpu.dot_dimension_numbers<[1], [0], [0], [1], [0, 0, 1, 1], [], []>} : vector<32x128xf32>, vector<128x128xf32>, vector<32x128xf32> -> vector<32x128xf32>
    %cst_116 = arith.constant 0.000000e+00 : f32
    %142 = vector.broadcast %cst_116 : f32 to vector<32x128xf32>
    %143 = arith.cmpf ogt, %141, %142 : vector<32x128xf32>
    %cst_117 = arith.constant 2.000000e-01 : f32
    %144 = vector.broadcast %cst_117 : f32 to vector<32x128xf32>
    %145 = arith.mulf %144, %141 : vector<32x128xf32>
    %146 = arith.select %143, %141, %145 : vector<32x128xi1>, vector<32x128xf32>
    %c0_118 = arith.constant 0 : index
    %c0_119 = arith.constant 0 : index
    %c0_120 = arith.constant 0 : index
    %147 = vector.load %arg22[%c0_118, %c0_119, %c0_120] : memref<2x32x32xf32, #tpu.memory_space<vmem>>, vector<1x32x32xf32>
    %148 = vector.shape_cast %147 : vector<1x32x32xf32> to vector<32x32xf32>
    %cst_121 = arith.constant dense<0.000000e+00> : vector<32x128xf32>
    %149 = tpu.matmul %148, %146, %cst_121 {dimension_numbers = #tpu.dot_dimension_numbers<[1], [0], [0], [1], [0, 0, 1, 1], [], []>} : vector<32x32xf32>, vector<32x128xf32>, vector<32x128xf32> -> vector<32x128xf32>
    %cst_122 = arith.constant dense<0.000000e+00> : vector<32x128xf32>
    %150 = tpu.matmul %149, %134, %cst_122 {dimension_numbers = #tpu.dot_dimension_numbers<[1], [0], [0], [1], [0, 0, 1, 1], [], []>} : vector<32x128xf32>, vector<128x128xf32>, vector<32x128xf32> -> vector<32x128xf32>
    %151 = arith.addf %137, %150 : vector<32x128xf32>
    %c1_123 = arith.constant 1 : index
    %c0_124 = arith.constant 0 : index
    %c0_125 = arith.constant 0 : index
    %152 = vector.load %arg21[%c1_123, %c0_124, %c0_125] : memref<2x32x32xf32, #tpu.memory_space<vmem>>, vector<1x32x32xf32>
    %153 = vector.shape_cast %152 : vector<1x32x32xf32> to vector<32x32xf32>
    %cst_126 = arith.constant dense<0.000000e+00> : vector<32x128xf32>
    %154 = tpu.matmul %153, %151, %cst_126 {dimension_numbers = #tpu.dot_dimension_numbers<[1], [0], [0], [1], [0, 0, 1, 1], [], []>} : vector<32x32xf32>, vector<32x128xf32>, vector<32x128xf32> -> vector<32x128xf32>
    %cst_127 = arith.constant dense<0.000000e+00> : vector<32x128xf32>
    %155 = tpu.matmul %154, %134, %cst_127 {dimension_numbers = #tpu.dot_dimension_numbers<[1], [0], [0], [1], [0, 0, 1, 1], [], []>} : vector<32x128xf32>, vector<128x128xf32>, vector<32x128xf32> -> vector<32x128xf32>
    %cst_128 = arith.constant 0.000000e+00 : f32
    %156 = vector.broadcast %cst_128 : f32 to vector<32x128xf32>
    %157 = arith.cmpf ogt, %155, %156 : vector<32x128xf32>
    %cst_129 = arith.constant 2.000000e-01 : f32
    %158 = vector.broadcast %cst_129 : f32 to vector<32x128xf32>
    %159 = arith.mulf %158, %155 : vector<32x128xf32>
    %160 = arith.select %157, %155, %159 : vector<32x128xi1>, vector<32x128xf32>
    %c1_130 = arith.constant 1 : index
    %c0_131 = arith.constant 0 : index
    %c0_132 = arith.constant 0 : index
    %161 = vector.load %arg22[%c1_130, %c0_131, %c0_132] : memref<2x32x32xf32, #tpu.memory_space<vmem>>, vector<1x32x32xf32>
    %162 = vector.shape_cast %161 : vector<1x32x32xf32> to vector<32x32xf32>
    %cst_133 = arith.constant dense<0.000000e+00> : vector<32x128xf32>
    %163 = tpu.matmul %162, %160, %cst_133 {dimension_numbers = #tpu.dot_dimension_numbers<[1], [0], [0], [1], [0, 0, 1, 1], [], []>} : vector<32x32xf32>, vector<32x128xf32>, vector<32x128xf32> -> vector<32x128xf32>
    %cst_134 = arith.constant dense<0.000000e+00> : vector<32x128xf32>
    %164 = tpu.matmul %163, %134, %cst_134 {dimension_numbers = #tpu.dot_dimension_numbers<[1], [0], [0], [1], [0, 0, 1, 1], [], []>} : vector<32x128xf32>, vector<128x128xf32>, vector<32x128xf32> -> vector<32x128xf32>
    %165 = arith.addf %151, %164 : vector<32x128xf32>
    %c0_135 = arith.constant 0 : index
    %c0_136 = arith.constant 0 : index
    %166 = vector.load %arg23[%c0_135, %c0_136] : memref<8x32xf32, #tpu.memory_space<vmem>>, vector<8x32xf32>
    %cst_137 = arith.constant dense<0.000000e+00> : vector<8x128xf32>
    %167 = tpu.matmul %166, %165, %cst_137 {dimension_numbers = #tpu.dot_dimension_numbers<[1], [0], [0], [1], [0, 0, 1, 1], [], []>} : vector<8x32xf32>, vector<32x128xf32>, vector<8x128xf32> -> vector<8x128xf32>
    %cst_138 = arith.constant dense<0.000000e+00> : vector<8x128xf32>
    %168 = tpu.matmul %167, %134, %cst_138 {dimension_numbers = #tpu.dot_dimension_numbers<[1], [0], [0], [1], [0, 0, 1, 1], [], []>} : vector<8x128xf32>, vector<128x128xf32>, vector<8x128xf32> -> vector<8x128xf32>
    %cst_139 = arith.constant 0.000000e+00 : f32
    %169 = vector.broadcast %cst_139 : f32 to vector<8x128xf32>
    %170 = arith.cmpf ogt, %168, %169 : vector<8x128xf32>
    %cst_140 = arith.constant 2.000000e-01 : f32
    %171 = vector.broadcast %cst_140 : f32 to vector<8x128xf32>
    %172 = arith.mulf %171, %168 : vector<8x128xf32>
    %173 = arith.select %170, %168, %172 : vector<8x128xi1>, vector<8x128xf32>
    %174 = vector.extract_strided_slice %132 {offsets = [8, 0], sizes = [8, 128], strides = [1, 1]} : vector<16x128xf32> to vector<8x128xf32>
    %c0_141 = arith.constant 0 : index
    %c0_142 = arith.constant 0 : index
    %175 = vector.load %arg29[%c0_141, %c0_142] : memref<128x128xf32, #tpu.memory_space<vmem>>, vector<128x128xf32>
    %c0_143 = arith.constant 0 : index
    %c0_144 = arith.constant 0 : index
    %176 = vector.load %arg25[%c0_143, %c0_144] : memref<32x8xf32, #tpu.memory_space<vmem>>, vector<32x8xf32>
    %cst_145 = arith.constant dense<0.000000e+00> : vector<32x128xf32>
    %177 = tpu.matmul %176, %174, %cst_145 {dimension_numbers = #tpu.dot_dimension_numbers<[1], [0], [0], [1], [0, 0, 1, 1], [], []>} : vector<32x8xf32>, vector<8x128xf32>, vector<32x128xf32> -> vector<32x128xf32>
    %cst_146 = arith.constant dense<0.000000e+00> : vector<32x128xf32>
    %178 = tpu.matmul %177, %175, %cst_146 {dimension_numbers = #tpu.dot_dimension_numbers<[1], [0], [0], [1], [0, 0, 1, 1], [], []>} : vector<32x128xf32>, vector<128x128xf32>, vector<32x128xf32> -> vector<32x128xf32>
    %c0_147 = arith.constant 0 : index
    %c0_148 = arith.constant 0 : index
    %c0_149 = arith.constant 0 : index
    %179 = vector.load %arg26[%c0_147, %c0_148, %c0_149] : memref<2x32x32xf32, #tpu.memory_space<vmem>>, vector<1x32x32xf32>
    %180 = vector.shape_cast %179 : vector<1x32x32xf32> to vector<32x32xf32>
    %cst_150 = arith.constant dense<0.000000e+00> : vector<32x128xf32>
    %181 = tpu.matmul %180, %178, %cst_150 {dimension_numbers = #tpu.dot_dimension_numbers<[1], [0], [0], [1], [0, 0, 1, 1], [], []>} : vector<32x32xf32>, vector<32x128xf32>, vector<32x128xf32> -> vector<32x128xf32>
    %cst_151 = arith.constant dense<0.000000e+00> : vector<32x128xf32>
    %182 = tpu.matmul %181, %175, %cst_151 {dimension_numbers = #tpu.dot_dimension_numbers<[1], [0], [0], [1], [0, 0, 1, 1], [], []>} : vector<32x128xf32>, vector<128x128xf32>, vector<32x128xf32> -> vector<32x128xf32>
    %cst_152 = arith.constant 0.000000e+00 : f32
    %183 = vector.broadcast %cst_152 : f32 to vector<32x128xf32>
    %184 = arith.cmpf ogt, %182, %183 : vector<32x128xf32>
    %cst_153 = arith.constant 2.000000e-01 : f32
    %185 = vector.broadcast %cst_153 : f32 to vector<32x128xf32>
    %186 = arith.mulf %185, %182 : vector<32x128xf32>
    %187 = arith.select %184, %182, %186 : vector<32x128xi1>, vector<32x128xf32>
    %c0_154 = arith.constant 0 : index
    %c0_155 = arith.constant 0 : index
    %c0_156 = arith.constant 0 : index
    %188 = vector.load %arg27[%c0_154, %c0_155, %c0_156] : memref<2x32x32xf32, #tpu.memory_space<vmem>>, vector<1x32x32xf32>
    %189 = vector.shape_cast %188 : vector<1x32x32xf32> to vector<32x32xf32>
    %cst_157 = arith.constant dense<0.000000e+00> : vector<32x128xf32>
    %190 = tpu.matmul %189, %187, %cst_157 {dimension_numbers = #tpu.dot_dimension_numbers<[1], [0], [0], [1], [0, 0, 1, 1], [], []>} : vector<32x32xf32>, vector<32x128xf32>, vector<32x128xf32> -> vector<32x128xf32>
    %cst_158 = arith.constant dense<0.000000e+00> : vector<32x128xf32>
    %191 = tpu.matmul %190, %175, %cst_158 {dimension_numbers = #tpu.dot_dimension_numbers<[1], [0], [0], [1], [0, 0, 1, 1], [], []>} : vector<32x128xf32>, vector<128x128xf32>, vector<32x128xf32> -> vector<32x128xf32>
    %192 = arith.addf %178, %191 : vector<32x128xf32>
    %c1_159 = arith.constant 1 : index
    %c0_160 = arith.constant 0 : index
    %c0_161 = arith.constant 0 : index
    %193 = vector.load %arg26[%c1_159, %c0_160, %c0_161] : memref<2x32x32xf32, #tpu.memory_space<vmem>>, vector<1x32x32xf32>
    %194 = vector.shape_cast %193 : vector<1x32x32xf32> to vector<32x32xf32>
    %cst_162 = arith.constant dense<0.000000e+00> : vector<32x128xf32>
    %195 = tpu.matmul %194, %192, %cst_162 {dimension_numbers = #tpu.dot_dimension_numbers<[1], [0], [0], [1], [0, 0, 1, 1], [], []>} : vector<32x32xf32>, vector<32x128xf32>, vector<32x128xf32> -> vector<32x128xf32>
    %cst_163 = arith.constant dense<0.000000e+00> : vector<32x128xf32>
    %196 = tpu.matmul %195, %175, %cst_163 {dimension_numbers = #tpu.dot_dimension_numbers<[1], [0], [0], [1], [0, 0, 1, 1], [], []>} : vector<32x128xf32>, vector<128x128xf32>, vector<32x128xf32> -> vector<32x128xf32>
    %cst_164 = arith.constant 0.000000e+00 : f32
    %197 = vector.broadcast %cst_164 : f32 to vector<32x128xf32>
    %198 = arith.cmpf ogt, %196, %197 : vector<32x128xf32>
    %cst_165 = arith.constant 2.000000e-01 : f32
    %199 = vector.broadcast %cst_165 : f32 to vector<32x128xf32>
    %200 = arith.mulf %199, %196 : vector<32x128xf32>
    %201 = arith.select %198, %196, %200 : vector<32x128xi1>, vector<32x128xf32>
    %c1_166 = arith.constant 1 : index
    %c0_167 = arith.constant 0 : index
    %c0_168 = arith.constant 0 : index
    %202 = vector.load %arg27[%c1_166, %c0_167, %c0_168] : memref<2x32x32xf32, #tpu.memory_space<vmem>>, vector<1x32x32xf32>
    %203 = vector.shape_cast %202 : vector<1x32x32xf32> to vector<32x32xf32>
    %cst_169 = arith.constant dense<0.000000e+00> : vector<32x128xf32>
    %204 = tpu.matmul %203, %201, %cst_169 {dimension_numbers = #tpu.dot_dimension_numbers<[1], [0], [0], [1], [0, 0, 1, 1], [], []>} : vector<32x32xf32>, vector<32x128xf32>, vector<32x128xf32> -> vector<32x128xf32>
    %cst_170 = arith.constant dense<0.000000e+00> : vector<32x128xf32>
    %205 = tpu.matmul %204, %175, %cst_170 {dimension_numbers = #tpu.dot_dimension_numbers<[1], [0], [0], [1], [0, 0, 1, 1], [], []>} : vector<32x128xf32>, vector<128x128xf32>, vector<32x128xf32> -> vector<32x128xf32>
    %206 = arith.addf %192, %205 : vector<32x128xf32>
    %c0_171 = arith.constant 0 : index
    %c0_172 = arith.constant 0 : index
    %207 = vector.load %arg28[%c0_171, %c0_172] : memref<8x32xf32, #tpu.memory_space<vmem>>, vector<8x32xf32>
    %cst_173 = arith.constant dense<0.000000e+00> : vector<8x128xf32>
    %208 = tpu.matmul %207, %206, %cst_173 {dimension_numbers = #tpu.dot_dimension_numbers<[1], [0], [0], [1], [0, 0, 1, 1], [], []>} : vector<8x32xf32>, vector<32x128xf32>, vector<8x128xf32> -> vector<8x128xf32>
    %cst_174 = arith.constant dense<0.000000e+00> : vector<8x128xf32>
    %209 = tpu.matmul %208, %175, %cst_174 {dimension_numbers = #tpu.dot_dimension_numbers<[1], [0], [0], [1], [0, 0, 1, 1], [], []>} : vector<8x128xf32>, vector<128x128xf32>, vector<8x128xf32> -> vector<8x128xf32>
    %cst_175 = arith.constant 0.000000e+00 : f32
    %210 = vector.broadcast %cst_175 : f32 to vector<8x128xf32>
    %211 = arith.cmpf ogt, %209, %210 : vector<8x128xf32>
    %cst_176 = arith.constant 2.000000e-01 : f32
    %212 = vector.broadcast %cst_176 : f32 to vector<8x128xf32>
    %213 = arith.mulf %212, %209 : vector<8x128xf32>
    %214 = arith.select %211, %209, %213 : vector<8x128xi1>, vector<8x128xf32>
    %215 = tpu.concatenate %173, %214 in 0 : vector<8x128xf32>, vector<8x128xf32> -> vector<16x128xf32>
    %c0_177 = arith.constant 0 : index
    %c0_178 = arith.constant 0 : index
    %216 = vector.load %arg30[%c0_177, %c0_178] : memref<16x16xf32, #tpu.memory_space<vmem>>, vector<16x16xf32>
    %cst_179 = arith.constant dense<0.000000e+00> : vector<16x128xf32>
    %217 = tpu.matmul %216, %215, %cst_179 {dimension_numbers = #tpu.dot_dimension_numbers<[1], [0], [0], [1], [0, 0, 1, 1], [], []>} : vector<16x16xf32>, vector<16x128xf32>, vector<16x128xf32> -> vector<16x128xf32>
    %c0_180 = arith.constant 0 : index
    %c0_181 = arith.constant 0 : index
    %218 = vector.load %arg31[%c0_180, %c0_181] : memref<16x1xf32, #tpu.memory_space<vmem>>, vector<16x1xf32>
    %219 = vector.broadcast %218 : vector<16x1xf32> to vector<16x128xf32>
    %220 = arith.addf %217, %219 : vector<16x128xf32>
    %221 = arith.addf %220, %113 : vector<16x128xf32>
    %c0_182 = arith.constant 0 : index
    %c0_183 = arith.constant 0 : index
    %222 = vector.load %arg32[%c0_182, %c0_183] : memref<16x128xf32, #tpu.memory_space<vmem>>, vector<16x128xf32>
    tpu.vector_store %arg32[%c0_182, %c0_183], %221 {strides = array<i32>} : memref<16x128xf32, #tpu.memory_space<vmem>>, vector<16x128xf32>,
    return
  }
}

</mosaic_0001>

<llo_original>
// kernel: stripgcm_forward.1
$region0: #{stripgcm_forward.1}
  #allocation0 [shape = 'u32[]', space=smem, size = 0x4, offset = 0x4, fixed_abs, tag = 'smem constant byte address 0x4 - core index']
  #allocation1 [shape = 'u32[144,128]{1,0:T(1,128)}', space=vmem, size = 0x12000, scoped, tag = 'internal scratch']
  %s0 = inlined_call_operand.smem [shape: u32[33], index: -1, kind: input, shape index: {}]
  %s1 = sld [smem:[%s0]]
  %s2 = scalar_lea.smem %s0, 1
  %s3 = sld [smem:[%s2]]
  %s4 = scalar_lea.smem %s0, 2
  %s5 = sld [smem:[%s4]]
  %s6 = scalar_lea.smem %s0, 3
  %s7 = sld [smem:[%s6]]
  %s8 = scalar_lea.smem %s0, 4
  %s9 = sld [smem:[%s8]]
  %s10 = scalar_lea.smem %s0, 5
  %s11 = sld [smem:[%s10]]
  %s12 = scalar_lea.smem %s0, 6
  %s13 = sld [smem:[%s12]]
  %s14 = scalar_lea.smem %s0, 7
  %s15 = sld [smem:[%s14]]
  %s16 = scalar_lea.smem %s0, 8
  %s17 = sld [smem:[%s16]]
  %s18 = scalar_lea.smem %s0, 9
  %s19 = sld [smem:[%s18]]
  %s20 = scalar_lea.smem %s0, 10
  %s21 = sld [smem:[%s20]]
  %s22 = scalar_lea.smem %s0, 11
  %s23 = sld [smem:[%s22]]
  %s24 = scalar_lea.smem %s0, 12
  %s25 = sld [smem:[%s24]]
  %s26 = scalar_lea.smem %s0, 13
  %s27 = sld [smem:[%s26]]
  %s28 = scalar_lea.smem %s0, 14
  %s29 = sld [smem:[%s28]]
  %s30 = scalar_lea.smem %s0, 15
  %s31 = sld [smem:[%s30]]
  %s32 = scalar_lea.smem %s0, 16
  %s33 = sld [smem:[%s32]]
  %s34 = scalar_lea.smem %s0, 17
  %s35 = sld [smem:[%s34]]
  %s36 = scalar_lea.smem %s0, 18
  %s37 = sld [smem:[%s36]]
  %s38 = scalar_lea.smem %s0, 19
  %s39 = sld [smem:[%s38]]
  %s40 = scalar_lea.smem %s0, 20
  %s41 = sld [smem:[%s40]]
  %s42 = scalar_lea.smem %s0, 21
  %s43 = sld [smem:[%s42]]
  %s44 = scalar_lea.smem %s0, 22
  %s45 = sld [smem:[%s44]]
  %s46 = scalar_lea.smem %s0, 23
  %s47 = sld [smem:[%s46]]
  %s48 = scalar_lea.smem %s0, 24
  %s49 = sld [smem:[%s48]]
  %s50 = scalar_lea.smem %s0, 25
  %s51 = sld [smem:[%s50]]
  %s52 = scalar_lea.smem %s0, 26
  %s53 = sld [smem:[%s52]]
  %s54 = scalar_lea.smem %s0, 27
  %s55 = sld [smem:[%s54]]
  %s56 = scalar_lea.smem %s0, 28
  %s57 = sld [smem:[%s56]]
  %s58 = scalar_lea.smem %s0, 29
  %s59 = sld [smem:[%s58]]
  %s60 = scalar_lea.smem %s0, 30
  %s61 = sld [smem:[%s60]]
  %s62 = scalar_lea.smem %s0, 31
  %s63 = sld [smem:[%s62]]
  %s64 = scalar_lea.smem %s0, 32
  %s65 = sld [smem:[%s64]]
  %s66 = sld [smem:[#allocation0]]
  $region138: #{stripgcm_forward.1} parent=0
    _
  %s68 = ssub.s32 1, %s66
  %s69 = scalar_select 0, %s68, %s66
  // Predicated region
  $region2: #{stripgcm_forward.1} parent=0 // pred_check
    _
  $region3: #{stripgcm_forward.1} parent=0 // pred_check_branch
    %71 = sbr.rel (0) target = $region5
  $region4: #{stripgcm_forward.1} parent=0 // pred_region
    _
  $region5: #{stripgcm_forward.1} parent=0 // pred_fallthru
    _
  // Predicated region
  $region6: #{stripgcm_forward.1} parent=0 // pred_check
    _
  $region7: #{stripgcm_forward.1} parent=0 // pred_check_branch
    %73 = sbr.rel (0) target = $region9
  $region8: #{stripgcm_forward.1} parent=0 // pred_region
    _
  $region9: #{stripgcm_forward.1} parent=0 // pred_fallthru
    _
  // Predicated region
  $region10: #{stripgcm_forward.1} parent=0 // pred_check
    _
  $region11: #{stripgcm_forward.1} parent=0 // pred_check_branch
    %75 = sbr.rel (0) target = $region13
  $region12: #{stripgcm_forward.1} parent=0 // pred_region
    _
  $region13: #{stripgcm_forward.1} parent=0 // pred_fallthru
    _
  // Predicated region
  $region14: #{stripgcm_forward.1} parent=0 // pred_check
    _
  $region15: #{stripgcm_forward.1} parent=0 // pred_check_branch
    %77 = sbr.rel (0) target = $region17
  $region16: #{stripgcm_forward.1} parent=0 // pred_region
    _
  $region17: #{stripgcm_forward.1} parent=0 // pred_fallthru
    _
  // Predicated region
  $region18: #{stripgcm_forward.1} parent=0 // pred_check
    _
  $region19: #{stripgcm_forward.1} parent=0 // pred_check_branch
    %79 = sbr.rel (0) target = $region21
  $region20: #{stripgcm_forward.1} parent=0 // pred_region
    _
  $region21: #{stripgcm_forward.1} parent=0 // pred_fallthru
    _
  // Predicated region
  $region22: #{stripgcm_forward.1} parent=0 // pred_check
    _
  $region23: #{stripgcm_forward.1} parent=0 // pred_check_branch
    %81 = sbr.rel (0) target = $region25
  $region24: #{stripgcm_forward.1} parent=0 // pred_region
    _
  $region25: #{stripgcm_forward.1} parent=0 // pred_fallthru
    _
  // Predicated region
  $region26: #{stripgcm_forward.1} parent=0 // pred_check
    _
  $region27: #{stripgcm_forward.1} parent=0 // pred_check_branch
    %83 = sbr.rel (0) target = $region29
  $region28: #{stripgcm_forward.1} parent=0 // pred_region
    _
  $region29: #{stripgcm_forward.1} parent=0 // pred_fallthru
    _
  // Predicated region
  $region30: #{stripgcm_forward.1} parent=0 // pred_check
    _
  $region31: #{stripgcm_forward.1} parent=0 // pred_check_branch
    %85 = sbr.rel (0) target = $region33
  $region32: #{stripgcm_forward.1} parent=0 // pred_region
    _
  $region33: #{stripgcm_forward.1} parent=0 // pred_fallthru
    _
  // Predicated region
  $region34: #{stripgcm_forward.1} parent=0 // pred_check
    _
  $region35: #{stripgcm_forward.1} parent=0 // pred_check_branch
    %87 = sbr.rel (0) target = $region37
  $region36: #{stripgcm_forward.1} parent=0 // pred_region
    _
  $region37: #{stripgcm_forward.1} parent=0 // pred_fallthru
    _
  // Predicated region
  $region38: #{stripgcm_forward.1} parent=0 // pred_check
    _
  $region39: #{stripgcm_forward.1} parent=0 // pred_check_branch
    %89 = sbr.rel (0) target = $region41
  $region40: #{stripgcm_forward.1} parent=0 // pred_region
    _
  $region41: #{stripgcm_forward.1} parent=0 // pred_fallthru
    _
  // Predicated region
  $region42: #{stripgcm_forward.1} parent=0 // pred_check
    _
  $region43: #{stripgcm_forward.1} parent=0 // pred_check_branch
    %91 = sbr.rel (0) target = $region45
  $region44: #{stripgcm_forward.1} parent=0 // pred_region
    _
  $region45: #{stripgcm_forward.1} parent=0 // pred_fallthru
    _
  // Predicated region
  $region46: #{stripgcm_forward.1} parent=0 // pred_check
    _
  $region47: #{stripgcm_forward.1} parent=0 // pred_check_branch
    %93 = sbr.rel (0) target = $region49
  $region48: #{stripgcm_forward.1} parent=0 // pred_region
    _
  $region49: #{stripgcm_forward.1} parent=0 // pred_fallthru
    _
  // Predicated region
  $region50: #{stripgcm_forward.1} parent=0 // pred_check
    _
  $region51: #{stripgcm_forward.1} parent=0 // pred_check_branch
    %95 = sbr.rel (0) target = $region53
  $region52: #{stripgcm_forward.1} parent=0 // pred_region
    _
  $region53: #{stripgcm_forward.1} parent=0 // pred_fallthru
    _
  // Predicated region
  $region54: #{stripgcm_forward.1} parent=0 // pred_check
    _
  $region55: #{stripgcm_forward.1} parent=0 // pred_check_branch
    %97 = sbr.rel (0) target = $region57
  $region56: #{stripgcm_forward.1} parent=0 // pred_region
    _
  $region57: #{stripgcm_forward.1} parent=0 // pred_fallthru
    _
  // Predicated region
  $region58: #{stripgcm_forward.1} parent=0 // pred_check
    _
  $region59: #{stripgcm_forward.1} parent=0 // pred_check_branch
    %99 = sbr.rel (0) target = $region61
  $region60: #{stripgcm_forward.1} parent=0 // pred_region
    _
  $region61: #{stripgcm_forward.1} parent=0 // pred_fallthru
    _
  // Predicated region
  $region62: #{stripgcm_forward.1} parent=0 // pred_check
    _
  $region63: #{stripgcm_forward.1} parent=0 // pred_check_branch
    %101 = sbr.rel (0) target = $region65
  $region64: #{stripgcm_forward.1} parent=0 // pred_region
    _
  $region65: #{stripgcm_forward.1} parent=0 // pred_fallthru
    _
  // Predicated region
  $region66: #{stripgcm_forward.1} parent=0 // pred_check
    _
  $region67: #{stripgcm_forward.1} parent=0 // pred_check_branch
    %103 = sbr.rel (0) target = $region69
  $region68: #{stripgcm_forward.1} parent=0 // pred_region
    _
  $region69: #{stripgcm_forward.1} parent=0 // pred_fallthru
    _
  // Predicated region
  $region70: #{stripgcm_forward.1} parent=0 // pred_check
    _
  $region71: #{stripgcm_forward.1} parent=0 // pred_check_branch
    %105 = sbr.rel (0) target = $region73
  $region72: #{stripgcm_forward.1} parent=0 // pred_region
    _
  $region73: #{stripgcm_forward.1} parent=0 // pred_fallthru
    _
  // Predicated region
  $region74: #{stripgcm_forward.1} parent=0 // pred_check
    _
  $region75: #{stripgcm_forward.1} parent=0 // pred_check_branch
    %107 = sbr.rel (0) target = $region77
  $region76: #{stripgcm_forward.1} parent=0 // pred_region
    _
  $region77: #{stripgcm_forward.1} parent=0 // pred_fallthru
    _
  // Predicated region
  $region78: #{stripgcm_forward.1} parent=0 // pred_check
    _
  $region79: #{stripgcm_forward.1} parent=0 // pred_check_branch
    %109 = sbr.rel (0) target = $region81
  $region80: #{stripgcm_forward.1} parent=0 // pred_region
    _
  $region81: #{stripgcm_forward.1} parent=0 // pred_fallthru
    _
  // Predicated region
  $region82: #{stripgcm_forward.1} parent=0 // pred_check
    _
  $region83: #{stripgcm_forward.1} parent=0 // pred_check_branch
    %111 = sbr.rel (0) target = $region85
  $region84: #{stripgcm_forward.1} parent=0 // pred_region
    _
  $region85: #{stripgcm_forward.1} parent=0 // pred_fallthru
    _
  // Predicated region
  $region86: #{stripgcm_forward.1} parent=0 // pred_check
    _
  $region87: #{stripgcm_forward.1} parent=0 // pred_check_branch
    %113 = sbr.rel (0) target = $region89
  $region88: #{stripgcm_forward.1} parent=0 // pred_region
    _
  $region89: #{stripgcm_forward.1} parent=0 // pred_fallthru
    _
  // Predicated region
  $region90: #{stripgcm_forward.1} parent=0 // pred_check
    _
  $region91: #{stripgcm_forward.1} parent=0 // pred_check_branch
    %115 = sbr.rel (0) target = $region93
  $region92: #{stripgcm_forward.1} parent=0 // pred_region
    _
  $region93: #{stripgcm_forward.1} parent=0 // pred_fallthru
    _
  // Predicated region
  $region94: #{stripgcm_forward.1} parent=0 // pred_check
    _
  $region95: #{stripgcm_forward.1} parent=0 // pred_check_branch
    %117 = sbr.rel (0) target = $region97
  $region96: #{stripgcm_forward.1} parent=0 // pred_region
    _
  $region97: #{stripgcm_forward.1} parent=0 // pred_fallthru
    _
  // Predicated region
  $region98: #{stripgcm_forward.1} parent=0 // pred_check
    _
  $region99: #{stripgcm_forward.1} parent=0 // pred_check_branch
    %119 = sbr.rel (0) target = $region101
  $region100: #{stripgcm_forward.1} parent=0 // pred_region
    _
  $region101: #{stripgcm_forward.1} parent=0 // pred_fallthru
    _
  // Predicated region
  $region102: #{stripgcm_forward.1} parent=0 // pred_check
    _
  $region103: #{stripgcm_forward.1} parent=0 // pred_check_branch
    %121 = sbr.rel (0) target = $region105
  $region104: #{stripgcm_forward.1} parent=0 // pred_region
    _
  $region105: #{stripgcm_forward.1} parent=0 // pred_fallthru
    _
  // Predicated region
  $region106: #{stripgcm_forward.1} parent=0 // pred_check
    _
  $region107: #{stripgcm_forward.1} parent=0 // pred_check_branch
    %123 = sbr.rel (0) target = $region109
  $region108: #{stripgcm_forward.1} parent=0 // pred_region
    _
  $region109: #{stripgcm_forward.1} parent=0 // pred_fallthru
    _
  // Predicated region
  $region110: #{stripgcm_forward.1} parent=0 // pred_check
    _
  $region111: #{stripgcm_forward.1} parent=0 // pred_check_branch
    %125 = sbr.rel (0) target = $region113
  $region112: #{stripgcm_forward.1} parent=0 // pred_region
    _
  $region113: #{stripgcm_forward.1} parent=0 // pred_fallthru
    _
  // Predicated region
  $region114: #{stripgcm_forward.1} parent=0 // pred_check
    _
  $region115: #{stripgcm_forward.1} parent=0 // pred_check_branch
    %127 = sbr.rel (0) target = $region117
  $region116: #{stripgcm_forward.1} parent=0 // pred_region
    _
  $region117: #{stripgcm_forward.1} parent=0 // pred_fallthru
    _
  // Predicated region
  $region118: #{stripgcm_forward.1} parent=0 // pred_check
    _
  $region119: #{stripgcm_forward.1} parent=0 // pred_check_branch
    %129 = sbr.rel (0) target = $region121
  $region120: #{stripgcm_forward.1} parent=0 // pred_region
    _
  $region121: #{stripgcm_forward.1} parent=0 // pred_fallthru
    _
  // Predicated region
  $region122: #{stripgcm_forward.1} parent=0 // pred_check
    _
  $region123: #{stripgcm_forward.1} parent=0 // pred_check_branch
    %131 = sbr.rel (0) target = $region125
  $region124: #{stripgcm_forward.1} parent=0 // pred_region
    _
  $region125: #{stripgcm_forward.1} parent=0 // pred_fallthru
    _
  // Predicated region
  $region126: #{stripgcm_forward.1} parent=0 // pred_check
    _
  $region127: #{stripgcm_forward.1} parent=0 // pred_check_branch
    %133 = sbr.rel (0) target = $region129
  $region128: #{stripgcm_forward.1} parent=0 // pred_region
    _
  $region129: #{stripgcm_forward.1} parent=0 // pred_fallthru
    _
  %v134 = vld [vmem:[%s3] sm:$0xff]
  %v135 = vld [vmem:[%s3 + $0x8] sm:$0xff]
  %v136 = vld [vmem:[%s1] sm:$0xff]
  %v137 = vld [vmem:[%s1 + $0x8] sm:$0xff]
  %v138 = vld [vmem:[%s1 + $0x10] sm:$0xff]
  %v139 = vld [vmem:[%s1 + $0x18] sm:$0xff]
  %v140 = vld [vmem:[%s5] sm:$0xff]
  %v141 = vld [vmem:[%s5 + $0x8] sm:$0xff]
  %143 = vset.pattern.permute.xlu0 0
  %144 = vperm.xlu0 %143, %v140
  %v145 = vpop.permute.xlu0 %144
  %148 = vset.pattern.permute.xlu0 0
  %149 = vperm.xlu0 %148, %v141
  %v150 = vpop.permute.xlu0 %149
  %vm152 = vcmask 261120
  %v154 = vsel %vm152, %v134, 0
  %v157 = vsel %vm152, %v135, 0
  %159 = vmatprep.subr.mxu0 0.0
  %160 = vmatpush1.msra.mxu0 0.0
  %161 = vmatprep.subr.mxu0 0.0
  %162 = vmatpush1.msra.mxu0 0.0
  %163 = vmatprep.subr.mxu0 0.0
  %164 = vmatpush1.msra.mxu0 0.0
  %165 = vmatprep.subr.mxu0 0.0
  %166 = vmatpush1.msra.mxu0 0.0
  %167 = vmatprep.subr.mxu0 0.0
  %168 = vmatpush1.msra.mxu0 0.0
  %169 = vmatprep.subr.mxu0 0.0
  %170 = vmatpush1.msra.mxu0 0.0
  %171 = vmatprep.subr.mxu0 0.0
  %172 = vmatpush1.msra.mxu0 0.0
  %173 = vmatprep.subr.mxu0 0.0
  %174 = vmatpush1.msra.mxu0 0.0
  %175 = vmatprep.subr.mxu0 0.0
  %176 = vmatpush1.msra.mxu0 0.0
  %177 = vmatprep.subr.mxu0 0.0
  %178 = vmatpush1.msra.mxu0 0.0
  %179 = vmatprep.subr.mxu0 0.0
  %180 = vmatpush1.msra.mxu0 0.0
  %181 = vmatprep.subr.mxu0 0.0
  %182 = vmatpush1.msra.mxu0 0.0
  %183 = vmatprep.subr.mxu0 0.0
  %184 = vmatpush1.msra.mxu0 %v139
  %185 = vmatprep.subr.mxu0 0.0
  %186 = vmatpush1.msra.mxu0 %v138
  %187 = vmatprep.subr.mxu0 0.0
  %188 = vmatpush1.msra.mxu0 %v137
  %189 = vmatprep.subr.mxu0 0.0
  %190 = vmatpush1.msra.mxu0 %v136
  %191 = vmatprep.subr.mxu0 0.0
  %192 = vmatpush2.msra.mxu0 0.0
  %193 = vmatprep.subr.mxu0 0.0
  %194 = vmatpush2.msra.mxu0 0.0
  %195 = vmatprep.subr.mxu0 0.0
  %196 = vmatpush2.msra.mxu0 0.0
  %197 = vmatprep.subr.mxu0 0.0
  %198 = vmatpush2.msra.mxu0 0.0
  %199 = vmatprep.subr.mxu0 0.0
  %200 = vmatpush2.msra.mxu0 0.0
  %201 = vmatprep.subr.mxu0 0.0
  %202 = vmatpush2.msra.mxu0 0.0
  %203 = vmatprep.subr.mxu0 0.0
  %204 = vmatpush2.msra.mxu0 0.0
  %205 = vmatprep.subr.mxu0 0.0
  %206 = vmatpush2.msra.mxu0 0.0
  %207 = vmatprep.subr.mxu0 0.0
  %208 = vmatpush2.msra.mxu0 0.0
  %209 = vmatprep.subr.mxu0 0.0
  %210 = vmatpush2.msra.mxu0 0.0
  %211 = vmatprep.subr.mxu0 0.0
  %212 = vmatpush2.msra.mxu0 0.0
  %213 = vmatprep.subr.mxu0 0.0
  %214 = vmatpush2.msra.mxu0 0.0
  %215 = vmatprep.subr.mxu0 0.0
  %216 = vmatpush2.msra.mxu0 0.0
  %217 = vmatprep.subr.mxu0 0.0
  %218 = vmatpush2.msra.mxu0 0.0
  %219 = vmatprep.subr.mxu0 0.0
  %220 = vmatpush2.msra.mxu0 0.0
  %221 = vmatprep.subr.mxu0 0.0
  %222 = vmatpush2.msra.mxu0 0.0
  %223 = vmatprep.mubr.f32.mxu0 0.0
  %224 = vmatmul.mubr.f32.gmra.mxu0 %v154
  %v225 = vpop.f32.mrf.mxu0
  %v226 = vadd.f32 %v145, %v225
  %v227 = vpop.f32.mrf.mxu0
  %228 = vmatprep.mubr.f32.mxu0 0.0
  %229 = vmatmul.mubr.f32.gmra.mxu0 %v157
  %v230 = vpop.f32.mrf.mxu0
  %v231 = vadd.f32 %v150, %v230
  %v232 = vpop.f32.mrf.mxu0
  %233 = vdwg.mxu0
  %v234 = vld [vmem:[%s9] sm:$0xff]
  %v235 = vld [vmem:[%s9 + $0x8] sm:$0xff]
  %v236 = vld [vmem:[%s11] sm:$0xff]
  %v237 = vld [vmem:[%s11 + $0x8] sm:$0xff]
  %v238 = vld [vmem:[%s7] sm:$0xff]
  %v239 = vld [vmem:[%s7 + $0x8] sm:$0xff]
  %vm240 = vcmask 130048
  %v242 = vsel %vm240, %v238, 0
  %v245 = vsel %vm240, %v239, 0
  %247 = vmatprep.subr.mxu0 0.0
  %248 = vmatpush1.msra.mxu0 0.0
  %249 = vmatprep.subr.mxu0 0.0
  %250 = vmatpush1.msra.mxu0 0.0
  %251 = vmatprep.subr.mxu0 0.0
  %252 = vmatpush1.msra.mxu0 0.0
  %253 = vmatprep.subr.mxu0 0.0
  %254 = vmatpush1.msra.mxu0 0.0
  %255 = vmatprep.subr.mxu0 0.0
  %256 = vmatpush1.msra.mxu0 0.0
  %257 = vmatprep.subr.mxu0 0.0
  %258 = vmatpush1.msra.mxu0 0.0
  %259 = vmatprep.subr.mxu0 0.0
  %260 = vmatpush1.msra.mxu0 0.0
  %261 = vmatprep.subr.mxu0 0.0
  %262 = vmatpush1.msra.mxu0 0.0
  %263 = vmatprep.subr.mxu0 0.0
  %264 = vmatpush1.msra.mxu0 0.0
  %265 = vmatprep.subr.mxu0 0.0
  %266 = vmatpush1.msra.mxu0 0.0
  %267 = vmatprep.subr.mxu0 0.0
  %268 = vmatpush1.msra.mxu0 0.0
  %269 = vmatprep.subr.mxu0 0.0
  %270 = vmatpush1.msra.mxu0 0.0
  %271 = vmatprep.subr.mxu0 0.0
  %272 = vmatpush1.msra.mxu0 0.0
  %273 = vmatprep.subr.mxu0 0.0
  %274 = vmatpush1.msra.mxu0 0.0
  %275 = vmatprep.subr.mxu0 0.0
  %276 = vmatpush1.msra.mxu0 %v231
  %277 = vmatprep.subr.mxu0 0.0
  %278 = vmatpush1.msra.mxu0 %v226
  %279 = vmatprep.subr.mxu0 0.0
  %280 = vmatpush2.msra.mxu0 0.0
  %281 = vmatprep.subr.mxu0 0.0
  %282 = vmatpush2.msra.mxu0 0.0
  %283 = vmatprep.subr.mxu0 0.0
  %284 = vmatpush2.msra.mxu0 0.0
  %285 = vmatprep.subr.mxu0 0.0
  %286 = vmatpush2.msra.mxu0 0.0
  %287 = vmatprep.subr.mxu0 0.0
  %288 = vmatpush2.msra.mxu0 0.0
  %289 = vmatprep.subr.mxu0 0.0
  %290 = vmatpush2.msra.mxu0 0.0
  %291 = vmatprep.subr.mxu0 0.0
  %292 = vmatpush2.msra.mxu0 0.0
  %293 = vmatprep.subr.mxu0 0.0
  %294 = vmatpush2.msra.mxu0 0.0
  %295 = vmatprep.subr.mxu0 0.0
  %296 = vmatpush2.msra.mxu0 0.0
  %297 = vmatprep.subr.mxu0 0.0
  %298 = vmatpush2.msra.mxu0 0.0
  %299 = vmatprep.subr.mxu0 0.0
  %300 = vmatpush2.msra.mxu0 0.0
  %301 = vmatprep.subr.mxu0 0.0
  %302 = vmatpush2.msra.mxu0 0.0
  %303 = vmatprep.subr.mxu0 0.0
  %304 = vmatpush2.msra.mxu0 0.0
  %305 = vmatprep.subr.mxu0 0.0
  %306 = vmatpush2.msra.mxu0 0.0
  %307 = vmatprep.subr.mxu0 0.0
  %308 = vmatpush2.msra.mxu0 0.0
  %309 = vmatprep.subr.mxu0 0.0
  %310 = vmatpush2.msra.mxu0 0.0
  %311 = vmatprep.mubr.f32.mxu0 0.0
  %312 = vmatmul.mubr.f32.gmra.mxu0 %v242
  %v313 = vpop.f32.mrf.mxu0
  %v314 = vadd.f32 0.0, %v313
  %v315 = vpop.f32.mrf.mxu0
  %316 = vmatprep.mubr.f32.mxu0 0.0
  %317 = vmatmul.mubr.f32.gmra.mxu0 %v245
  %v318 = vpop.f32.mrf.mxu0
  %v319 = vadd.f32 0.0, %v318
  %v320 = vpop.f32.mrf.mxu0
  %321 = vdwg.mxu0
  %v322 = vsub.f32 %v226, %v314
  %v323 = vsub.f32 %v231, %v319
  %v324 = vmul.f32 %v322, %v322
  %v325 = vmul.f32 %v323, %v323
  %326 = vmatprep.subr.mxu0 0.0
  %327 = vmatpush1.msra.mxu0 0.0
  %328 = vmatprep.subr.mxu0 0.0
  %329 = vmatpush1.msra.mxu0 0.0
  %330 = vmatprep.subr.mxu0 0.0
  %331 = vmatpush1.msra.mxu0 0.0
  %332 = vmatprep.subr.mxu0 0.0
  %333 = vmatpush1.msra.mxu0 0.0
  %334 = vmatprep.subr.mxu0 0.0
  %335 = vmatpush1.msra.mxu0 0.0
  %336 = vmatprep.subr.mxu0 0.0
  %337 = vmatpush1.msra.mxu0 0.0
  %338 = vmatprep.subr.mxu0 0.0
  %339 = vmatpush1.msra.mxu0 0.0
  %340 = vmatprep.subr.mxu0 0.0
  %341 = vmatpush1.msra.mxu0 0.0
  %342 = vmatprep.subr.mxu0 0.0
  %343 = vmatpush1.msra.mxu0 0.0
  %344 = vmatprep.subr.mxu0 0.0
  %345 = vmatpush1.msra.mxu0 0.0
  %346 = vmatprep.subr.mxu0 0.0
  %347 = vmatpush1.msra.mxu0 0.0
  %348 = vmatprep.subr.mxu0 0.0
  %349 = vmatpush1.msra.mxu0 0.0
  %350 = vmatprep.subr.mxu0 0.0
  %351 = vmatpush1.msra.mxu0 0.0
  %352 = vmatprep.subr.mxu0 0.0
  %353 = vmatpush1.msra.mxu0 0.0
  %354 = vmatprep.subr.mxu0 0.0
  %355 = vmatpush1.msra.mxu0 %v325
  %356 = vmatprep.subr.mxu0 0.0
  %357 = vmatpush1.msra.mxu0 %v324
  %358 = vmatprep.subr.mxu0 0.0
  %359 = vmatpush2.msra.mxu0 0.0
  %360 = vmatprep.subr.mxu0 0.0
  %361 = vmatpush2.msra.mxu0 0.0
  %362 = vmatprep.subr.mxu0 0.0
  %363 = vmatpush2.msra.mxu0 0.0
  %364 = vmatprep.subr.mxu0 0.0
  %365 = vmatpush2.msra.mxu0 0.0
  %366 = vmatprep.subr.mxu0 0.0
  %367 = vmatpush2.msra.mxu0 0.0
  %368 = vmatprep.subr.mxu0 0.0
  %369 = vmatpush2.msra.mxu0 0.0
  %370 = vmatprep.subr.mxu0 0.0
  %371 = vmatpush2.msra.mxu0 0.0
  %372 = vmatprep.subr.mxu0 0.0
  %373 = vmatpush2.msra.mxu0 0.0
  %374 = vmatprep.subr.mxu0 0.0
  %375 = vmatpush2.msra.mxu0 0.0
  %376 = vmatprep.subr.mxu0 0.0
  %377 = vmatpush2.msra.mxu0 0.0
  %378 = vmatprep.subr.mxu0 0.0
  %379 = vmatpush2.msra.mxu0 0.0
  %380 = vmatprep.subr.mxu0 0.0
  %381 = vmatpush2.msra.mxu0 0.0
  %382 = vmatprep.subr.mxu0 0.0
  %383 = vmatpush2.msra.mxu0 0.0
  %384 = vmatprep.subr.mxu0 0.0
  %385 = vmatpush2.msra.mxu0 0.0
  %386 = vmatprep.subr.mxu0 0.0
  %387 = vmatpush2.msra.mxu0 0.0
  %388 = vmatprep.subr.mxu0 0.0
  %389 = vmatpush2.msra.mxu0 0.0
  %390 = vmatprep.mubr.f32.mxu0 0.0
  %391 = vmatmul.mubr.f32.gmra.mxu0 %v242
  %v392 = vpop.f32.mrf.mxu0
  %v393 = vadd.f32 1e-05, %v392
  %v394 = vpop.f32.mrf.mxu0
  %395 = vmatprep.mubr.f32.mxu0 0.0
  %396 = vmatmul.mubr.f32.gmra.mxu0 %v245
  %v397 = vpop.f32.mrf.mxu0
  %v398 = vadd.f32 1e-05, %v397
  %v399 = vpop.f32.mrf.mxu0
  %400 = vdwg.mxu0
  %v401 = vrsqrt.pop %v393
  %v402 = vrsqrt.pop %v398
  %v403 = vmul.f32 %v322, %v401
  %v404 = vmul.f32 %v323, %v402
  %406 = vset.pattern.permute.xlu0 0
  %407 = vperm.xlu0 %406, %v236
  %v408 = vpop.permute.xlu0 %407
  %411 = vset.pattern.permute.xlu0 0
  %412 = vperm.xlu0 %411, %v237
  %v413 = vpop.permute.xlu0 %412
  %v416 = vsel %vm240, %v234, 0
  %v419 = vsel %vm240, %v235, 0
  %421 = vmatprep.subr.mxu0 0.0
  %422 = vmatpush1.msra.mxu0 0.0
  %423 = vmatprep.subr.mxu0 0.0
  %424 = vmatpush1.msra.mxu0 0.0
  %425 = vmatprep.subr.mxu0 0.0
  %426 = vmatpush1.msra.mxu0 0.0
  %427 = vmatprep.subr.mxu0 0.0
  %428 = vmatpush1.msra.mxu0 0.0
  %429 = vmatprep.subr.mxu0 0.0
  %430 = vmatpush1.msra.mxu0 0.0
  %431 = vmatprep.subr.mxu0 0.0
  %432 = vmatpush1.msra.mxu0 0.0
  %433 = vmatprep.subr.mxu0 0.0
  %434 = vmatpush1.msra.mxu0 0.0
  %435 = vmatprep.subr.mxu0 0.0
  %436 = vmatpush1.msra.mxu0 0.0
  %437 = vmatprep.subr.mxu0 0.0
  %438 = vmatpush1.msra.mxu0 0.0
  %439 = vmatprep.subr.mxu0 0.0
  %440 = vmatpush1.msra.mxu0 0.0
  %441 = vmatprep.subr.mxu0 0.0
  %442 = vmatpush1.msra.mxu0 0.0
  %443 = vmatprep.subr.mxu0 0.0
  %444 = vmatpush1.msra.mxu0 0.0
  %445 = vmatprep.subr.mxu0 0.0
  %446 = vmatpush1.msra.mxu0 0.0
  %447 = vmatprep.subr.mxu0 0.0
  %448 = vmatpush1.msra.mxu0 0.0
  %449 = vmatprep.subr.mxu0 0.0
  %450 = vmatpush1.msra.mxu0 %v404
  %451 = vmatprep.subr.mxu0 0.0
  %452 = vmatpush1.msra.mxu0 %v403
  %453 = vmatprep.subr.mxu0 0.0
  %454 = vmatpush2.msra.mxu0 0.0
  %455 = vmatprep.subr.mxu0 0.0
  %456 = vmatpush2.msra.mxu0 0.0
  %457 = vmatprep.subr.mxu0 0.0
  %458 = vmatpush2.msra.mxu0 0.0
  %459 = vmatprep.subr.mxu0 0.0
  %460 = vmatpush2.msra.mxu0 0.0
  %461 = vmatprep.subr.mxu0 0.0
  %462 = vmatpush2.msra.mxu0 0.0
  %463 = vmatprep.subr.mxu0 0.0
  %464 = vmatpush2.msra.mxu0 0.0
  %465 = vmatprep.subr.mxu0 0.0
  %466 = vmatpush2.msra.mxu0 0.0
  %467 = vmatprep.subr.mxu0 0.0
  %468 = vmatpush2.msra.mxu0 0.0
  %469 = vmatprep.subr.mxu0 0.0
  %470 = vmatpush2.msra.mxu0 0.0
  %471 = vmatprep.subr.mxu0 0.0
  %472 = vmatpush2.msra.mxu0 0.0
  %473 = vmatprep.subr.mxu0 0.0
  %474 = vmatpush2.msra.mxu0 0.0
  %475 = vmatprep.subr.mxu0 0.0
  %476 = vmatpush2.msra.mxu0 0.0
  %477 = vmatprep.subr.mxu0 0.0
  %478 = vmatpush2.msra.mxu0 0.0
  %479 = vmatprep.subr.mxu0 0.0
  %480 = vmatpush2.msra.mxu0 0.0
  %481 = vmatprep.subr.mxu0 0.0
  %482 = vmatpush2.msra.mxu0 0.0
  %483 = vmatprep.subr.mxu0 0.0
  %484 = vmatpush2.msra.mxu0 0.0
  %485 = vmatprep.mubr.f32.mxu0 0.0
  %486 = vmatmul.mubr.f32.gmra.mxu0 %v416
  %v487 = vpop.f32.mrf.mxu0
  %v488 = vadd.f32 %v408, %v487
  %v489 = vpop.f32.mrf.mxu0
  %490 = vmatprep.mubr.f32.mxu0 0.0
  %491 = vmatmul.mubr.f32.gmra.mxu0 %v419
  %v492 = vpop.f32.mrf.mxu0
  %v493 = vadd.f32 %v413, %v492
  %v494 = vpop.f32.mrf.mxu0
  %495 = vdwg.mxu0
  %vm496 = vcmp.gt.f32.partialorder %v488, 0.0
  %vm497 = vcmp.gt.f32.partialorder %v493, 0.0
  %v498 = vmul.f32 %v488, 0.2
  %v499 = vmul.f32 %v493, 0.2
  %v500 = vsel %vm496, %v488, %v498
  %v501 = vsel %vm497, %v493, %v499
  %v502 = vld [vmem:[%s21] sm:$0xff]
  %v503 = vld [vmem:[%s21 + $0x8] sm:$0xff]
  %v504 = vld [vmem:[%s21 + $0x10] sm:$0xff]
  %v505 = vld [vmem:[%s21 + $0x18] sm:$0xff]
  %v506 = vld [vmem:[%s21 + $0x20] sm:$0xff]
  %v507 = vld [vmem:[%s21 + $0x28] sm:$0xff]
  %v508 = vld [vmem:[%s21 + $0x30] sm:$0xff]
  %v509 = vld [vmem:[%s21 + $0x38] sm:$0xff]
  %v510 = vld [vmem:[%s21 + $0x40] sm:$0xff]
  %v511 = vld [vmem:[%s21 + $0x48] sm:$0xff]
  %v512 = vld [vmem:[%s21 + $0x50] sm:$0xff]
  %v513 = vld [vmem:[%s21 + $0x58] sm:$0xff]
  %v514 = vld [vmem:[%s21 + $0x60] sm:$0xff]
  %v515 = vld [vmem:[%s21 + $0x68] sm:$0xff]
  %v516 = vld [vmem:[%s21 + $0x70] sm:$0xff]
  %v517 = vld [vmem:[%s21 + $0x78] sm:$0xff]
  %v518 = vld [vmem:[%s13] sm:$0xff]
  %v519 = vld [vmem:[%s13 + $0x8] sm:$0xff]
  %v520 = vld [vmem:[%s13 + $0x10] sm:$0xff]
  %v521 = vld [vmem:[%s13 + $0x18] sm:$0xff]
  %vm522 = vcmask 64512
  %v524 = vsel %vm522, %v518, 0
  %v527 = vsel %vm522, %v519, 0
  %v530 = vsel %vm522, %v520, 0
  %v533 = vsel %vm522, %v521, 0
  %535 = vmatprep.subr.mxu0 0.0
  %536 = vmatpush1.msra.mxu0 0.0
  %537 = vmatprep.subr.mxu0 0.0
  %538 = vmatpush1.msra.mxu0 0.0
  %539 = vmatprep.subr.mxu0 0.0
  %540 = vmatpush1.msra.mxu0 0.0
  %541 = vmatprep.subr.mxu0 0.0
  %542 = vmatpush1.msra.mxu0 0.0
  %543 = vmatprep.subr.mxu0 0.0
  %544 = vmatpush1.msra.mxu0 0.0
  %545 = vmatprep.subr.mxu0 0.0
  %546 = vmatpush1.msra.mxu0 0.0
  %547 = vmatprep.subr.mxu0 0.0
  %548 = vmatpush1.msra.mxu0 0.0
  %549 = vmatprep.subr.mxu0 0.0
  %550 = vmatpush1.msra.mxu0 0.0
  %551 = vmatprep.subr.mxu0 0.0
  %552 = vmatpush1.msra.mxu0 0.0
  %553 = vmatprep.subr.mxu0 0.0
  %554 = vmatpush1.msra.mxu0 0.0
  %555 = vmatprep.subr.mxu0 0.0
  %556 = vmatpush1.msra.mxu0 0.0
  %557 = vmatprep.subr.mxu0 0.0
  %558 = vmatpush1.msra.mxu0 0.0
  %559 = vmatprep.subr.mxu0 0.0
  %560 = vmatpush1.msra.mxu0 0.0
  %561 = vmatprep.subr.mxu0 0.0
  %562 = vmatpush1.msra.mxu0 0.0
  %563 = vmatprep.subr.mxu0 0.0
  %564 = vmatpush1.msra.mxu0 0.0
  %565 = vmatprep.subr.mxu0 0.0
  %566 = vmatpush1.msra.mxu0 %v500
  %567 = vmatprep.subr.mxu0 0.0
  %568 = vmatpush2.msra.mxu0 0.0
  %569 = vmatprep.subr.mxu0 0.0
  %570 = vmatpush2.msra.mxu0 0.0
  %571 = vmatprep.subr.mxu0 0.0
  %572 = vmatpush2.msra.mxu0 0.0
  %573 = vmatprep.subr.mxu0 0.0
  %574 = vmatpush2.msra.mxu0 0.0
  %575 = vmatprep.subr.mxu0 0.0
  %576 = vmatpush2.msra.mxu0 0.0
  %577 = vmatprep.subr.mxu0 0.0
  %578 = vmatpush2.msra.mxu0 0.0
  %579 = vmatprep.subr.mxu0 0.0
  %580 = vmatpush2.msra.mxu0 0.0
  %581 = vmatprep.subr.mxu0 0.0
  %582 = vmatpush2.msra.mxu0 0.0
  %583 = vmatprep.subr.mxu0 0.0
  %584 = vmatpush2.msra.mxu0 0.0
  %585 = vmatprep.subr.mxu0 0.0
  %586 = vmatpush2.msra.mxu0 0.0
  %587 = vmatprep.subr.mxu0 0.0
  %588 = vmatpush2.msra.mxu0 0.0
  %589 = vmatprep.subr.mxu0 0.0
  %590 = vmatpush2.msra.mxu0 0.0
  %591 = vmatprep.subr.mxu0 0.0
  %592 = vmatpush2.msra.mxu0 0.0
  %593 = vmatprep.subr.mxu0 0.0
  %594 = vmatpush2.msra.mxu0 0.0
  %595 = vmatprep.subr.mxu0 0.0
  %596 = vmatpush2.msra.mxu0 0.0
  %597 = vmatprep.subr.mxu0 0.0
  %598 = vmatpush2.msra.mxu0 0.0
  %599 = vmatprep.mubr.f32.mxu0 0.0
  %600 = vmatmul.mubr.f32.gmra.mxu0 %v524
  %v601 = vpop.f32.mrf.mxu0
  %v602 = vadd.f32 0.0, %v601
  %v603 = vpop.f32.mrf.mxu0
  %604 = vmatprep.mubr.f32.mxu0 0.0
  %605 = vmatmul.mubr.f32.gmra.mxu0 %v527
  %v606 = vpop.f32.mrf.mxu0
  %v607 = vadd.f32 0.0, %v606
  %v608 = vpop.f32.mrf.mxu0
  %609 = vmatprep.mubr.f32.mxu0 0.0
  %610 = vmatmul.mubr.f32.gmra.mxu0 %v530
  %v611 = vpop.f32.mrf.mxu0
  %v612 = vadd.f32 0.0, %v611
  %v613 = vpop.f32.mrf.mxu0
  %614 = vmatprep.mubr.f32.mxu0 0.0
  %615 = vmatmul.mubr.f32.gmra.mxu0 %v533
  %v616 = vpop.f32.mrf.mxu0
  %v617 = vadd.f32 0.0, %v616
  %v618 = vpop.f32.mrf.mxu0
  %619 = vdwg.mxu0
  %620 = vmatprep.subr.mxu0 0.0
  %621 = vmatpush1.msra.mxu0 %v517
  %622 = vmatprep.subr.mxu0 0.0
  %623 = vmatpush1.msra.mxu0 %v516
  %624 = vmatprep.subr.mxu0 0.0
  %625 = vmatpush1.msra.mxu0 %v515
  %626 = vmatprep.subr.mxu0 0.0
  %627 = vmatpush1.msra.mxu0 %v514
  %628 = vmatprep.subr.mxu0 0.0
  %629 = vmatpush1.msra.mxu0 %v513
  %630 = vmatprep.subr.mxu0 0.0
  %631 = vmatpush1.msra.mxu0 %v512
  %632 = vmatprep.subr.mxu0 0.0
  %633 = vmatpush1.msra.mxu0 %v511
  %634 = vmatprep.subr.mxu0 0.0
  %635 = vmatpush1.msra.mxu0 %v510
  %636 = vmatprep.subr.mxu0 0.0
  %637 = vmatpush1.msra.mxu0 %v509
  %638 = vmatprep.subr.mxu0 0.0
  %639 = vmatpush1.msra.mxu0 %v508
  %640 = vmatprep.subr.mxu0 0.0
  %641 = vmatpush1.msra.mxu0 %v507
  %642 = vmatprep.subr.mxu0 0.0
  %643 = vmatpush1.msra.mxu0 %v506
  %644 = vmatprep.subr.mxu0 0.0
  %645 = vmatpush1.msra.mxu0 %v505
  %646 = vmatprep.subr.mxu0 0.0
  %647 = vmatpush1.msra.mxu0 %v504
  %648 = vmatprep.subr.mxu0 0.0
  %649 = vmatpush1.msra.mxu0 %v503
  %650 = vmatprep.subr.mxu0 0.0
  %651 = vmatpush1.msra.mxu0 %v502
  %652 = vmatprep.subr.mxu0 0.0
  %653 = vmatpush2.msra.mxu0 0.0
  %654 = vmatprep.subr.mxu0 0.0
  %655 = vmatpush2.msra.mxu0 0.0
  %656 = vmatprep.subr.mxu0 0.0
  %657 = vmatpush2.msra.mxu0 0.0
  %658 = vmatprep.subr.mxu0 0.0
  %659 = vmatpush2.msra.mxu0 0.0
  %660 = vmatprep.subr.mxu0 0.0
  %661 = vmatpush2.msra.mxu0 0.0
  %662 = vmatprep.subr.mxu0 0.0
  %663 = vmatpush2.msra.mxu0 0.0
  %664 = vmatprep.subr.mxu0 0.0
  %665 = vmatpush2.msra.mxu0 0.0
  %666 = vmatprep.subr.mxu0 0.0
  %667 = vmatpush2.msra.mxu0 0.0
  %668 = vmatprep.subr.mxu0 0.0
  %669 = vmatpush2.msra.mxu0 0.0
  %670 = vmatprep.subr.mxu0 0.0
  %671 = vmatpush2.msra.mxu0 0.0
  %672 = vmatprep.subr.mxu0 0.0
  %673 = vmatpush2.msra.mxu0 0.0
  %674 = vmatprep.subr.mxu0 0.0
  %675 = vmatpush2.msra.mxu0 0.0
  %676 = vmatprep.subr.mxu0 0.0
  %677 = vmatpush2.msra.mxu0 0.0
  %678 = vmatprep.subr.mxu0 0.0
  %679 = vmatpush2.msra.mxu0 0.0
  %680 = vmatprep.subr.mxu0 0.0
  %681 = vmatpush2.msra.mxu0 0.0
  %682 = vmatprep.subr.mxu0 0.0
  %683 = vmatpush2.msra.mxu0 0.0
  %684 = vmatprep.mubr.f32.mxu0 0.0
  %685 = vmatmul.mubr.f32.gmra.mxu0 %v602
  %v686 = vpop.f32.mrf.mxu0
  %v687 = vadd.f32 0.0, %v686
  %v688 = vpop.f32.mrf.mxu0
  %689 = vmatprep.mubr.f32.mxu0 0.0
  %690 = vmatmul.mubr.f32.gmra.mxu0 %v607
  %v691 = vpop.f32.mrf.mxu0
  %v692 = vadd.f32 0.0, %v691
  %v693 = vpop.f32.mrf.mxu0
  %694 = vmatprep.mubr.f32.mxu0 0.0
  %695 = vmatmul.mubr.f32.gmra.mxu0 %v612
  %v696 = vpop.f32.mrf.mxu0
  %v697 = vadd.f32 0.0, %v696
  %v698 = vpop.f32.mrf.mxu0
  %699 = vmatprep.mubr.f32.mxu0 0.0
  %700 = vmatmul.mubr.f32.gmra.mxu0 %v617
  %v701 = vpop.f32.mrf.mxu0
  %v702 = vadd.f32 0.0, %v701
  %v703 = vpop.f32.mrf.mxu0
  %704 = vdwg.mxu0
  %v705 = vld [vmem:[%s15] sm:$0xff]
  %v706 = vld [vmem:[%s15 + $0x8] sm:$0xff]
  %v707 = vld [vmem:[%s15 + $0x10] sm:$0xff]
  %v708 = vld [vmem:[%s15 + $0x18] sm:$0xff]
  %v710 = vsel %vm152, %v705, 0
  %v713 = vsel %vm152, %v706, 0
  %v716 = vsel %vm152, %v707, 0
  %v719 = vsel %vm152, %v708, 0
  %721 = vmatprep.subr.mxu0 0.0
  %722 = vmatpush1.msra.mxu0 0.0
  %723 = vmatprep.subr.mxu0 0.0
  %724 = vmatpush1.msra.mxu0 0.0
  %725 = vmatprep.subr.mxu0 0.0
  %726 = vmatpush1.msra.mxu0 0.0
  %727 = vmatprep.subr.mxu0 0.0
  %728 = vmatpush1.msra.mxu0 0.0
  %729 = vmatprep.subr.mxu0 0.0
  %730 = vmatpush1.msra.mxu0 0.0
  %731 = vmatprep.subr.mxu0 0.0
  %732 = vmatpush1.msra.mxu0 0.0
  %733 = vmatprep.subr.mxu0 0.0
  %734 = vmatpush1.msra.mxu0 0.0
  %735 = vmatprep.subr.mxu0 0.0
  %736 = vmatpush1.msra.mxu0 0.0
  %737 = vmatprep.subr.mxu0 0.0
  %738 = vmatpush1.msra.mxu0 0.0
  %739 = vmatprep.subr.mxu0 0.0
  %740 = vmatpush1.msra.mxu0 0.0
  %741 = vmatprep.subr.mxu0 0.0
  %742 = vmatpush1.msra.mxu0 0.0
  %743 = vmatprep.subr.mxu0 0.0
  %744 = vmatpush1.msra.mxu0 0.0
  %745 = vmatprep.subr.mxu0 0.0
  %746 = vmatpush1.msra.mxu0 %v702
  %747 = vmatprep.subr.mxu0 0.0
  %748 = vmatpush1.msra.mxu0 %v697
  %749 = vmatprep.subr.mxu0 0.0
  %750 = vmatpush1.msra.mxu0 %v692
  %751 = vmatprep.subr.mxu0 0.0
  %752 = vmatpush1.msra.mxu0 %v687
  %753 = vmatprep.subr.mxu0 0.0
  %754 = vmatpush2.msra.mxu0 0.0
  %755 = vmatprep.subr.mxu0 0.0
  %756 = vmatpush2.msra.mxu0 0.0
  %757 = vmatprep.subr.mxu0 0.0
  %758 = vmatpush2.msra.mxu0 0.0
  %759 = vmatprep.subr.mxu0 0.0
  %760 = vmatpush2.msra.mxu0 0.0
  %761 = vmatprep.subr.mxu0 0.0
  %762 = vmatpush2.msra.mxu0 0.0
  %763 = vmatprep.subr.mxu0 0.0
  %764 = vmatpush2.msra.mxu0 0.0
  %765 = vmatprep.subr.mxu0 0.0
  %766 = vmatpush2.msra.mxu0 0.0
  %767 = vmatprep.subr.mxu0 0.0
  %768 = vmatpush2.msra.mxu0 0.0
  %769 = vmatprep.subr.mxu0 0.0
  %770 = vmatpush2.msra.mxu0 0.0
  %771 = vmatprep.subr.mxu0 0.0
  %772 = vmatpush2.msra.mxu0 0.0
  %773 = vmatprep.subr.mxu0 0.0
  %774 = vmatpush2.msra.mxu0 0.0
  %775 = vmatprep.subr.mxu0 0.0
  %776 = vmatpush2.msra.mxu0 0.0
  %777 = vmatprep.subr.mxu0 0.0
  %778 = vmatpush2.msra.mxu0 0.0
  %779 = vmatprep.subr.mxu0 0.0
  %780 = vmatpush2.msra.mxu0 0.0
  %781 = vmatprep.subr.mxu0 0.0
  %782 = vmatpush2.msra.mxu0 0.0
  %783 = vmatprep.subr.mxu0 0.0
  %784 = vmatpush2.msra.mxu0 0.0
  %785 = vmatprep.mubr.f32.mxu0 0.0
  %786 = vmatmul.mubr.f32.gmra.mxu0 %v710
  %v787 = vpop.f32.mrf.mxu0
  %v788 = vadd.f32 0.0, %v787
  %v789 = vpop.f32.mrf.mxu0
  %790 = vmatprep.mubr.f32.mxu0 0.0
  %791 = vmatmul.mubr.f32.gmra.mxu0 %v713
  %v792 = vpop.f32.mrf.mxu0
  %v793 = vadd.f32 0.0, %v792
  %v794 = vpop.f32.mrf.mxu0
  %795 = vmatprep.mubr.f32.mxu0 0.0
  %796 = vmatmul.mubr.f32.gmra.mxu0 %v716
  %v797 = vpop.f32.mrf.mxu0
  %v798 = vadd.f32 0.0, %v797
  %v799 = vpop.f32.mrf.mxu0
  %800 = vmatprep.mubr.f32.mxu0 0.0
  %801 = vmatmul.mubr.f32.gmra.mxu0 %v719
  %v802 = vpop.f32.mrf.mxu0
  %v803 = vadd.f32 0.0, %v802
  %v804 = vpop.f32.mrf.mxu0
  %805 = vdwg.mxu0
  %806 = vmatprep.subr.mxu0 0.0
  %807 = vmatpush1.msra.mxu0 %v517
  %808 = vmatprep.subr.mxu0 0.0
  %809 = vmatpush1.msra.mxu0 %v516
  %810 = vmatprep.subr.mxu0 0.0
  %811 = vmatpush1.msra.mxu0 %v515
  %812 = vmatprep.subr.mxu0 0.0
  %813 = vmatpush1.msra.mxu0 %v514
  %814 = vmatprep.subr.mxu0 0.0
  %815 = vmatpush1.msra.mxu0 %v513
  %816 = vmatprep.subr.mxu0 0.0
  %817 = vmatpush1.msra.mxu0 %v512
  %818 = vmatprep.subr.mxu0 0.0
  %819 = vmatpush1.msra.mxu0 %v511
  %820 = vmatprep.subr.mxu0 0.0
  %821 = vmatpush1.msra.mxu0 %v510
  %822 = vmatprep.subr.mxu0 0.0
  %823 = vmatpush1.msra.mxu0 %v509
  %824 = vmatprep.subr.mxu0 0.0
  %825 = vmatpush1.msra.mxu0 %v508
  %826 = vmatprep.subr.mxu0 0.0
  %827 = vmatpush1.msra.mxu0 %v507
  %828 = vmatprep.subr.mxu0 0.0
  %829 = vmatpush1.msra.mxu0 %v506
  %830 = vmatprep.subr.mxu0 0.0
  %831 = vmatpush1.msra.mxu0 %v505
  %832 = vmatprep.subr.mxu0 0.0
  %833 = vmatpush1.msra.mxu0 %v504
  %834 = vmatprep.subr.mxu0 0.0
  %835 = vmatpush1.msra.mxu0 %v503
  %836 = vmatprep.subr.mxu0 0.0
  %837 = vmatpush1.msra.mxu0 %v502
  %838 = vmatprep.subr.mxu0 0.0
  %839 = vmatpush2.msra.mxu0 0.0
  %840 = vmatprep.subr.mxu0 0.0
  %841 = vmatpush2.msra.mxu0 0.0
  %842 = vmatprep.subr.mxu0 0.0
  %843 = vmatpush2.msra.mxu0 0.0
  %844 = vmatprep.subr.mxu0 0.0
  %845 = vmatpush2.msra.mxu0 0.0
  %846 = vmatprep.subr.mxu0 0.0
  %847 = vmatpush2.msra.mxu0 0.0
  %848 = vmatprep.subr.mxu0 0.0
  %849 = vmatpush2.msra.mxu0 0.0
  %850 = vmatprep.subr.mxu0 0.0
  %851 = vmatpush2.msra.mxu0 0.0
  %852 = vmatprep.subr.mxu0 0.0
  %853 = vmatpush2.msra.mxu0 0.0
  %854 = vmatprep.subr.mxu0 0.0
  %855 = vmatpush2.msra.mxu0 0.0
  %856 = vmatprep.subr.mxu0 0.0
  %857 = vmatpush2.msra.mxu0 0.0
  %858 = vmatprep.subr.mxu0 0.0
  %859 = vmatpush2.msra.mxu0 0.0
  %860 = vmatprep.subr.mxu0 0.0
  %861 = vmatpush2.msra.mxu0 0.0
  %862 = vmatprep.subr.mxu0 0.0
  %863 = vmatpush2.msra.mxu0 0.0
  %864 = vmatprep.subr.mxu0 0.0
  %865 = vmatpush2.msra.mxu0 0.0
  %866 = vmatprep.subr.mxu0 0.0
  %867 = vmatpush2.msra.mxu0 0.0
  %868 = vmatprep.subr.mxu0 0.0
  %869 = vmatpush2.msra.mxu0 0.0
  %870 = vmatprep.mubr.f32.mxu0 0.0
  %871 = vmatmul.mubr.f32.gmra.mxu0 %v788
  %v872 = vpop.f32.mrf.mxu0
  %v873 = vadd.f32 0.0, %v872
  %v874 = vpop.f32.mrf.mxu0
  %875 = vmatprep.mubr.f32.mxu0 0.0
  %876 = vmatmul.mubr.f32.gmra.mxu0 %v793
  %v877 = vpop.f32.mrf.mxu0
  %v878 = vadd.f32 0.0, %v877
  %v879 = vpop.f32.mrf.mxu0
  %880 = vmatprep.mubr.f32.mxu0 0.0
  %881 = vmatmul.mubr.f32.gmra.mxu0 %v798
  %v882 = vpop.f32.mrf.mxu0
  %v883 = vadd.f32 0.0, %v882
  %v884 = vpop.f32.mrf.mxu0
  %885 = vmatprep.mubr.f32.mxu0 0.0
  %886 = vmatmul.mubr.f32.gmra.mxu0 %v803
  %v887 = vpop.f32.mrf.mxu0
  %v888 = vadd.f32 0.0, %v887
  %v889 = vpop.f32.mrf.mxu0
  %890 = vdwg.mxu0
  %vm891 = vcmp.gt.f32.partialorder %v873, 0.0
  %vm892 = vcmp.gt.f32.partialorder %v878, 0.0
  %vm893 = vcmp.gt.f32.partialorder %v883, 0.0
  %vm894 = vcmp.gt.f32.partialorder %v888, 0.0
  %v895 = vmul.f32 %v873, 0.2
  %v896 = vmul.f32 %v878, 0.2
  %v897 = vmul.f32 %v883, 0.2
  %v898 = vmul.f32 %v888, 0.2
  %v899 = vsel %vm891, %v873, %v895
  %v900 = vsel %vm892, %v878, %v896
  %v901 = vsel %vm893, %v883, %v897
  %v902 = vsel %vm894, %v888, %v898
  %v903 = vld [vmem:[%s17] sm:$0xff]
  %v904 = vld [vmem:[%s17 + $0x8] sm:$0xff]
  %v905 = vld [vmem:[%s17 + $0x10] sm:$0xff]
  %v906 = vld [vmem:[%s17 + $0x18] sm:$0xff]
  %v908 = vsel %vm152, %v903, 0
  %v911 = vsel %vm152, %v904, 0
  %v914 = vsel %vm152, %v905, 0
  %v917 = vsel %vm152, %v906, 0
  %919 = vmatprep.subr.mxu0 0.0
  %920 = vmatpush1.msra.mxu0 0.0
  %921 = vmatprep.subr.mxu0 0.0
  %922 = vmatpush1.msra.mxu0 0.0
  %923 = vmatprep.subr.mxu0 0.0
  %924 = vmatpush1.msra.mxu0 0.0
  %925 = vmatprep.subr.mxu0 0.0
  %926 = vmatpush1.msra.mxu0 0.0
  %927 = vmatprep.subr.mxu0 0.0
  %928 = vmatpush1.msra.mxu0 0.0
  %929 = vmatprep.subr.mxu0 0.0
  %930 = vmatpush1.msra.mxu0 0.0
  %931 = vmatprep.subr.mxu0 0.0
  %932 = vmatpush1.msra.mxu0 0.0
  %933 = vmatprep.subr.mxu0 0.0
  %934 = vmatpush1.msra.mxu0 0.0
  %935 = vmatprep.subr.mxu0 0.0
  %936 = vmatpush1.msra.mxu0 0.0
  %937 = vmatprep.subr.mxu0 0.0
  %938 = vmatpush1.msra.mxu0 0.0
  %939 = vmatprep.subr.mxu0 0.0
  %940 = vmatpush1.msra.mxu0 0.0
  %941 = vmatprep.subr.mxu0 0.0
  %942 = vmatpush1.msra.mxu0 0.0
  %943 = vmatprep.subr.mxu0 0.0
  %944 = vmatpush1.msra.mxu0 %v902
  %945 = vmatprep.subr.mxu0 0.0
  %946 = vmatpush1.msra.mxu0 %v901
  %947 = vmatprep.subr.mxu0 0.0
  %948 = vmatpush1.msra.mxu0 %v900
  %949 = vmatprep.subr.mxu0 0.0
  %950 = vmatpush1.msra.mxu0 %v899
  %951 = vmatprep.subr.mxu0 0.0
  %952 = vmatpush2.msra.mxu0 0.0
  %953 = vmatprep.subr.mxu0 0.0
  %954 = vmatpush2.msra.mxu0 0.0
  %955 = vmatprep.subr.mxu0 0.0
  %956 = vmatpush2.msra.mxu0 0.0
  %957 = vmatprep.subr.mxu0 0.0
  %958 = vmatpush2.msra.mxu0 0.0
  %959 = vmatprep.subr.mxu0 0.0
  %960 = vmatpush2.msra.mxu0 0.0
  %961 = vmatprep.subr.mxu0 0.0
  %962 = vmatpush2.msra.mxu0 0.0
  %963 = vmatprep.subr.mxu0 0.0
  %964 = vmatpush2.msra.mxu0 0.0
  %965 = vmatprep.subr.mxu0 0.0
  %966 = vmatpush2.msra.mxu0 0.0
  %967 = vmatprep.subr.mxu0 0.0
  %968 = vmatpush2.msra.mxu0 0.0
  %969 = vmatprep.subr.mxu0 0.0
  %970 = vmatpush2.msra.mxu0 0.0
  %971 = vmatprep.subr.mxu0 0.0
  %972 = vmatpush2.msra.mxu0 0.0
  %973 = vmatprep.subr.mxu0 0.0
  %974 = vmatpush2.msra.mxu0 0.0
  %975 = vmatprep.subr.mxu0 0.0
  %976 = vmatpush2.msra.mxu0 0.0
  %977 = vmatprep.subr.mxu0 0.0
  %978 = vmatpush2.msra.mxu0 0.0
  %979 = vmatprep.subr.mxu0 0.0
  %980 = vmatpush2.msra.mxu0 0.0
  %981 = vmatprep.subr.mxu0 0.0
  %982 = vmatpush2.msra.mxu0 0.0
  %983 = vmatprep.mubr.f32.mxu0 0.0
  %984 = vmatmul.mubr.f32.gmra.mxu0 %v908
  %v985 = vpop.f32.mrf.mxu0
  %v986 = vadd.f32 0.0, %v985
  %v987 = vpop.f32.mrf.mxu0
  %988 = vmatprep.mubr.f32.mxu0 0.0
  %989 = vmatmul.mubr.f32.gmra.mxu0 %v911
  %v990 = vpop.f32.mrf.mxu0
  %v991 = vadd.f32 0.0, %v990
  %v992 = vpop.f32.mrf.mxu0
  %993 = vmatprep.mubr.f32.mxu0 0.0
  %994 = vmatmul.mubr.f32.gmra.mxu0 %v914
  %v995 = vpop.f32.mrf.mxu0
  %v996 = vadd.f32 0.0, %v995
  %v997 = vpop.f32.mrf.mxu0
  %998 = vmatprep.mubr.f32.mxu0 0.0
  %999 = vmatmul.mubr.f32.gmra.mxu0 %v917
  %v1000 = vpop.f32.mrf.mxu0
  %v1001 = vadd.f32 0.0, %v1000
  %v1002 = vpop.f32.mrf.mxu0
  %1003 = vdwg.mxu0
  %1004 = vmatprep.subr.mxu0 0.0
  %1005 = vmatpush1.msra.mxu0 %v517
  %1006 = vmatprep.subr.mxu0 0.0
  %1007 = vmatpush1.msra.mxu0 %v516
  %1008 = vmatprep.subr.mxu0 0.0
  %1009 = vmatpush1.msra.mxu0 %v515
  %1010 = vmatprep.subr.mxu0 0.0
  %1011 = vmatpush1.msra.mxu0 %v514
  %1012 = vmatprep.subr.mxu0 0.0
  %1013 = vmatpush1.msra.mxu0 %v513
  %1014 = vmatprep.subr.mxu0 0.0
  %1015 = vmatpush1.msra.mxu0 %v512
  %1016 = vmatprep.subr.mxu0 0.0
  %1017 = vmatpush1.msra.mxu0 %v511
  %1018 = vmatprep.subr.mxu0 0.0
  %1019 = vmatpush1.msra.mxu0 %v510
  %1020 = vmatprep.subr.mxu0 0.0
  %1021 = vmatpush1.msra.mxu0 %v509
  %1022 = vmatprep.subr.mxu0 0.0
  %1023 = vmatpush1.msra.mxu0 %v508
  %1024 = vmatprep.subr.mxu0 0.0
  %1025 = vmatpush1.msra.mxu0 %v507
  %1026 = vmatprep.subr.mxu0 0.0
  %1027 = vmatpush1.msra.mxu0 %v506
  %1028 = vmatprep.subr.mxu0 0.0
  %1029 = vmatpush1.msra.mxu0 %v505
  %1030 = vmatprep.subr.mxu0 0.0
  %1031 = vmatpush1.msra.mxu0 %v504
  %1032 = vmatprep.subr.mxu0 0.0
  %1033 = vmatpush1.msra.mxu0 %v503
  %1034 = vmatprep.subr.mxu0 0.0
  %1035 = vmatpush1.msra.mxu0 %v502
  %1036 = vmatprep.subr.mxu0 0.0
  %1037 = vmatpush2.msra.mxu0 0.0
  %1038 = vmatprep.subr.mxu0 0.0
  %1039 = vmatpush2.msra.mxu0 0.0
  %1040 = vmatprep.subr.mxu0 0.0
  %1041 = vmatpush2.msra.mxu0 0.0
  %1042 = vmatprep.subr.mxu0 0.0
  %1043 = vmatpush2.msra.mxu0 0.0
  %1044 = vmatprep.subr.mxu0 0.0
  %1045 = vmatpush2.msra.mxu0 0.0
  %1046 = vmatprep.subr.mxu0 0.0
  %1047 = vmatpush2.msra.mxu0 0.0
  %1048 = vmatprep.subr.mxu0 0.0
  %1049 = vmatpush2.msra.mxu0 0.0
  %1050 = vmatprep.subr.mxu0 0.0
  %1051 = vmatpush2.msra.mxu0 0.0
  %1052 = vmatprep.subr.mxu0 0.0
  %1053 = vmatpush2.msra.mxu0 0.0
  %1054 = vmatprep.subr.mxu0 0.0
  %1055 = vmatpush2.msra.mxu0 0.0
  %1056 = vmatprep.subr.mxu0 0.0
  %1057 = vmatpush2.msra.mxu0 0.0
  %1058 = vmatprep.subr.mxu0 0.0
  %1059 = vmatpush2.msra.mxu0 0.0
  %1060 = vmatprep.subr.mxu0 0.0
  %1061 = vmatpush2.msra.mxu0 0.0
  %1062 = vmatprep.subr.mxu0 0.0
  %1063 = vmatpush2.msra.mxu0 0.0
  %1064 = vmatprep.subr.mxu0 0.0
  %1065 = vmatpush2.msra.mxu0 0.0
  %1066 = vmatprep.subr.mxu0 0.0
  %1067 = vmatpush2.msra.mxu0 0.0
  %1068 = vmatprep.mubr.f32.mxu0 0.0
  %1069 = vmatmul.mubr.f32.gmra.mxu0 %v986
  %v1070 = vpop.f32.mrf.mxu0
  %v1071 = vadd.f32 0.0, %v1070
  %v1072 = vpop.f32.mrf.mxu0
  %1073 = vmatprep.mubr.f32.mxu0 0.0
  %1074 = vmatmul.mubr.f32.gmra.mxu0 %v991
  %v1075 = vpop.f32.mrf.mxu0
  %v1076 = vadd.f32 0.0, %v1075
  %v1077 = vpop.f32.mrf.mxu0
  %1078 = vmatprep.mubr.f32.mxu0 0.0
  %1079 = vmatmul.mubr.f32.gmra.mxu0 %v996
  %v1080 = vpop.f32.mrf.mxu0
  %v1081 = vadd.f32 0.0, %v1080
  %v1082 = vpop.f32.mrf.mxu0
  %1083 = vmatprep.mubr.f32.mxu0 0.0
  %1084 = vmatmul.mubr.f32.gmra.mxu0 %v1001
  %v1085 = vpop.f32.mrf.mxu0
  %v1086 = vadd.f32 0.0, %v1085
  %v1087 = vpop.f32.mrf.mxu0
  %1088 = vdwg.mxu0
  %v1089 = vadd.f32 %v687, %v1071
  %v1090 = vadd.f32 %v692, %v1076
  %v1091 = vadd.f32 %v697, %v1081
  %v1092 = vadd.f32 %v702, %v1086
  %s1093 = scalar_lea.vmem %s15, 32
  %v1094 = vld [vmem:[%s1093] sm:$0xff]
  %v1095 = vld [vmem:[%s1093 + $0x8] sm:$0xff]
  %v1096 = vld [vmem:[%s1093 + $0x10] sm:$0xff]
  %v1097 = vld [vmem:[%s1093 + $0x18] sm:$0xff]
  %v1099 = vsel %vm152, %v1094, 0
  %v1102 = vsel %vm152, %v1095, 0
  %v1105 = vsel %vm152, %v1096, 0
  %v1108 = vsel %vm152, %v1097, 0
  %1110 = vmatprep.subr.mxu0 0.0
  %1111 = vmatpush1.msra.mxu0 0.0
  %1112 = vmatprep.subr.mxu0 0.0
  %1113 = vmatpush1.msra.mxu0 0.0
  %1114 = vmatprep.subr.mxu0 0.0
  %1115 = vmatpush1.msra.mxu0 0.0
  %1116 = vmatprep.subr.mxu0 0.0
  %1117 = vmatpush1.msra.mxu0 0.0
  %1118 = vmatprep.subr.mxu0 0.0
  %1119 = vmatpush1.msra.mxu0 0.0
  %1120 = vmatprep.subr.mxu0 0.0
  %1121 = vmatpush1.msra.mxu0 0.0
  %1122 = vmatprep.subr.mxu0 0.0
  %1123 = vmatpush1.msra.mxu0 0.0
  %1124 = vmatprep.subr.mxu0 0.0
  %1125 = vmatpush1.msra.mxu0 0.0
  %1126 = vmatprep.subr.mxu0 0.0
  %1127 = vmatpush1.msra.mxu0 0.0
  %1128 = vmatprep.subr.mxu0 0.0
  %1129 = vmatpush1.msra.mxu0 0.0
  %1130 = vmatprep.subr.mxu0 0.0
  %1131 = vmatpush1.msra.mxu0 0.0
  %1132 = vmatprep.subr.mxu0 0.0
  %1133 = vmatpush1.msra.mxu0 0.0
  %1134 = vmatprep.subr.mxu0 0.0
  %1135 = vmatpush1.msra.mxu0 %v1092
  %1136 = vmatprep.subr.mxu0 0.0
  %1137 = vmatpush1.msra.mxu0 %v1091
  %1138 = vmatprep.subr.mxu0 0.0
  %1139 = vmatpush1.msra.mxu0 %v1090
  %1140 = vmatprep.subr.mxu0 0.0
  %1141 = vmatpush1.msra.mxu0 %v1089
  %1142 = vmatprep.subr.mxu0 0.0
  %1143 = vmatpush2.msra.mxu0 0.0
  %1144 = vmatprep.subr.mxu0 0.0
  %1145 = vmatpush2.msra.mxu0 0.0
  %1146 = vmatprep.subr.mxu0 0.0
  %1147 = vmatpush2.msra.mxu0 0.0
  %1148 = vmatprep.subr.mxu0 0.0
  %1149 = vmatpush2.msra.mxu0 0.0
  %1150 = vmatprep.subr.mxu0 0.0
  %1151 = vmatpush2.msra.mxu0 0.0
  %1152 = vmatprep.subr.mxu0 0.0
  %1153 = vmatpush2.msra.mxu0 0.0
  %1154 = vmatprep.subr.mxu0 0.0
  %1155 = vmatpush2.msra.mxu0 0.0
  %1156 = vmatprep.subr.mxu0 0.0
  %1157 = vmatpush2.msra.mxu0 0.0
  %1158 = vmatprep.subr.mxu0 0.0
  %1159 = vmatpush2.msra.mxu0 0.0
  %1160 = vmatprep.subr.mxu0 0.0
  %1161 = vmatpush2.msra.mxu0 0.0
  %1162 = vmatprep.subr.mxu0 0.0
  %1163 = vmatpush2.msra.mxu0 0.0
  %1164 = vmatprep.subr.mxu0 0.0
  %1165 = vmatpush2.msra.mxu0 0.0
  %1166 = vmatprep.subr.mxu0 0.0
  %1167 = vmatpush2.msra.mxu0 0.0
  %1168 = vmatprep.subr.mxu0 0.0
  %1169 = vmatpush2.msra.mxu0 0.0
  %1170 = vmatprep.subr.mxu0 0.0
  %1171 = vmatpush2.msra.mxu0 0.0
  %1172 = vmatprep.subr.mxu0 0.0
  %1173 = vmatpush2.msra.mxu0 0.0
  %1174 = vmatprep.mubr.f32.mxu0 0.0
  %1175 = vmatmul.mubr.f32.gmra.mxu0 %v1099
  %v1176 = vpop.f32.mrf.mxu0
  %v1177 = vadd.f32 0.0, %v1176
  %v1178 = vpop.f32.mrf.mxu0
  %1179 = vmatprep.mubr.f32.mxu0 0.0
  %1180 = vmatmul.mubr.f32.gmra.mxu0 %v1102
  %v1181 = vpop.f32.mrf.mxu0
  %v1182 = vadd.f32 0.0, %v1181
  %v1183 = vpop.f32.mrf.mxu0
  %1184 = vmatprep.mubr.f32.mxu0 0.0
  %1185 = vmatmul.mubr.f32.gmra.mxu0 %v1105
  %v1186 = vpop.f32.mrf.mxu0
  %v1187 = vadd.f32 0.0, %v1186
  %v1188 = vpop.f32.mrf.mxu0
  %1189 = vmatprep.mubr.f32.mxu0 0.0
  %1190 = vmatmul.mubr.f32.gmra.mxu0 %v1108
  %v1191 = vpop.f32.mrf.mxu0
  %v1192 = vadd.f32 0.0, %v1191
  %v1193 = vpop.f32.mrf.mxu0
  %1194 = vdwg.mxu0
  %1195 = vmatprep.subr.mxu0 0.0
  %1196 = vmatpush1.msra.mxu0 %v517
  %1197 = vmatprep.subr.mxu0 0.0
  %1198 = vmatpush1.msra.mxu0 %v516
  %1199 = vmatprep.subr.mxu0 0.0
  %1200 = vmatpush1.msra.mxu0 %v515
  %1201 = vmatprep.subr.mxu0 0.0
  %1202 = vmatpush1.msra.mxu0 %v514
  %1203 = vmatprep.subr.mxu0 0.0
  %1204 = vmatpush1.msra.mxu0 %v513
  %1205 = vmatprep.subr.mxu0 0.0
  %1206 = vmatpush1.msra.mxu0 %v512
  %1207 = vmatprep.subr.mxu0 0.0
  %1208 = vmatpush1.msra.mxu0 %v511
  %1209 = vmatprep.subr.mxu0 0.0
  %1210 = vmatpush1.msra.mxu0 %v510
  %1211 = vmatprep.subr.mxu0 0.0
  %1212 = vmatpush1.msra.mxu0 %v509
  %1213 = vmatprep.subr.mxu0 0.0
  %1214 = vmatpush1.msra.mxu0 %v508
  %1215 = vmatprep.subr.mxu0 0.0
  %1216 = vmatpush1.msra.mxu0 %v507
  %1217 = vmatprep.subr.mxu0 0.0
  %1218 = vmatpush1.msra.mxu0 %v506
  %1219 = vmatprep.subr.mxu0 0.0
  %1220 = vmatpush1.msra.mxu0 %v505
  %1221 = vmatprep.subr.mxu0 0.0
  %1222 = vmatpush1.msra.mxu0 %v504
  %1223 = vmatprep.subr.mxu0 0.0
  %1224 = vmatpush1.msra.mxu0 %v503
  %1225 = vmatprep.subr.mxu0 0.0
  %1226 = vmatpush1.msra.mxu0 %v502
  %1227 = vmatprep.subr.mxu0 0.0
  %1228 = vmatpush2.msra.mxu0 0.0
  %1229 = vmatprep.subr.mxu0 0.0
  %1230 = vmatpush2.msra.mxu0 0.0
  %1231 = vmatprep.subr.mxu0 0.0
  %1232 = vmatpush2.msra.mxu0 0.0
  %1233 = vmatprep.subr.mxu0 0.0
  %1234 = vmatpush2.msra.mxu0 0.0
  %1235 = vmatprep.subr.mxu0 0.0
  %1236 = vmatpush2.msra.mxu0 0.0
  %1237 = vmatprep.subr.mxu0 0.0
  %1238 = vmatpush2.msra.mxu0 0.0
  %1239 = vmatprep.subr.mxu0 0.0
  %1240 = vmatpush2.msra.mxu0 0.0
  %1241 = vmatprep.subr.mxu0 0.0
  %1242 = vmatpush2.msra.mxu0 0.0
  %1243 = vmatprep.subr.mxu0 0.0
  %1244 = vmatpush2.msra.mxu0 0.0
  %1245 = vmatprep.subr.mxu0 0.0
  %1246 = vmatpush2.msra.mxu0 0.0
  %1247 = vmatprep.subr.mxu0 0.0
  %1248 = vmatpush2.msra.mxu0 0.0
  %1249 = vmatprep.subr.mxu0 0.0
  %1250 = vmatpush2.msra.mxu0 0.0
  %1251 = vmatprep.subr.mxu0 0.0
  %1252 = vmatpush2.msra.mxu0 0.0
  %1253 = vmatprep.subr.mxu0 0.0
  %1254 = vmatpush2.msra.mxu0 0.0
  %1255 = vmatprep.subr.mxu0 0.0
  %1256 = vmatpush2.msra.mxu0 0.0
  %1257 = vmatprep.subr.mxu0 0.0
  %1258 = vmatpush2.msra.mxu0 0.0
  %1259 = vmatprep.mubr.f32.mxu0 0.0
  %1260 = vmatmul.mubr.f32.gmra.mxu0 %v1177
  %v1261 = vpop.f32.mrf.mxu0
  %v1262 = vadd.f32 0.0, %v1261
  %v1263 = vpop.f32.mrf.mxu0
  %1264 = vmatprep.mubr.f32.mxu0 0.0
  %1265 = vmatmul.mubr.f32.gmra.mxu0 %v1182
  %v1266 = vpop.f32.mrf.mxu0
  %v1267 = vadd.f32 0.0, %v1266
  %v1268 = vpop.f32.mrf.mxu0
  %1269 = vmatprep.mubr.f32.mxu0 0.0
  %1270 = vmatmul.mubr.f32.gmra.mxu0 %v1187
  %v1271 = vpop.f32.mrf.mxu0
  %v1272 = vadd.f32 0.0, %v1271
  %v1273 = vpop.f32.mrf.mxu0
  %1274 = vmatprep.mubr.f32.mxu0 0.0
  %1275 = vmatmul.mubr.f32.gmra.mxu0 %v1192
  %v1276 = vpop.f32.mrf.mxu0
  %v1277 = vadd.f32 0.0, %v1276
  %v1278 = vpop.f32.mrf.mxu0
  %1279 = vdwg.mxu0
  %vm1280 = vcmp.gt.f32.partialorder %v1262, 0.0
  %vm1281 = vcmp.gt.f32.partialorder %v1267, 0.0
  %vm1282 = vcmp.gt.f32.partialorder %v1272, 0.0
  %vm1283 = vcmp.gt.f32.partialorder %v1277, 0.0
  %v1284 = vmul.f32 %v1262, 0.2
  %v1285 = vmul.f32 %v1267, 0.2
  %v1286 = vmul.f32 %v1272, 0.2
  %v1287 = vmul.f32 %v1277, 0.2
  %v1288 = vsel %vm1280, %v1262, %v1284
  %v1289 = vsel %vm1281, %v1267, %v1285
  %v1290 = vsel %vm1282, %v1272, %v1286
  %v1291 = vsel %vm1283, %v1277, %v1287
  %s1292 = scalar_lea.vmem %s17, 32
  %v1293 = vld [vmem:[%s1292] sm:$0xff]
  %v1294 = vld [vmem:[%s1292 + $0x8] sm:$0xff]
  %v1295 = vld [vmem:[%s1292 + $0x10] sm:$0xff]
  %v1296 = vld [vmem:[%s1292 + $0x18] sm:$0xff]
  %v1298 = vsel %vm152, %v1293, 0
  %v1301 = vsel %vm152, %v1294, 0
  %v1304 = vsel %vm152, %v1295, 0
  %v1307 = vsel %vm152, %v1296, 0
  %1309 = vmatprep.subr.mxu0 0.0
  %1310 = vmatpush1.msra.mxu0 0.0
  %1311 = vmatprep.subr.mxu0 0.0
  %1312 = vmatpush1.msra.mxu0 0.0
  %1313 = vmatprep.subr.mxu0 0.0
  %1314 = vmatpush1.msra.mxu0 0.0
  %1315 = vmatprep.subr.mxu0 0.0
  %1316 = vmatpush1.msra.mxu0 0.0
  %1317 = vmatprep.subr.mxu0 0.0
  %1318 = vmatpush1.msra.mxu0 0.0
  %1319 = vmatprep.subr.mxu0 0.0
  %1320 = vmatpush1.msra.mxu0 0.0
  %1321 = vmatprep.subr.mxu0 0.0
  %1322 = vmatpush1.msra.mxu0 0.0
  %1323 = vmatprep.subr.mxu0 0.0
  %1324 = vmatpush1.msra.mxu0 0.0
  %1325 = vmatprep.subr.mxu0 0.0
  %1326 = vmatpush1.msra.mxu0 0.0
  %1327 = vmatprep.subr.mxu0 0.0
  %1328 = vmatpush1.msra.mxu0 0.0
  %1329 = vmatprep.subr.mxu0 0.0
  %1330 = vmatpush1.msra.mxu0 0.0
  %1331 = vmatprep.subr.mxu0 0.0
  %1332 = vmatpush1.msra.mxu0 0.0
  %1333 = vmatprep.subr.mxu0 0.0
  %1334 = vmatpush1.msra.mxu0 %v1291
  %1335 = vmatprep.subr.mxu0 0.0
  %1336 = vmatpush1.msra.mxu0 %v1290
  %1337 = vmatprep.subr.mxu0 0.0
  %1338 = vmatpush1.msra.mxu0 %v1289
  %1339 = vmatprep.subr.mxu0 0.0
  %1340 = vmatpush1.msra.mxu0 %v1288
  %1341 = vmatprep.subr.mxu0 0.0
  %1342 = vmatpush2.msra.mxu0 0.0
  %1343 = vmatprep.subr.mxu0 0.0
  %1344 = vmatpush2.msra.mxu0 0.0
  %1345 = vmatprep.subr.mxu0 0.0
  %1346 = vmatpush2.msra.mxu0 0.0
  %1347 = vmatprep.subr.mxu0 0.0
  %1348 = vmatpush2.msra.mxu0 0.0
  %1349 = vmatprep.subr.mxu0 0.0
  %1350 = vmatpush2.msra.mxu0 0.0
  %1351 = vmatprep.subr.mxu0 0.0
  %1352 = vmatpush2.msra.mxu0 0.0
  %1353 = vmatprep.subr.mxu0 0.0
  %1354 = vmatpush2.msra.mxu0 0.0
  %1355 = vmatprep.subr.mxu0 0.0
  %1356 = vmatpush2.msra.mxu0 0.0
  %1357 = vmatprep.subr.mxu0 0.0
  %1358 = vmatpush2.msra.mxu0 0.0
  %1359 = vmatprep.subr.mxu0 0.0
  %1360 = vmatpush2.msra.mxu0 0.0
  %1361 = vmatprep.subr.mxu0 0.0
  %1362 = vmatpush2.msra.mxu0 0.0
  %1363 = vmatprep.subr.mxu0 0.0
  %1364 = vmatpush2.msra.mxu0 0.0
  %1365 = vmatprep.subr.mxu0 0.0
  %1366 = vmatpush2.msra.mxu0 0.0
  %1367 = vmatprep.subr.mxu0 0.0
  %1368 = vmatpush2.msra.mxu0 0.0
  %1369 = vmatprep.subr.mxu0 0.0
  %1370 = vmatpush2.msra.mxu0 0.0
  %1371 = vmatprep.subr.mxu0 0.0
  %1372 = vmatpush2.msra.mxu0 0.0
  %1373 = vmatprep.mubr.f32.mxu0 0.0
  %1374 = vmatmul.mubr.f32.gmra.mxu0 %v1298
  %v1375 = vpop.f32.mrf.mxu0
  %v1376 = vadd.f32 0.0, %v1375
  %v1377 = vpop.f32.mrf.mxu0
  %1378 = vmatprep.mubr.f32.mxu0 0.0
  %1379 = vmatmul.mubr.f32.gmra.mxu0 %v1301
  %v1380 = vpop.f32.mrf.mxu0
  %v1381 = vadd.f32 0.0, %v1380
  %v1382 = vpop.f32.mrf.mxu0
  %1383 = vmatprep.mubr.f32.mxu0 0.0
  %1384 = vmatmul.mubr.f32.gmra.mxu0 %v1304
  %v1385 = vpop.f32.mrf.mxu0
  %v1386 = vadd.f32 0.0, %v1385
  %v1387 = vpop.f32.mrf.mxu0
  %1388 = vmatprep.mubr.f32.mxu0 0.0
  %1389 = vmatmul.mubr.f32.gmra.mxu0 %v1307
  %v1390 = vpop.f32.mrf.mxu0
  %v1391 = vadd.f32 0.0, %v1390
  %v1392 = vpop.f32.mrf.mxu0
  %1393 = vdwg.mxu0
  %1394 = vmatprep.subr.mxu0 0.0
  %1395 = vmatpush1.msra.mxu0 %v517
  %1396 = vmatprep.subr.mxu0 0.0
  %1397 = vmatpush1.msra.mxu0 %v516
  %1398 = vmatprep.subr.mxu0 0.0
  %1399 = vmatpush1.msra.mxu0 %v515
  %1400 = vmatprep.subr.mxu0 0.0
  %1401 = vmatpush1.msra.mxu0 %v514
  %1402 = vmatprep.subr.mxu0 0.0
  %1403 = vmatpush1.msra.mxu0 %v513
  %1404 = vmatprep.subr.mxu0 0.0
  %1405 = vmatpush1.msra.mxu0 %v512
  %1406 = vmatprep.subr.mxu0 0.0
  %1407 = vmatpush1.msra.mxu0 %v511
  %1408 = vmatprep.subr.mxu0 0.0
  %1409 = vmatpush1.msra.mxu0 %v510
  %1410 = vmatprep.subr.mxu0 0.0
  %1411 = vmatpush1.msra.mxu0 %v509
  %1412 = vmatprep.subr.mxu0 0.0
  %1413 = vmatpush1.msra.mxu0 %v508
  %1414 = vmatprep.subr.mxu0 0.0
  %1415 = vmatpush1.msra.mxu0 %v507
  %1416 = vmatprep.subr.mxu0 0.0
  %1417 = vmatpush1.msra.mxu0 %v506
  %1418 = vmatprep.subr.mxu0 0.0
  %1419 = vmatpush1.msra.mxu0 %v505
  %1420 = vmatprep.subr.mxu0 0.0
  %1421 = vmatpush1.msra.mxu0 %v504
  %1422 = vmatprep.subr.mxu0 0.0
  %1423 = vmatpush1.msra.mxu0 %v503
  %1424 = vmatprep.subr.mxu0 0.0
  %1425 = vmatpush1.msra.mxu0 %v502
  %1426 = vmatprep.subr.mxu0 0.0
  %1427 = vmatpush2.msra.mxu0 0.0
  %1428 = vmatprep.subr.mxu0 0.0
  %1429 = vmatpush2.msra.mxu0 0.0
  %1430 = vmatprep.subr.mxu0 0.0
  %1431 = vmatpush2.msra.mxu0 0.0
  %1432 = vmatprep.subr.mxu0 0.0
  %1433 = vmatpush2.msra.mxu0 0.0
  %1434 = vmatprep.subr.mxu0 0.0
  %1435 = vmatpush2.msra.mxu0 0.0
  %1436 = vmatprep.subr.mxu0 0.0
  %1437 = vmatpush2.msra.mxu0 0.0
  %1438 = vmatprep.subr.mxu0 0.0
  %1439 = vmatpush2.msra.mxu0 0.0
  %1440 = vmatprep.subr.mxu0 0.0
  %1441 = vmatpush2.msra.mxu0 0.0
  %1442 = vmatprep.subr.mxu0 0.0
  %1443 = vmatpush2.msra.mxu0 0.0
  %1444 = vmatprep.subr.mxu0 0.0
  %1445 = vmatpush2.msra.mxu0 0.0
  %1446 = vmatprep.subr.mxu0 0.0
  %1447 = vmatpush2.msra.mxu0 0.0
  %1448 = vmatprep.subr.mxu0 0.0
  %1449 = vmatpush2.msra.mxu0 0.0
  %1450 = vmatprep.subr.mxu0 0.0
  %1451 = vmatpush2.msra.mxu0 0.0
  %1452 = vmatprep.subr.mxu0 0.0
  %1453 = vmatpush2.msra.mxu0 0.0
  %1454 = vmatprep.subr.mxu0 0.0
  %1455 = vmatpush2.msra.mxu0 0.0
  %1456 = vmatprep.subr.mxu0 0.0
  %1457 = vmatpush2.msra.mxu0 0.0
  %1458 = vmatprep.mubr.f32.mxu0 0.0
  %1459 = vmatmul.mubr.f32.gmra.mxu0 %v1376
  %v1460 = vpop.f32.mrf.mxu0
  %v1461 = vadd.f32 0.0, %v1460
  %v1462 = vpop.f32.mrf.mxu0
  %1463 = vmatprep.mubr.f32.mxu0 0.0
  %1464 = vmatmul.mubr.f32.gmra.mxu0 %v1381
  %v1465 = vpop.f32.mrf.mxu0
  %v1466 = vadd.f32 0.0, %v1465
  %v1467 = vpop.f32.mrf.mxu0
  %1468 = vmatprep.mubr.f32.mxu0 0.0
  %1469 = vmatmul.mubr.f32.gmra.mxu0 %v1386
  %v1470 = vpop.f32.mrf.mxu0
  %v1471 = vadd.f32 0.0, %v1470
  %v1472 = vpop.f32.mrf.mxu0
  %1473 = vmatprep.mubr.f32.mxu0 0.0
  %1474 = vmatmul.mubr.f32.gmra.mxu0 %v1391
  %v1475 = vpop.f32.mrf.mxu0
  %v1476 = vadd.f32 0.0, %v1475
  %v1477 = vpop.f32.mrf.mxu0
  %1478 = vdwg.mxu0
  %v1479 = vadd.f32 %v1089, %v1461
  %v1480 = vadd.f32 %v1090, %v1466
  %v1481 = vadd.f32 %v1091, %v1471
  %v1482 = vadd.f32 %v1092, %v1476
  %v1483 = vld [vmem:[%s19] sm:$0xff]
  %v1485 = vsel %vm152, %v1483, 0
  %1487 = vmatprep.subr.mxu0 0.0
  %1488 = vmatpush1.msra.mxu0 0.0
  %1489 = vmatprep.subr.mxu0 0.0
  %1490 = vmatpush1.msra.mxu0 0.0
  %1491 = vmatprep.subr.mxu0 0.0
  %1492 = vmatpush1.msra.mxu0 0.0
  %1493 = vmatprep.subr.mxu0 0.0
  %1494 = vmatpush1.msra.mxu0 0.0
  %1495 = vmatprep.subr.mxu0 0.0
  %1496 = vmatpush1.msra.mxu0 0.0
  %1497 = vmatprep.subr.mxu0 0.0
  %1498 = vmatpush1.msra.mxu0 0.0
  %1499 = vmatprep.subr.mxu0 0.0
  %1500 = vmatpush1.msra.mxu0 0.0
  %1501 = vmatprep.subr.mxu0 0.0
  %1502 = vmatpush1.msra.mxu0 0.0
  %1503 = vmatprep.subr.mxu0 0.0
  %1504 = vmatpush1.msra.mxu0 0.0
  %1505 = vmatprep.subr.mxu0 0.0
  %1506 = vmatpush1.msra.mxu0 0.0
  %1507 = vmatprep.subr.mxu0 0.0
  %1508 = vmatpush1.msra.mxu0 0.0
  %1509 = vmatprep.subr.mxu0 0.0
  %1510 = vmatpush1.msra.mxu0 0.0
  %1511 = vmatprep.subr.mxu0 0.0
  %1512 = vmatpush1.msra.mxu0 %v1482
  %1513 = vmatprep.subr.mxu0 0.0
  %1514 = vmatpush1.msra.mxu0 %v1481
  %1515 = vmatprep.subr.mxu0 0.0
  %1516 = vmatpush1.msra.mxu0 %v1480
  %1517 = vmatprep.subr.mxu0 0.0
  %1518 = vmatpush1.msra.mxu0 %v1479
  %1519 = vmatprep.subr.mxu0 0.0
  %1520 = vmatpush2.msra.mxu0 0.0
  %1521 = vmatprep.subr.mxu0 0.0
  %1522 = vmatpush2.msra.mxu0 0.0
  %1523 = vmatprep.subr.mxu0 0.0
  %1524 = vmatpush2.msra.mxu0 0.0
  %1525 = vmatprep.subr.mxu0 0.0
  %1526 = vmatpush2.msra.mxu0 0.0
  %1527 = vmatprep.subr.mxu0 0.0
  %1528 = vmatpush2.msra.mxu0 0.0
  %1529 = vmatprep.subr.mxu0 0.0
  %1530 = vmatpush2.msra.mxu0 0.0
  %1531 = vmatprep.subr.mxu0 0.0
  %1532 = vmatpush2.msra.mxu0 0.0
  %1533 = vmatprep.subr.mxu0 0.0
  %1534 = vmatpush2.msra.mxu0 0.0
  %1535 = vmatprep.subr.mxu0 0.0
  %1536 = vmatpush2.msra.mxu0 0.0
  %1537 = vmatprep.subr.mxu0 0.0
  %1538 = vmatpush2.msra.mxu0 0.0
  %1539 = vmatprep.subr.mxu0 0.0
  %1540 = vmatpush2.msra.mxu0 0.0
  %1541 = vmatprep.subr.mxu0 0.0
  %1542 = vmatpush2.msra.mxu0 0.0
  %1543 = vmatprep.subr.mxu0 0.0
  %1544 = vmatpush2.msra.mxu0 0.0
  %1545 = vmatprep.subr.mxu0 0.0
  %1546 = vmatpush2.msra.mxu0 0.0
  %1547 = vmatprep.subr.mxu0 0.0
  %1548 = vmatpush2.msra.mxu0 0.0
  %1549 = vmatprep.subr.mxu0 0.0
  %1550 = vmatpush2.msra.mxu0 0.0
  %1551 = vmatprep.mubr.f32.mxu0 0.0
  %1552 = vmatmul.mubr.f32.gmra.mxu0 %v1485
  %v1553 = vpop.f32.mrf.mxu0
  %v1554 = vadd.f32 0.0, %v1553
  %v1555 = vpop.f32.mrf.mxu0
  %1556 = vdwg.mxu0
  %1557 = vmatprep.subr.mxu0 0.0
  %1558 = vmatpush1.msra.mxu0 %v517
  %1559 = vmatprep.subr.mxu0 0.0
  %1560 = vmatpush1.msra.mxu0 %v516
  %1561 = vmatprep.subr.mxu0 0.0
  %1562 = vmatpush1.msra.mxu0 %v515
  %1563 = vmatprep.subr.mxu0 0.0
  %1564 = vmatpush1.msra.mxu0 %v514
  %1565 = vmatprep.subr.mxu0 0.0
  %1566 = vmatpush1.msra.mxu0 %v513
  %1567 = vmatprep.subr.mxu0 0.0
  %1568 = vmatpush1.msra.mxu0 %v512
  %1569 = vmatprep.subr.mxu0 0.0
  %1570 = vmatpush1.msra.mxu0 %v511
  %1571 = vmatprep.subr.mxu0 0.0
  %1572 = vmatpush1.msra.mxu0 %v510
  %1573 = vmatprep.subr.mxu0 0.0
  %1574 = vmatpush1.msra.mxu0 %v509
  %1575 = vmatprep.subr.mxu0 0.0
  %1576 = vmatpush1.msra.mxu0 %v508
  %1577 = vmatprep.subr.mxu0 0.0
  %1578 = vmatpush1.msra.mxu0 %v507
  %1579 = vmatprep.subr.mxu0 0.0
  %1580 = vmatpush1.msra.mxu0 %v506
  %1581 = vmatprep.subr.mxu0 0.0
  %1582 = vmatpush1.msra.mxu0 %v505
  %1583 = vmatprep.subr.mxu0 0.0
  %1584 = vmatpush1.msra.mxu0 %v504
  %1585 = vmatprep.subr.mxu0 0.0
  %1586 = vmatpush1.msra.mxu0 %v503
  %1587 = vmatprep.subr.mxu0 0.0
  %1588 = vmatpush1.msra.mxu0 %v502
  %1589 = vmatprep.subr.mxu0 0.0
  %1590 = vmatpush2.msra.mxu0 0.0
  %1591 = vmatprep.subr.mxu0 0.0
  %1592 = vmatpush2.msra.mxu0 0.0
  %1593 = vmatprep.subr.mxu0 0.0
  %1594 = vmatpush2.msra.mxu0 0.0
  %1595 = vmatprep.subr.mxu0 0.0
  %1596 = vmatpush2.msra.mxu0 0.0
  %1597 = vmatprep.subr.mxu0 0.0
  %1598 = vmatpush2.msra.mxu0 0.0
  %1599 = vmatprep.subr.mxu0 0.0
  %1600 = vmatpush2.msra.mxu0 0.0
  %1601 = vmatprep.subr.mxu0 0.0
  %1602 = vmatpush2.msra.mxu0 0.0
  %1603 = vmatprep.subr.mxu0 0.0
  %1604 = vmatpush2.msra.mxu0 0.0
  %1605 = vmatprep.subr.mxu0 0.0
  %1606 = vmatpush2.msra.mxu0 0.0
  %1607 = vmatprep.subr.mxu0 0.0
  %1608 = vmatpush2.msra.mxu0 0.0
  %1609 = vmatprep.subr.mxu0 0.0
  %1610 = vmatpush2.msra.mxu0 0.0
  %1611 = vmatprep.subr.mxu0 0.0
  %1612 = vmatpush2.msra.mxu0 0.0
  %1613 = vmatprep.subr.mxu0 0.0
  %1614 = vmatpush2.msra.mxu0 0.0
  %1615 = vmatprep.subr.mxu0 0.0
  %1616 = vmatpush2.msra.mxu0 0.0
  %1617 = vmatprep.subr.mxu0 0.0
  %1618 = vmatpush2.msra.mxu0 0.0
  %1619 = vmatprep.subr.mxu0 0.0
  %1620 = vmatpush2.msra.mxu0 0.0
  %1621 = vmatprep.mubr.f32.mxu0 0.0
  %1622 = vmatmul.mubr.f32.gmra.mxu0 %v1554
  %v1623 = vpop.f32.mrf.mxu0
  %v1624 = vadd.f32 0.0, %v1623
  %v1625 = vpop.f32.mrf.mxu0
  %1626 = vdwg.mxu0
  %vm1627 = vcmp.gt.f32.partialorder %v1624, 0.0
  %v1628 = vmul.f32 %v1624, 0.2
  %v1629 = vsel %vm1627, %v1624, %v1628
  %v1630 = vld [vmem:[%s31] sm:$0xff]
  %v1631 = vld [vmem:[%s31 + $0x8] sm:$0xff]
  %v1632 = vld [vmem:[%s31 + $0x10] sm:$0xff]
  %v1633 = vld [vmem:[%s31 + $0x18] sm:$0xff]
  %v1634 = vld [vmem:[%s31 + $0x20] sm:$0xff]
  %v1635 = vld [vmem:[%s31 + $0x28] sm:$0xff]
  %v1636 = vld [vmem:[%s31 + $0x30] sm:$0xff]
  %v1637 = vld [vmem:[%s31 + $0x38] sm:$0xff]
  %v1638 = vld [vmem:[%s31 + $0x40] sm:$0xff]
  %v1639 = vld [vmem:[%s31 + $0x48] sm:$0xff]
  %v1640 = vld [vmem:[%s31 + $0x50] sm:$0xff]
  %v1641 = vld [vmem:[%s31 + $0x58] sm:$0xff]
  %v1642 = vld [vmem:[%s31 + $0x60] sm:$0xff]
  %v1643 = vld [vmem:[%s31 + $0x68] sm:$0xff]
  %v1644 = vld [vmem:[%s31 + $0x70] sm:$0xff]
  %v1645 = vld [vmem:[%s31 + $0x78] sm:$0xff]
  %v1646 = vld [vmem:[%s23] sm:$0xff]
  %v1647 = vld [vmem:[%s23 + $0x8] sm:$0xff]
  %v1648 = vld [vmem:[%s23 + $0x10] sm:$0xff]
  %v1649 = vld [vmem:[%s23 + $0x18] sm:$0xff]
  %v1651 = vsel %vm522, %v1646, 0
  %v1654 = vsel %vm522, %v1647, 0
  %v1657 = vsel %vm522, %v1648, 0
  %v1660 = vsel %vm522, %v1649, 0
  %1662 = vmatprep.subr.mxu0 0.0
  %1663 = vmatpush1.msra.mxu0 0.0
  %1664 = vmatprep.subr.mxu0 0.0
  %1665 = vmatpush1.msra.mxu0 0.0
  %1666 = vmatprep.subr.mxu0 0.0
  %1667 = vmatpush1.msra.mxu0 0.0
  %1668 = vmatprep.subr.mxu0 0.0
  %1669 = vmatpush1.msra.mxu0 0.0
  %1670 = vmatprep.subr.mxu0 0.0
  %1671 = vmatpush1.msra.mxu0 0.0
  %1672 = vmatprep.subr.mxu0 0.0
  %1673 = vmatpush1.msra.mxu0 0.0
  %1674 = vmatprep.subr.mxu0 0.0
  %1675 = vmatpush1.msra.mxu0 0.0
  %1676 = vmatprep.subr.mxu0 0.0
  %1677 = vmatpush1.msra.mxu0 0.0
  %1678 = vmatprep.subr.mxu0 0.0
  %1679 = vmatpush1.msra.mxu0 0.0
  %1680 = vmatprep.subr.mxu0 0.0
  %1681 = vmatpush1.msra.mxu0 0.0
  %1682 = vmatprep.subr.mxu0 0.0
  %1683 = vmatpush1.msra.mxu0 0.0
  %1684 = vmatprep.subr.mxu0 0.0
  %1685 = vmatpush1.msra.mxu0 0.0
  %1686 = vmatprep.subr.mxu0 0.0
  %1687 = vmatpush1.msra.mxu0 0.0
  %1688 = vmatprep.subr.mxu0 0.0
  %1689 = vmatpush1.msra.mxu0 0.0
  %1690 = vmatprep.subr.mxu0 0.0
  %1691 = vmatpush1.msra.mxu0 0.0
  %1692 = vmatprep.subr.mxu0 0.0
  %1693 = vmatpush1.msra.mxu0 %v501
  %1694 = vmatprep.subr.mxu0 0.0
  %1695 = vmatpush2.msra.mxu0 0.0
  %1696 = vmatprep.subr.mxu0 0.0
  %1697 = vmatpush2.msra.mxu0 0.0
  %1698 = vmatprep.subr.mxu0 0.0
  %1699 = vmatpush2.msra.mxu0 0.0
  %1700 = vmatprep.subr.mxu0 0.0
  %1701 = vmatpush2.msra.mxu0 0.0
  %1702 = vmatprep.subr.mxu0 0.0
  %1703 = vmatpush2.msra.mxu0 0.0
  %1704 = vmatprep.subr.mxu0 0.0
  %1705 = vmatpush2.msra.mxu0 0.0
  %1706 = vmatprep.subr.mxu0 0.0
  %1707 = vmatpush2.msra.mxu0 0.0
  %1708 = vmatprep.subr.mxu0 0.0
  %1709 = vmatpush2.msra.mxu0 0.0
  %1710 = vmatprep.subr.mxu0 0.0
  %1711 = vmatpush2.msra.mxu0 0.0
  %1712 = vmatprep.subr.mxu0 0.0
  %1713 = vmatpush2.msra.mxu0 0.0
  %1714 = vmatprep.subr.mxu0 0.0
  %1715 = vmatpush2.msra.mxu0 0.0
  %1716 = vmatprep.subr.mxu0 0.0
  %1717 = vmatpush2.msra.mxu0 0.0
  %1718 = vmatprep.subr.mxu0 0.0
  %1719 = vmatpush2.msra.mxu0 0.0
  %1720 = vmatprep.subr.mxu0 0.0
  %1721 = vmatpush2.msra.mxu0 0.0
  %1722 = vmatprep.subr.mxu0 0.0
  %1723 = vmatpush2.msra.mxu0 0.0
  %1724 = vmatprep.subr.mxu0 0.0
  %1725 = vmatpush2.msra.mxu0 0.0
  %1726 = vmatprep.mubr.f32.mxu0 0.0
  %1727 = vmatmul.mubr.f32.gmra.mxu0 %v1651
  %v1728 = vpop.f32.mrf.mxu0
  %v1729 = vadd.f32 0.0, %v1728
  %v1730 = vpop.f32.mrf.mxu0
  %1731 = vmatprep.mubr.f32.mxu0 0.0
  %1732 = vmatmul.mubr.f32.gmra.mxu0 %v1654
  %v1733 = vpop.f32.mrf.mxu0
  %v1734 = vadd.f32 0.0, %v1733
  %v1735 = vpop.f32.mrf.mxu0
  %1736 = vmatprep.mubr.f32.mxu0 0.0
  %1737 = vmatmul.mubr.f32.gmra.mxu0 %v1657
  %v1738 = vpop.f32.mrf.mxu0
  %v1739 = vadd.f32 0.0, %v1738
  %v1740 = vpop.f32.mrf.mxu0
  %1741 = vmatprep.mubr.f32.mxu0 0.0
  %1742 = vmatmul.mubr.f32.gmra.mxu0 %v1660
  %v1743 = vpop.f32.mrf.mxu0
  %v1744 = vadd.f32 0.0, %v1743
  %v1745 = vpop.f32.mrf.mxu0
  %1746 = vdwg.mxu0
  %1747 = vmatprep.subr.mxu0 0.0
  %1748 = vmatpush1.msra.mxu0 %v1645
  %1749 = vmatprep.subr.mxu0 0.0
  %1750 = vmatpush1.msra.mxu0 %v1644
  %1751 = vmatprep.subr.mxu0 0.0
  %1752 = vmatpush1.msra.mxu0 %v1643
  %1753 = vmatprep.subr.mxu0 0.0
  %1754 = vmatpush1.msra.mxu0 %v1642
  %1755 = vmatprep.subr.mxu0 0.0
  %1756 = vmatpush1.msra.mxu0 %v1641
  %1757 = vmatprep.subr.mxu0 0.0
  %1758 = vmatpush1.msra.mxu0 %v1640
  %1759 = vmatprep.subr.mxu0 0.0
  %1760 = vmatpush1.msra.mxu0 %v1639
  %1761 = vmatprep.subr.mxu0 0.0
  %1762 = vmatpush1.msra.mxu0 %v1638
  %1763 = vmatprep.subr.mxu0 0.0
  %1764 = vmatpush1.msra.mxu0 %v1637
  %1765 = vmatprep.subr.mxu0 0.0
  %1766 = vmatpush1.msra.mxu0 %v1636
  %1767 = vmatprep.subr.mxu0 0.0
  %1768 = vmatpush1.msra.mxu0 %v1635
  %1769 = vmatprep.subr.mxu0 0.0
  %1770 = vmatpush1.msra.mxu0 %v1634
  %1771 = vmatprep.subr.mxu0 0.0
  %1772 = vmatpush1.msra.mxu0 %v1633
  %1773 = vmatprep.subr.mxu0 0.0
  %1774 = vmatpush1.msra.mxu0 %v1632
  %1775 = vmatprep.subr.mxu0 0.0
  %1776 = vmatpush1.msra.mxu0 %v1631
  %1777 = vmatprep.subr.mxu0 0.0
  %1778 = vmatpush1.msra.mxu0 %v1630
  %1779 = vmatprep.subr.mxu0 0.0
  %1780 = vmatpush2.msra.mxu0 0.0
  %1781 = vmatprep.subr.mxu0 0.0
  %1782 = vmatpush2.msra.mxu0 0.0
  %1783 = vmatprep.subr.mxu0 0.0
  %1784 = vmatpush2.msra.mxu0 0.0
  %1785 = vmatprep.subr.mxu0 0.0
  %1786 = vmatpush2.msra.mxu0 0.0
  %1787 = vmatprep.subr.mxu0 0.0
  %1788 = vmatpush2.msra.mxu0 0.0
  %1789 = vmatprep.subr.mxu0 0.0
  %1790 = vmatpush2.msra.mxu0 0.0
  %1791 = vmatprep.subr.mxu0 0.0
  %1792 = vmatpush2.msra.mxu0 0.0
  %1793 = vmatprep.subr.mxu0 0.0
  %1794 = vmatpush2.msra.mxu0 0.0
  %1795 = vmatprep.subr.mxu0 0.0
  %1796 = vmatpush2.msra.mxu0 0.0
  %1797 = vmatprep.subr.mxu0 0.0
  %1798 = vmatpush2.msra.mxu0 0.0
  %1799 = vmatprep.subr.mxu0 0.0
  %1800 = vmatpush2.msra.mxu0 0.0
  %1801 = vmatprep.subr.mxu0 0.0
  %1802 = vmatpush2.msra.mxu0 0.0
  %1803 = vmatprep.subr.mxu0 0.0
  %1804 = vmatpush2.msra.mxu0 0.0
  %1805 = vmatprep.subr.mxu0 0.0
  %1806 = vmatpush2.msra.mxu0 0.0
  %1807 = vmatprep.subr.mxu0 0.0
  %1808 = vmatpush2.msra.mxu0 0.0
  %1809 = vmatprep.subr.mxu0 0.0
  %1810 = vmatpush2.msra.mxu0 0.0
  %1811 = vmatprep.mubr.f32.mxu0 0.0
  %1812 = vmatmul.mubr.f32.gmra.mxu0 %v1729
  %v1813 = vpop.f32.mrf.mxu0
  %v1814 = vadd.f32 0.0, %v1813
  %v1815 = vpop.f32.mrf.mxu0
  %1816 = vmatprep.mubr.f32.mxu0 0.0
  %1817 = vmatmul.mubr.f32.gmra.mxu0 %v1734
  %v1818 = vpop.f32.mrf.mxu0
  %v1819 = vadd.f32 0.0, %v1818
  %v1820 = vpop.f32.mrf.mxu0
  %1821 = vmatprep.mubr.f32.mxu0 0.0
  %1822 = vmatmul.mubr.f32.gmra.mxu0 %v1739
  %v1823 = vpop.f32.mrf.mxu0
  %v1824 = vadd.f32 0.0, %v1823
  %v1825 = vpop.f32.mrf.mxu0
  %1826 = vmatprep.mubr.f32.mxu0 0.0
  %1827 = vmatmul.mubr.f32.gmra.mxu0 %v1744
  %v1828 = vpop.f32.mrf.mxu0
  %v1829 = vadd.f32 0.0, %v1828
  %v1830 = vpop.f32.mrf.mxu0
  %1831 = vdwg.mxu0
  %v1832 = vld [vmem:[%s25] sm:$0xff]
  %v1833 = vld [vmem:[%s25 + $0x8] sm:$0xff]
  %v1834 = vld [vmem:[%s25 + $0x10] sm:$0xff]
  %v1835 = vld [vmem:[%s25 + $0x18] sm:$0xff]
  %v1837 = vsel %vm152, %v1832, 0
  %v1840 = vsel %vm152, %v1833, 0
  %v1843 = vsel %vm152, %v1834, 0
  %v1846 = vsel %vm152, %v1835, 0
  %1848 = vmatprep.subr.mxu0 0.0
  %1849 = vmatpush1.msra.mxu0 0.0
  %1850 = vmatprep.subr.mxu0 0.0
  %1851 = vmatpush1.msra.mxu0 0.0
  %1852 = vmatprep.subr.mxu0 0.0
  %1853 = vmatpush1.msra.mxu0 0.0
  %1854 = vmatprep.subr.mxu0 0.0
  %1855 = vmatpush1.msra.mxu0 0.0
  %1856 = vmatprep.subr.mxu0 0.0
  %1857 = vmatpush1.msra.mxu0 0.0
  %1858 = vmatprep.subr.mxu0 0.0
  %1859 = vmatpush1.msra.mxu0 0.0
  %1860 = vmatprep.subr.mxu0 0.0
  %1861 = vmatpush1.msra.mxu0 0.0
  %1862 = vmatprep.subr.mxu0 0.0
  %1863 = vmatpush1.msra.mxu0 0.0
  %1864 = vmatprep.subr.mxu0 0.0
  %1865 = vmatpush1.msra.mxu0 0.0
  %1866 = vmatprep.subr.mxu0 0.0
  %1867 = vmatpush1.msra.mxu0 0.0
  %1868 = vmatprep.subr.mxu0 0.0
  %1869 = vmatpush1.msra.mxu0 0.0
  %1870 = vmatprep.subr.mxu0 0.0
  %1871 = vmatpush1.msra.mxu0 0.0
  %1872 = vmatprep.subr.mxu0 0.0
  %1873 = vmatpush1.msra.mxu0 %v1829
  %1874 = vmatprep.subr.mxu0 0.0
  %1875 = vmatpush1.msra.mxu0 %v1824
  %1876 = vmatprep.subr.mxu0 0.0
  %1877 = vmatpush1.msra.mxu0 %v1819
  %1878 = vmatprep.subr.mxu0 0.0
  %1879 = vmatpush1.msra.mxu0 %v1814
  %1880 = vmatprep.subr.mxu0 0.0
  %1881 = vmatpush2.msra.mxu0 0.0
  %1882 = vmatprep.subr.mxu0 0.0
  %1883 = vmatpush2.msra.mxu0 0.0
  %1884 = vmatprep.subr.mxu0 0.0
  %1885 = vmatpush2.msra.mxu0 0.0
  %1886 = vmatprep.subr.mxu0 0.0
  %1887 = vmatpush2.msra.mxu0 0.0
  %1888 = vmatprep.subr.mxu0 0.0
  %1889 = vmatpush2.msra.mxu0 0.0
  %1890 = vmatprep.subr.mxu0 0.0
  %1891 = vmatpush2.msra.mxu0 0.0
  %1892 = vmatprep.subr.mxu0 0.0
  %1893 = vmatpush2.msra.mxu0 0.0
  %1894 = vmatprep.subr.mxu0 0.0
  %1895 = vmatpush2.msra.mxu0 0.0
  %1896 = vmatprep.subr.mxu0 0.0
  %1897 = vmatpush2.msra.mxu0 0.0
  %1898 = vmatprep.subr.mxu0 0.0
  %1899 = vmatpush2.msra.mxu0 0.0
  %1900 = vmatprep.subr.mxu0 0.0
  %1901 = vmatpush2.msra.mxu0 0.0
  %1902 = vmatprep.subr.mxu0 0.0
  %1903 = vmatpush2.msra.mxu0 0.0
  %1904 = vmatprep.subr.mxu0 0.0
  %1905 = vmatpush2.msra.mxu0 0.0
  %1906 = vmatprep.subr.mxu0 0.0
  %1907 = vmatpush2.msra.mxu0 0.0
  %1908 = vmatprep.subr.mxu0 0.0
  %1909 = vmatpush2.msra.mxu0 0.0
  %1910 = vmatprep.subr.mxu0 0.0
  %1911 = vmatpush2.msra.mxu0 0.0
  %1912 = vmatprep.mubr.f32.mxu0 0.0
  %1913 = vmatmul.mubr.f32.gmra.mxu0 %v1837
  %v1914 = vpop.f32.mrf.mxu0
  %v1915 = vadd.f32 0.0, %v1914
  %v1916 = vpop.f32.mrf.mxu0
  %1917 = vmatprep.mubr.f32.mxu0 0.0
  %1918 = vmatmul.mubr.f32.gmra.mxu0 %v1840
  %v1919 = vpop.f32.mrf.mxu0
  %v1920 = vadd.f32 0.0, %v1919
  %v1921 = vpop.f32.mrf.mxu0
  %1922 = vmatprep.mubr.f32.mxu0 0.0
  %1923 = vmatmul.mubr.f32.gmra.mxu0 %v1843
  %v1924 = vpop.f32.mrf.mxu0
  %v1925 = vadd.f32 0.0, %v1924
  %v1926 = vpop.f32.mrf.mxu0
  %1927 = vmatprep.mubr.f32.mxu0 0.0
  %1928 = vmatmul.mubr.f32.gmra.mxu0 %v1846
  %v1929 = vpop.f32.mrf.mxu0
  %v1930 = vadd.f32 0.0, %v1929
  %v1931 = vpop.f32.mrf.mxu0
  %1932 = vdwg.mxu0
  %1933 = vmatprep.subr.mxu0 0.0
  %1934 = vmatpush1.msra.mxu0 %v1645
  %1935 = vmatprep.subr.mxu0 0.0
  %1936 = vmatpush1.msra.mxu0 %v1644
  %1937 = vmatprep.subr.mxu0 0.0
  %1938 = vmatpush1.msra.mxu0 %v1643
  %1939 = vmatprep.subr.mxu0 0.0
  %1940 = vmatpush1.msra.mxu0 %v1642
  %1941 = vmatprep.subr.mxu0 0.0
  %1942 = vmatpush1.msra.mxu0 %v1641
  %1943 = vmatprep.subr.mxu0 0.0
  %1944 = vmatpush1.msra.mxu0 %v1640
  %1945 = vmatprep.subr.mxu0 0.0
  %1946 = vmatpush1.msra.mxu0 %v1639
  %1947 = vmatprep.subr.mxu0 0.0
  %1948 = vmatpush1.msra.mxu0 %v1638
  %1949 = vmatprep.subr.mxu0 0.0
  %1950 = vmatpush1.msra.mxu0 %v1637
  %1951 = vmatprep.subr.mxu0 0.0
  %1952 = vmatpush1.msra.mxu0 %v1636
  %1953 = vmatprep.subr.mxu0 0.0
  %1954 = vmatpush1.msra.mxu0 %v1635
  %1955 = vmatprep.subr.mxu0 0.0
  %1956 = vmatpush1.msra.mxu0 %v1634
  %1957 = vmatprep.subr.mxu0 0.0
  %1958 = vmatpush1.msra.mxu0 %v1633
  %1959 = vmatprep.subr.mxu0 0.0
  %1960 = vmatpush1.msra.mxu0 %v1632
  %1961 = vmatprep.subr.mxu0 0.0
  %1962 = vmatpush1.msra.mxu0 %v1631
  %1963 = vmatprep.subr.mxu0 0.0
  %1964 = vmatpush1.msra.mxu0 %v1630
  %1965 = vmatprep.subr.mxu0 0.0
  %1966 = vmatpush2.msra.mxu0 0.0
  %1967 = vmatprep.subr.mxu0 0.0
  %1968 = vmatpush2.msra.mxu0 0.0
  %1969 = vmatprep.subr.mxu0 0.0
  %1970 = vmatpush2.msra.mxu0 0.0
  %1971 = vmatprep.subr.mxu0 0.0
  %1972 = vmatpush2.msra.mxu0 0.0
  %1973 = vmatprep.subr.mxu0 0.0
  %1974 = vmatpush2.msra.mxu0 0.0
  %1975 = vmatprep.subr.mxu0 0.0
  %1976 = vmatpush2.msra.mxu0 0.0
  %1977 = vmatprep.subr.mxu0 0.0
  %1978 = vmatpush2.msra.mxu0 0.0
  %1979 = vmatprep.subr.mxu0 0.0
  %1980 = vmatpush2.msra.mxu0 0.0
  %1981 = vmatprep.subr.mxu0 0.0
  %1982 = vmatpush2.msra.mxu0 0.0
  %1983 = vmatprep.subr.mxu0 0.0
  %1984 = vmatpush2.msra.mxu0 0.0
  %1985 = vmatprep.subr.mxu0 0.0
  %1986 = vmatpush2.msra.mxu0 0.0
  %1987 = vmatprep.subr.mxu0 0.0
  %1988 = vmatpush2.msra.mxu0 0.0
  %1989 = vmatprep.subr.mxu0 0.0
  %1990 = vmatpush2.msra.mxu0 0.0
  %1991 = vmatprep.subr.mxu0 0.0
  %1992 = vmatpush2.msra.mxu0 0.0
  %1993 = vmatprep.subr.mxu0 0.0
  %1994 = vmatpush2.msra.mxu0 0.0
  %1995 = vmatprep.subr.mxu0 0.0
  %1996 = vmatpush2.msra.mxu0 0.0
  %1997 = vmatprep.mubr.f32.mxu0 0.0
  %1998 = vmatmul.mubr.f32.gmra.mxu0 %v1915
  %v1999 = vpop.f32.mrf.mxu0
  %v2000 = vadd.f32 0.0, %v1999
  %v2001 = vpop.f32.mrf.mxu0
  %2002 = vmatprep.mubr.f32.mxu0 0.0
  %2003 = vmatmul.mubr.f32.gmra.mxu0 %v1920
  %v2004 = vpop.f32.mrf.mxu0
  %v2005 = vadd.f32 0.0, %v2004
  %v2006 = vpop.f32.mrf.mxu0
  %2007 = vmatprep.mubr.f32.mxu0 0.0
  %2008 = vmatmul.mubr.f32.gmra.mxu0 %v1925
  %v2009 = vpop.f32.mrf.mxu0
  %v2010 = vadd.f32 0.0, %v2009
  %v2011 = vpop.f32.mrf.mxu0
  %2012 = vmatprep.mubr.f32.mxu0 0.0
  %2013 = vmatmul.mubr.f32.gmra.mxu0 %v1930
  %v2014 = vpop.f32.mrf.mxu0
  %v2015 = vadd.f32 0.0, %v2014
  %v2016 = vpop.f32.mrf.mxu0
  %2017 = vdwg.mxu0
  %vm2018 = vcmp.gt.f32.partialorder %v2000, 0.0
  %vm2019 = vcmp.gt.f32.partialorder %v2005, 0.0
  %vm2020 = vcmp.gt.f32.partialorder %v2010, 0.0
  %vm2021 = vcmp.gt.f32.partialorder %v2015, 0.0
  %v2022 = vmul.f32 %v2000, 0.2
  %v2023 = vmul.f32 %v2005, 0.2
  %v2024 = vmul.f32 %v2010, 0.2
  %v2025 = vmul.f32 %v2015, 0.2
  %v2026 = vsel %vm2018, %v2000, %v2022
  %v2027 = vsel %vm2019, %v2005, %v2023
  %v2028 = vsel %vm2020, %v2010, %v2024
  %v2029 = vsel %vm2021, %v2015, %v2025
  %v2030 = vld [vmem:[%s27] sm:$0xff]
  %v2031 = vld [vmem:[%s27 + $0x8] sm:$0xff]
  %v2032 = vld [vmem:[%s27 + $0x10] sm:$0xff]
  %v2033 = vld [vmem:[%s27 + $0x18] sm:$0xff]
  %v2035 = vsel %vm152, %v2030, 0
  %v2038 = vsel %vm152, %v2031, 0
  %v2041 = vsel %vm152, %v2032, 0
  %v2044 = vsel %vm152, %v2033, 0
  %2046 = vmatprep.subr.mxu0 0.0
  %2047 = vmatpush1.msra.mxu0 0.0
  %2048 = vmatprep.subr.mxu0 0.0
  %2049 = vmatpush1.msra.mxu0 0.0
  %2050 = vmatprep.subr.mxu0 0.0
  %2051 = vmatpush1.msra.mxu0 0.0
  %2052 = vmatprep.subr.mxu0 0.0
  %2053 = vmatpush1.msra.mxu0 0.0
  %2054 = vmatprep.subr.mxu0 0.0
  %2055 = vmatpush1.msra.mxu0 0.0
  %2056 = vmatprep.subr.mxu0 0.0
  %2057 = vmatpush1.msra.mxu0 0.0
  %2058 = vmatprep.subr.mxu0 0.0
  %2059 = vmatpush1.msra.mxu0 0.0
  %2060 = vmatprep.subr.mxu0 0.0
  %2061 = vmatpush1.msra.mxu0 0.0
  %2062 = vmatprep.subr.mxu0 0.0
  %2063 = vmatpush1.msra.mxu0 0.0
  %2064 = vmatprep.subr.mxu0 0.0
  %2065 = vmatpush1.msra.mxu0 0.0
  %2066 = vmatprep.subr.mxu0 0.0
  %2067 = vmatpush1.msra.mxu0 0.0
  %2068 = vmatprep.subr.mxu0 0.0
  %2069 = vmatpush1.msra.mxu0 0.0
  %2070 = vmatprep.subr.mxu0 0.0
  %2071 = vmatpush1.msra.mxu0 %v2029
  %2072 = vmatprep.subr.mxu0 0.0
  %2073 = vmatpush1.msra.mxu0 %v2028
  %2074 = vmatprep.subr.mxu0 0.0
  %2075 = vmatpush1.msra.mxu0 %v2027
  %2076 = vmatprep.subr.mxu0 0.0
  %2077 = vmatpush1.msra.mxu0 %v2026
  %2078 = vmatprep.subr.mxu0 0.0
  %2079 = vmatpush2.msra.mxu0 0.0
  %2080 = vmatprep.subr.mxu0 0.0
  %2081 = vmatpush2.msra.mxu0 0.0
  %2082 = vmatprep.subr.mxu0 0.0
  %2083 = vmatpush2.msra.mxu0 0.0
  %2084 = vmatprep.subr.mxu0 0.0
  %2085 = vmatpush2.msra.mxu0 0.0
  %2086 = vmatprep.subr.mxu0 0.0
  %2087 = vmatpush2.msra.mxu0 0.0
  %2088 = vmatprep.subr.mxu0 0.0
  %2089 = vmatpush2.msra.mxu0 0.0
  %2090 = vmatprep.subr.mxu0 0.0
  %2091 = vmatpush2.msra.mxu0 0.0
  %2092 = vmatprep.subr.mxu0 0.0
  %2093 = vmatpush2.msra.mxu0 0.0
  %2094 = vmatprep.subr.mxu0 0.0
  %2095 = vmatpush2.msra.mxu0 0.0
  %2096 = vmatprep.subr.mxu0 0.0
  %2097 = vmatpush2.msra.mxu0 0.0
  %2098 = vmatprep.subr.mxu0 0.0
  %2099 = vmatpush2.msra.mxu0 0.0
  %2100 = vmatprep.subr.mxu0 0.0
  %2101 = vmatpush2.msra.mxu0 0.0
  %2102 = vmatprep.subr.mxu0 0.0
  %2103 = vmatpush2.msra.mxu0 0.0
  %2104 = vmatprep.subr.mxu0 0.0
  %2105 = vmatpush2.msra.mxu0 0.0
  %2106 = vmatprep.subr.mxu0 0.0
  %2107 = vmatpush2.msra.mxu0 0.0
  %2108 = vmatprep.subr.mxu0 0.0
  %2109 = vmatpush2.msra.mxu0 0.0
  %2110 = vmatprep.mubr.f32.mxu0 0.0
  %2111 = vmatmul.mubr.f32.gmra.mxu0 %v2035
  %v2112 = vpop.f32.mrf.mxu0
  %v2113 = vadd.f32 0.0, %v2112
  %v2114 = vpop.f32.mrf.mxu0
  %2115 = vmatprep.mubr.f32.mxu0 0.0
  %2116 = vmatmul.mubr.f32.gmra.mxu0 %v2038
  %v2117 = vpop.f32.mrf.mxu0
  %v2118 = vadd.f32 0.0, %v2117
  %v2119 = vpop.f32.mrf.mxu0
  %2120 = vmatprep.mubr.f32.mxu0 0.0
  %2121 = vmatmul.mubr.f32.gmra.mxu0 %v2041
  %v2122 = vpop.f32.mrf.mxu0
  %v2123 = vadd.f32 0.0, %v2122
  %v2124 = vpop.f32.mrf.mxu0
  %2125 = vmatprep.mubr.f32.mxu0 0.0
  %2126 = vmatmul.mubr.f32.gmra.mxu0 %v2044
  %v2127 = vpop.f32.mrf.mxu0
  %v2128 = vadd.f32 0.0, %v2127
  %v2129 = vpop.f32.mrf.mxu0
  %2130 = vdwg.mxu0
  %2131 = vmatprep.subr.mxu0 0.0
  %2132 = vmatpush1.msra.mxu0 %v1645
  %2133 = vmatprep.subr.mxu0 0.0
  %2134 = vmatpush1.msra.mxu0 %v1644
  %2135 = vmatprep.subr.mxu0 0.0
  %2136 = vmatpush1.msra.mxu0 %v1643
  %2137 = vmatprep.subr.mxu0 0.0
  %2138 = vmatpush1.msra.mxu0 %v1642
  %2139 = vmatprep.subr.mxu0 0.0
  %2140 = vmatpush1.msra.mxu0 %v1641
  %2141 = vmatprep.subr.mxu0 0.0
  %2142 = vmatpush1.msra.mxu0 %v1640
  %2143 = vmatprep.subr.mxu0 0.0
  %2144 = vmatpush1.msra.mxu0 %v1639
  %2145 = vmatprep.subr.mxu0 0.0
  %2146 = vmatpush1.msra.mxu0 %v1638
  %2147 = vmatprep.subr.mxu0 0.0
  %2148 = vmatpush1.msra.mxu0 %v1637
  %2149 = vmatprep.subr.mxu0 0.0
  %2150 = vmatpush1.msra.mxu0 %v1636
  %2151 = vmatprep.subr.mxu0 0.0
  %2152 = vmatpush1.msra.mxu0 %v1635
  %2153 = vmatprep.subr.mxu0 0.0
  %2154 = vmatpush1.msra.mxu0 %v1634
  %2155 = vmatprep.subr.mxu0 0.0
  %2156 = vmatpush1.msra.mxu0 %v1633
  %2157 = vmatprep.subr.mxu0 0.0
  %2158 = vmatpush1.msra.mxu0 %v1632
  %2159 = vmatprep.subr.mxu0 0.0
  %2160 = vmatpush1.msra.mxu0 %v1631
  %2161 = vmatprep.subr.mxu0 0.0
  %2162 = vmatpush1.msra.mxu0 %v1630
  %2163 = vmatprep.subr.mxu0 0.0
  %2164 = vmatpush2.msra.mxu0 0.0
  %2165 = vmatprep.subr.mxu0 0.0
  %2166 = vmatpush2.msra.mxu0 0.0
  %2167 = vmatprep.subr.mxu0 0.0
  %2168 = vmatpush2.msra.mxu0 0.0
  %2169 = vmatprep.subr.mxu0 0.0
  %2170 = vmatpush2.msra.mxu0 0.0
  %2171 = vmatprep.subr.mxu0 0.0
  %2172 = vmatpush2.msra.mxu0 0.0
  %2173 = vmatprep.subr.mxu0 0.0
  %2174 = vmatpush2.msra.mxu0 0.0
  %2175 = vmatprep.subr.mxu0 0.0
  %2176 = vmatpush2.msra.mxu0 0.0
  %2177 = vmatprep.subr.mxu0 0.0
  %2178 = vmatpush2.msra.mxu0 0.0
  %2179 = vmatprep.subr.mxu0 0.0
  %2180 = vmatpush2.msra.mxu0 0.0
  %2181 = vmatprep.subr.mxu0 0.0
  %2182 = vmatpush2.msra.mxu0 0.0
  %2183 = vmatprep.subr.mxu0 0.0
  %2184 = vmatpush2.msra.mxu0 0.0
  %2185 = vmatprep.subr.mxu0 0.0
  %2186 = vmatpush2.msra.mxu0 0.0
  %2187 = vmatprep.subr.mxu0 0.0
  %2188 = vmatpush2.msra.mxu0 0.0
  %2189 = vmatprep.subr.mxu0 0.0
  %2190 = vmatpush2.msra.mxu0 0.0
  %2191 = vmatprep.subr.mxu0 0.0
  %2192 = vmatpush2.msra.mxu0 0.0
  %2193 = vmatprep.subr.mxu0 0.0
  %2194 = vmatpush2.msra.mxu0 0.0
  %2195 = vmatprep.mubr.f32.mxu0 0.0
  %2196 = vmatmul.mubr.f32.gmra.mxu0 %v2113
  %v2197 = vpop.f32.mrf.mxu0
  %v2198 = vadd.f32 0.0, %v2197
  %v2199 = vpop.f32.mrf.mxu0
  %2200 = vmatprep.mubr.f32.mxu0 0.0
  %2201 = vmatmul.mubr.f32.gmra.mxu0 %v2118
  %v2202 = vpop.f32.mrf.mxu0
  %v2203 = vadd.f32 0.0, %v2202
  %v2204 = vpop.f32.mrf.mxu0
  %2205 = vmatprep.mubr.f32.mxu0 0.0
  %2206 = vmatmul.mubr.f32.gmra.mxu0 %v2123
  %v2207 = vpop.f32.mrf.mxu0
  %v2208 = vadd.f32 0.0, %v2207
  %v2209 = vpop.f32.mrf.mxu0
  %2210 = vmatprep.mubr.f32.mxu0 0.0
  %2211 = vmatmul.mubr.f32.gmra.mxu0 %v2128
  %v2212 = vpop.f32.mrf.mxu0
  %v2213 = vadd.f32 0.0, %v2212
  %v2214 = vpop.f32.mrf.mxu0
  %2215 = vdwg.mxu0
  %v2216 = vadd.f32 %v1814, %v2198
  %v2217 = vadd.f32 %v1819, %v2203
  %v2218 = vadd.f32 %v1824, %v2208
  %v2219 = vadd.f32 %v1829, %v2213
  %s2220 = scalar_lea.vmem %s25, 32
  %v2221 = vld [vmem:[%s2220] sm:$0xff]
  %v2222 = vld [vmem:[%s2220 + $0x8] sm:$0xff]
  %v2223 = vld [vmem:[%s2220 + $0x10] sm:$0xff]
  %v2224 = vld [vmem:[%s2220 + $0x18] sm:$0xff]
  %v2226 = vsel %vm152, %v2221, 0
  %v2229 = vsel %vm152, %v2222, 0
  %v2232 = vsel %vm152, %v2223, 0
  %v2235 = vsel %vm152, %v2224, 0
  %2237 = vmatprep.subr.mxu0 0.0
  %2238 = vmatpush1.msra.mxu0 0.0
  %2239 = vmatprep.subr.mxu0 0.0
  %2240 = vmatpush1.msra.mxu0 0.0
  %2241 = vmatprep.subr.mxu0 0.0
  %2242 = vmatpush1.msra.mxu0 0.0
  %2243 = vmatprep.subr.mxu0 0.0
  %2244 = vmatpush1.msra.mxu0 0.0
  %2245 = vmatprep.subr.mxu0 0.0
  %2246 = vmatpush1.msra.mxu0 0.0
  %2247 = vmatprep.subr.mxu0 0.0
  %2248 = vmatpush1.msra.mxu0 0.0
  %2249 = vmatprep.subr.mxu0 0.0
  %2250 = vmatpush1.msra.mxu0 0.0
  %2251 = vmatprep.subr.mxu0 0.0
  %2252 = vmatpush1.msra.mxu0 0.0
  %2253 = vmatprep.subr.mxu0 0.0
  %2254 = vmatpush1.msra.mxu0 0.0
  %2255 = vmatprep.subr.mxu0 0.0
  %2256 = vmatpush1.msra.mxu0 0.0
  %2257 = vmatprep.subr.mxu0 0.0
  %2258 = vmatpush1.msra.mxu0 0.0
  %2259 = vmatprep.subr.mxu0 0.0
  %2260 = vmatpush1.msra.mxu0 0.0
  %2261 = vmatprep.subr.mxu0 0.0
  %2262 = vmatpush1.msra.mxu0 %v2219
  %2263 = vmatprep.subr.mxu0 0.0
  %2264 = vmatpush1.msra.mxu0 %v2218
  %2265 = vmatprep.subr.mxu0 0.0
  %2266 = vmatpush1.msra.mxu0 %v2217
  %2267 = vmatprep.subr.mxu0 0.0
  %2268 = vmatpush1.msra.mxu0 %v2216
  %2269 = vmatprep.subr.mxu0 0.0
  %2270 = vmatpush2.msra.mxu0 0.0
  %2271 = vmatprep.subr.mxu0 0.0
  %2272 = vmatpush2.msra.mxu0 0.0
  %2273 = vmatprep.subr.mxu0 0.0
  %2274 = vmatpush2.msra.mxu0 0.0
  %2275 = vmatprep.subr.mxu0 0.0
  %2276 = vmatpush2.msra.mxu0 0.0
  %2277 = vmatprep.subr.mxu0 0.0
  %2278 = vmatpush2.msra.mxu0 0.0
  %2279 = vmatprep.subr.mxu0 0.0
  %2280 = vmatpush2.msra.mxu0 0.0
  %2281 = vmatprep.subr.mxu0 0.0
  %2282 = vmatpush2.msra.mxu0 0.0
  %2283 = vmatprep.subr.mxu0 0.0
  %2284 = vmatpush2.msra.mxu0 0.0
  %2285 = vmatprep.subr.mxu0 0.0
  %2286 = vmatpush2.msra.mxu0 0.0
  %2287 = vmatprep.subr.mxu0 0.0
  %2288 = vmatpush2.msra.mxu0 0.0
  %2289 = vmatprep.subr.mxu0 0.0
  %2290 = vmatpush2.msra.mxu0 0.0
  %2291 = vmatprep.subr.mxu0 0.0
  %2292 = vmatpush2.msra.mxu0 0.0
  %2293 = vmatprep.subr.mxu0 0.0
  %2294 = vmatpush2.msra.mxu0 0.0
  %2295 = vmatprep.subr.mxu0 0.0
  %2296 = vmatpush2.msra.mxu0 0.0
  %2297 = vmatprep.subr.mxu0 0.0
  %2298 = vmatpush2.msra.mxu0 0.0
  %2299 = vmatprep.subr.mxu0 0.0
  %2300 = vmatpush2.msra.mxu0 0.0
  %2301 = vmatprep.mubr.f32.mxu0 0.0
  %2302 = vmatmul.mubr.f32.gmra.mxu0 %v2226
  %v2303 = vpop.f32.mrf.mxu0
  %v2304 = vadd.f32 0.0, %v2303
  %v2305 = vpop.f32.mrf.mxu0
  %2306 = vmatprep.mubr.f32.mxu0 0.0
  %2307 = vmatmul.mubr.f32.gmra.mxu0 %v2229
  %v2308 = vpop.f32.mrf.mxu0
  %v2309 = vadd.f32 0.0, %v2308
  %v2310 = vpop.f32.mrf.mxu0
  %2311 = vmatprep.mubr.f32.mxu0 0.0
  %2312 = vmatmul.mubr.f32.gmra.mxu0 %v2232
  %v2313 = vpop.f32.mrf.mxu0
  %v2314 = vadd.f32 0.0, %v2313
  %v2315 = vpop.f32.mrf.mxu0
  %2316 = vmatprep.mubr.f32.mxu0 0.0
  %2317 = vmatmul.mubr.f32.gmra.mxu0 %v2235
  %v2318 = vpop.f32.mrf.mxu0
  %v2319 = vadd.f32 0.0, %v2318
  %v2320 = vpop.f32.mrf.mxu0
  %2321 = vdwg.mxu0
  %2322 = vmatprep.subr.mxu0 0.0
  %2323 = vmatpush1.msra.mxu0 %v1645
  %2324 = vmatprep.subr.mxu0 0.0
  %2325 = vmatpush1.msra.mxu0 %v1644
  %2326 = vmatprep.subr.mxu0 0.0
  %2327 = vmatpush1.msra.mxu0 %v1643
  %2328 = vmatprep.subr.mxu0 0.0
  %2329 = vmatpush1.msra.mxu0 %v1642
  %2330 = vmatprep.subr.mxu0 0.0
  %2331 = vmatpush1.msra.mxu0 %v1641
  %2332 = vmatprep.subr.mxu0 0.0
  %2333 = vmatpush1.msra.mxu0 %v1640
  %2334 = vmatprep.subr.mxu0 0.0
  %2335 = vmatpush1.msra.mxu0 %v1639
  %2336 = vmatprep.subr.mxu0 0.0
  %2337 = vmatpush1.msra.mxu0 %v1638
  %2338 = vmatprep.subr.mxu0 0.0
  %2339 = vmatpush1.msra.mxu0 %v1637
  %2340 = vmatprep.subr.mxu0 0.0
  %2341 = vmatpush1.msra.mxu0 %v1636
  %2342 = vmatprep.subr.mxu0 0.0
  %2343 = vmatpush1.msra.mxu0 %v1635
  %2344 = vmatprep.subr.mxu0 0.0
  %2345 = vmatpush1.msra.mxu0 %v1634
  %2346 = vmatprep.subr.mxu0 0.0
  %2347 = vmatpush1.msra.mxu0 %v1633
  %2348 = vmatprep.subr.mxu0 0.0
  %2349 = vmatpush1.msra.mxu0 %v1632
  %2350 = vmatprep.subr.mxu0 0.0
  %2351 = vmatpush1.msra.mxu0 %v1631
  %2352 = vmatprep.subr.mxu0 0.0
  %2353 = vmatpush1.msra.mxu0 %v1630
  %2354 = vmatprep.subr.mxu0 0.0
  %2355 = vmatpush2.msra.mxu0 0.0
  %2356 = vmatprep.subr.mxu0 0.0
  %2357 = vmatpush2.msra.mxu0 0.0
  %2358 = vmatprep.subr.mxu0 0.0
  %2359 = vmatpush2.msra.mxu0 0.0
  %2360 = vmatprep.subr.mxu0 0.0
  %2361 = vmatpush2.msra.mxu0 0.0
  %2362 = vmatprep.subr.mxu0 0.0
  %2363 = vmatpush2.msra.mxu0 0.0
  %2364 = vmatprep.subr.mxu0 0.0
  %2365 = vmatpush2.msra.mxu0 0.0
  %2366 = vmatprep.subr.mxu0 0.0
  %2367 = vmatpush2.msra.mxu0 0.0
  %2368 = vmatprep.subr.mxu0 0.0
  %2369 = vmatpush2.msra.mxu0 0.0
  %2370 = vmatprep.subr.mxu0 0.0
  %2371 = vmatpush2.msra.mxu0 0.0
  %2372 = vmatprep.subr.mxu0 0.0
  %2373 = vmatpush2.msra.mxu0 0.0
  %2374 = vmatprep.subr.mxu0 0.0
  %2375 = vmatpush2.msra.mxu0 0.0
  %2376 = vmatprep.subr.mxu0 0.0
  %2377 = vmatpush2.msra.mxu0 0.0
  %2378 = vmatprep.subr.mxu0 0.0
  %2379 = vmatpush2.msra.mxu0 0.0
  %2380 = vmatprep.subr.mxu0 0.0
  %2381 = vmatpush2.msra.mxu0 0.0
  %2382 = vmatprep.subr.mxu0 0.0
  %2383 = vmatpush2.msra.mxu0 0.0
  %2384 = vmatprep.subr.mxu0 0.0
  %2385 = vmatpush2.msra.mxu0 0.0
  %2386 = vmatprep.mubr.f32.mxu0 0.0
  %2387 = vmatmul.mubr.f32.gmra.mxu0 %v2304
  %v2388 = vpop.f32.mrf.mxu0
  %v2389 = vadd.f32 0.0, %v2388
  %v2390 = vpop.f32.mrf.mxu0
  %2391 = vmatprep.mubr.f32.mxu0 0.0
  %2392 = vmatmul.mubr.f32.gmra.mxu0 %v2309
  %v2393 = vpop.f32.mrf.mxu0
  %v2394 = vadd.f32 0.0, %v2393
  %v2395 = vpop.f32.mrf.mxu0
  %2396 = vmatprep.mubr.f32.mxu0 0.0
  %2397 = vmatmul.mubr.f32.gmra.mxu0 %v2314
  %v2398 = vpop.f32.mrf.mxu0
  %v2399 = vadd.f32 0.0, %v2398
  %v2400 = vpop.f32.mrf.mxu0
  %2401 = vmatprep.mubr.f32.mxu0 0.0
  %2402 = vmatmul.mubr.f32.gmra.mxu0 %v2319
  %v2403 = vpop.f32.mrf.mxu0
  %v2404 = vadd.f32 0.0, %v2403
  %v2405 = vpop.f32.mrf.mxu0
  %2406 = vdwg.mxu0
  %vm2407 = vcmp.gt.f32.partialorder %v2389, 0.0
  %vm2408 = vcmp.gt.f32.partialorder %v2394, 0.0
  %vm2409 = vcmp.gt.f32.partialorder %v2399, 0.0
  %vm2410 = vcmp.gt.f32.partialorder %v2404, 0.0
  %v2411 = vmul.f32 %v2389, 0.2
  %v2412 = vmul.f32 %v2394, 0.2
  %v2413 = vmul.f32 %v2399, 0.2
  %v2414 = vmul.f32 %v2404, 0.2
  %v2415 = vsel %vm2407, %v2389, %v2411
  %v2416 = vsel %vm2408, %v2394, %v2412
  %v2417 = vsel %vm2409, %v2399, %v2413
  %v2418 = vsel %vm2410, %v2404, %v2414
  %s2419 = scalar_lea.vmem %s27, 32
  %v2420 = vld [vmem:[%s2419] sm:$0xff]
  %v2421 = vld [vmem:[%s2419 + $0x8] sm:$0xff]
  %v2422 = vld [vmem:[%s2419 + $0x10] sm:$0xff]
  %v2423 = vld [vmem:[%s2419 + $0x18] sm:$0xff]
  %v2425 = vsel %vm152, %v2420, 0
  %v2428 = vsel %vm152, %v2421, 0
  %v2431 = vsel %vm152, %v2422, 0
  %v2434 = vsel %vm152, %v2423, 0
  %2436 = vmatprep.subr.mxu0 0.0
  %2437 = vmatpush1.msra.mxu0 0.0
  %2438 = vmatprep.subr.mxu0 0.0
  %2439 = vmatpush1.msra.mxu0 0.0
  %2440 = vmatprep.subr.mxu0 0.0
  %2441 = vmatpush1.msra.mxu0 0.0
  %2442 = vmatprep.subr.mxu0 0.0
  %2443 = vmatpush1.msra.mxu0 0.0
  %2444 = vmatprep.subr.mxu0 0.0
  %2445 = vmatpush1.msra.mxu0 0.0
  %2446 = vmatprep.subr.mxu0 0.0
  %2447 = vmatpush1.msra.mxu0 0.0
  %2448 = vmatprep.subr.mxu0 0.0
  %2449 = vmatpush1.msra.mxu0 0.0
  %2450 = vmatprep.subr.mxu0 0.0
  %2451 = vmatpush1.msra.mxu0 0.0
  %2452 = vmatprep.subr.mxu0 0.0
  %2453 = vmatpush1.msra.mxu0 0.0
  %2454 = vmatprep.subr.mxu0 0.0
  %2455 = vmatpush1.msra.mxu0 0.0
  %2456 = vmatprep.subr.mxu0 0.0
  %2457 = vmatpush1.msra.mxu0 0.0
  %2458 = vmatprep.subr.mxu0 0.0
  %2459 = vmatpush1.msra.mxu0 0.0
  %2460 = vmatprep.subr.mxu0 0.0
  %2461 = vmatpush1.msra.mxu0 %v2418
  %2462 = vmatprep.subr.mxu0 0.0
  %2463 = vmatpush1.msra.mxu0 %v2417
  %2464 = vmatprep.subr.mxu0 0.0
  %2465 = vmatpush1.msra.mxu0 %v2416
  %2466 = vmatprep.subr.mxu0 0.0
  %2467 = vmatpush1.msra.mxu0 %v2415
  %2468 = vmatprep.subr.mxu0 0.0
  %2469 = vmatpush2.msra.mxu0 0.0
  %2470 = vmatprep.subr.mxu0 0.0
  %2471 = vmatpush2.msra.mxu0 0.0
  %2472 = vmatprep.subr.mxu0 0.0
  %2473 = vmatpush2.msra.mxu0 0.0
  %2474 = vmatprep.subr.mxu0 0.0
  %2475 = vmatpush2.msra.mxu0 0.0
  %2476 = vmatprep.subr.mxu0 0.0
  %2477 = vmatpush2.msra.mxu0 0.0
  %2478 = vmatprep.subr.mxu0 0.0
  %2479 = vmatpush2.msra.mxu0 0.0
  %2480 = vmatprep.subr.mxu0 0.0
  %2481 = vmatpush2.msra.mxu0 0.0
  %2482 = vmatprep.subr.mxu0 0.0
  %2483 = vmatpush2.msra.mxu0 0.0
  %2484 = vmatprep.subr.mxu0 0.0
  %2485 = vmatpush2.msra.mxu0 0.0
  %2486 = vmatprep.subr.mxu0 0.0
  %2487 = vmatpush2.msra.mxu0 0.0
  %2488 = vmatprep.subr.mxu0 0.0
  %2489 = vmatpush2.msra.mxu0 0.0
  %2490 = vmatprep.subr.mxu0 0.0
  %2491 = vmatpush2.msra.mxu0 0.0
  %2492 = vmatprep.subr.mxu0 0.0
  %2493 = vmatpush2.msra.mxu0 0.0
  %2494 = vmatprep.subr.mxu0 0.0
  %2495 = vmatpush2.msra.mxu0 0.0
  %2496 = vmatprep.subr.mxu0 0.0
  %2497 = vmatpush2.msra.mxu0 0.0
  %2498 = vmatprep.subr.mxu0 0.0
  %2499 = vmatpush2.msra.mxu0 0.0
  %2500 = vmatprep.mubr.f32.mxu0 0.0
  %2501 = vmatmul.mubr.f32.gmra.mxu0 %v2425
  %v2502 = vpop.f32.mrf.mxu0
  %v2503 = vadd.f32 0.0, %v2502
  %v2504 = vpop.f32.mrf.mxu0
  %2505 = vmatprep.mubr.f32.mxu0 0.0
  %2506 = vmatmul.mubr.f32.gmra.mxu0 %v2428
  %v2507 = vpop.f32.mrf.mxu0
  %v2508 = vadd.f32 0.0, %v2507
  %v2509 = vpop.f32.mrf.mxu0
  %2510 = vmatprep.mubr.f32.mxu0 0.0
  %2511 = vmatmul.mubr.f32.gmra.mxu0 %v2431
  %v2512 = vpop.f32.mrf.mxu0
  %v2513 = vadd.f32 0.0, %v2512
  %v2514 = vpop.f32.mrf.mxu0
  %2515 = vmatprep.mubr.f32.mxu0 0.0
  %2516 = vmatmul.mubr.f32.gmra.mxu0 %v2434
  %v2517 = vpop.f32.mrf.mxu0
  %v2518 = vadd.f32 0.0, %v2517
  %v2519 = vpop.f32.mrf.mxu0
  %2520 = vdwg.mxu0
  %2521 = vmatprep.subr.mxu0 0.0
  %2522 = vmatpush1.msra.mxu0 %v1645
  %2523 = vmatprep.subr.mxu0 0.0
  %2524 = vmatpush1.msra.mxu0 %v1644
  %2525 = vmatprep.subr.mxu0 0.0
  %2526 = vmatpush1.msra.mxu0 %v1643
  %2527 = vmatprep.subr.mxu0 0.0
  %2528 = vmatpush1.msra.mxu0 %v1642
  %2529 = vmatprep.subr.mxu0 0.0
  %2530 = vmatpush1.msra.mxu0 %v1641
  %2531 = vmatprep.subr.mxu0 0.0
  %2532 = vmatpush1.msra.mxu0 %v1640
  %2533 = vmatprep.subr.mxu0 0.0
  %2534 = vmatpush1.msra.mxu0 %v1639
  %2535 = vmatprep.subr.mxu0 0.0
  %2536 = vmatpush1.msra.mxu0 %v1638
  %2537 = vmatprep.subr.mxu0 0.0
  %2538 = vmatpush1.msra.mxu0 %v1637
  %2539 = vmatprep.subr.mxu0 0.0
  %2540 = vmatpush1.msra.mxu0 %v1636
  %2541 = vmatprep.subr.mxu0 0.0
  %2542 = vmatpush1.msra.mxu0 %v1635
  %2543 = vmatprep.subr.mxu0 0.0
  %2544 = vmatpush1.msra.mxu0 %v1634
  %2545 = vmatprep.subr.mxu0 0.0
  %2546 = vmatpush1.msra.mxu0 %v1633
  %2547 = vmatprep.subr.mxu0 0.0
  %2548 = vmatpush1.msra.mxu0 %v1632
  %2549 = vmatprep.subr.mxu0 0.0
  %2550 = vmatpush1.msra.mxu0 %v1631
  %2551 = vmatprep.subr.mxu0 0.0
  %2552 = vmatpush1.msra.mxu0 %v1630
  %2553 = vmatprep.subr.mxu0 0.0
  %2554 = vmatpush2.msra.mxu0 0.0
  %2555 = vmatprep.subr.mxu0 0.0
  %2556 = vmatpush2.msra.mxu0 0.0
  %2557 = vmatprep.subr.mxu0 0.0
  %2558 = vmatpush2.msra.mxu0 0.0
  %2559 = vmatprep.subr.mxu0 0.0
  %2560 = vmatpush2.msra.mxu0 0.0
  %2561 = vmatprep.subr.mxu0 0.0
  %2562 = vmatpush2.msra.mxu0 0.0
  %2563 = vmatprep.subr.mxu0 0.0
  %2564 = vmatpush2.msra.mxu0 0.0
  %2565 = vmatprep.subr.mxu0 0.0
  %2566 = vmatpush2.msra.mxu0 0.0
  %2567 = vmatprep.subr.mxu0 0.0
  %2568 = vmatpush2.msra.mxu0 0.0
  %2569 = vmatprep.subr.mxu0 0.0
  %2570 = vmatpush2.msra.mxu0 0.0
  %2571 = vmatprep.subr.mxu0 0.0
  %2572 = vmatpush2.msra.mxu0 0.0
  %2573 = vmatprep.subr.mxu0 0.0
  %2574 = vmatpush2.msra.mxu0 0.0
  %2575 = vmatprep.subr.mxu0 0.0
  %2576 = vmatpush2.msra.mxu0 0.0
  %2577 = vmatprep.subr.mxu0 0.0
  %2578 = vmatpush2.msra.mxu0 0.0
  %2579 = vmatprep.subr.mxu0 0.0
  %2580 = vmatpush2.msra.mxu0 0.0
  %2581 = vmatprep.subr.mxu0 0.0
  %2582 = vmatpush2.msra.mxu0 0.0
  %2583 = vmatprep.subr.mxu0 0.0
  %2584 = vmatpush2.msra.mxu0 0.0
  %2585 = vmatprep.mubr.f32.mxu0 0.0
  %2586 = vmatmul.mubr.f32.gmra.mxu0 %v2503
  %v2587 = vpop.f32.mrf.mxu0
  %v2588 = vadd.f32 0.0, %v2587
  %v2589 = vpop.f32.mrf.mxu0
  %2590 = vmatprep.mubr.f32.mxu0 0.0
  %2591 = vmatmul.mubr.f32.gmra.mxu0 %v2508
  %v2592 = vpop.f32.mrf.mxu0
  %v2593 = vadd.f32 0.0, %v2592
  %v2594 = vpop.f32.mrf.mxu0
  %2595 = vmatprep.mubr.f32.mxu0 0.0
  %2596 = vmatmul.mubr.f32.gmra.mxu0 %v2513
  %v2597 = vpop.f32.mrf.mxu0
  %v2598 = vadd.f32 0.0, %v2597
  %v2599 = vpop.f32.mrf.mxu0
  %2600 = vmatprep.mubr.f32.mxu0 0.0
  %2601 = vmatmul.mubr.f32.gmra.mxu0 %v2518
  %v2602 = vpop.f32.mrf.mxu0
  %v2603 = vadd.f32 0.0, %v2602
  %v2604 = vpop.f32.mrf.mxu0
  %2605 = vdwg.mxu0
  %v2606 = vadd.f32 %v2216, %v2588
  %v2607 = vadd.f32 %v2217, %v2593
  %v2608 = vadd.f32 %v2218, %v2598
  %v2609 = vadd.f32 %v2219, %v2603
  %v2610 = vld [vmem:[%s29] sm:$0xff]
  %v2612 = vsel %vm152, %v2610, 0
  %2614 = vmatprep.subr.mxu0 0.0
  %2615 = vmatpush1.msra.mxu0 0.0
  %2616 = vmatprep.subr.mxu0 0.0
  %2617 = vmatpush1.msra.mxu0 0.0
  %2618 = vmatprep.subr.mxu0 0.0
  %2619 = vmatpush1.msra.mxu0 0.0
  %2620 = vmatprep.subr.mxu0 0.0
  %2621 = vmatpush1.msra.mxu0 0.0
  %2622 = vmatprep.subr.mxu0 0.0
  %2623 = vmatpush1.msra.mxu0 0.0
  %2624 = vmatprep.subr.mxu0 0.0
  %2625 = vmatpush1.msra.mxu0 0.0
  %2626 = vmatprep.subr.mxu0 0.0
  %2627 = vmatpush1.msra.mxu0 0.0
  %2628 = vmatprep.subr.mxu0 0.0
  %2629 = vmatpush1.msra.mxu0 0.0
  %2630 = vmatprep.subr.mxu0 0.0
  %2631 = vmatpush1.msra.mxu0 0.0
  %2632 = vmatprep.subr.mxu0 0.0
  %2633 = vmatpush1.msra.mxu0 0.0
  %2634 = vmatprep.subr.mxu0 0.0
  %2635 = vmatpush1.msra.mxu0 0.0
  %2636 = vmatprep.subr.mxu0 0.0
  %2637 = vmatpush1.msra.mxu0 0.0
  %2638 = vmatprep.subr.mxu0 0.0
  %2639 = vmatpush1.msra.mxu0 %v2609
  %2640 = vmatprep.subr.mxu0 0.0
  %2641 = vmatpush1.msra.mxu0 %v2608
  %2642 = vmatprep.subr.mxu0 0.0
  %2643 = vmatpush1.msra.mxu0 %v2607
  %2644 = vmatprep.subr.mxu0 0.0
  %2645 = vmatpush1.msra.mxu0 %v2606
  %2646 = vmatprep.subr.mxu0 0.0
  %2647 = vmatpush2.msra.mxu0 0.0
  %2648 = vmatprep.subr.mxu0 0.0
  %2649 = vmatpush2.msra.mxu0 0.0
  %2650 = vmatprep.subr.mxu0 0.0
  %2651 = vmatpush2.msra.mxu0 0.0
  %2652 = vmatprep.subr.mxu0 0.0
  %2653 = vmatpush2.msra.mxu0 0.0
  %2654 = vmatprep.subr.mxu0 0.0
  %2655 = vmatpush2.msra.mxu0 0.0
  %2656 = vmatprep.subr.mxu0 0.0
  %2657 = vmatpush2.msra.mxu0 0.0
  %2658 = vmatprep.subr.mxu0 0.0
  %2659 = vmatpush2.msra.mxu0 0.0
  %2660 = vmatprep.subr.mxu0 0.0
  %2661 = vmatpush2.msra.mxu0 0.0
  %2662 = vmatprep.subr.mxu0 0.0
  %2663 = vmatpush2.msra.mxu0 0.0
  %2664 = vmatprep.subr.mxu0 0.0
  %2665 = vmatpush2.msra.mxu0 0.0
  %2666 = vmatprep.subr.mxu0 0.0
  %2667 = vmatpush2.msra.mxu0 0.0
  %2668 = vmatprep.subr.mxu0 0.0
  %2669 = vmatpush2.msra.mxu0 0.0
  %2670 = vmatprep.subr.mxu0 0.0
  %2671 = vmatpush2.msra.mxu0 0.0
  %2672 = vmatprep.subr.mxu0 0.0
  %2673 = vmatpush2.msra.mxu0 0.0
  %2674 = vmatprep.subr.mxu0 0.0
  %2675 = vmatpush2.msra.mxu0 0.0
  %2676 = vmatprep.subr.mxu0 0.0
  %2677 = vmatpush2.msra.mxu0 0.0
  %2678 = vmatprep.mubr.f32.mxu0 0.0
  %2679 = vmatmul.mubr.f32.gmra.mxu0 %v2612
  %v2680 = vpop.f32.mrf.mxu0
  %v2681 = vadd.f32 0.0, %v2680
  %v2682 = vpop.f32.mrf.mxu0
  %2683 = vdwg.mxu0
  %2684 = vmatprep.subr.mxu0 0.0
  %2685 = vmatpush1.msra.mxu0 %v1645
  %2686 = vmatprep.subr.mxu0 0.0
  %2687 = vmatpush1.msra.mxu0 %v1644
  %2688 = vmatprep.subr.mxu0 0.0
  %2689 = vmatpush1.msra.mxu0 %v1643
  %2690 = vmatprep.subr.mxu0 0.0
  %2691 = vmatpush1.msra.mxu0 %v1642
  %2692 = vmatprep.subr.mxu0 0.0
  %2693 = vmatpush1.msra.mxu0 %v1641
  %2694 = vmatprep.subr.mxu0 0.0
  %2695 = vmatpush1.msra.mxu0 %v1640
  %2696 = vmatprep.subr.mxu0 0.0
  %2697 = vmatpush1.msra.mxu0 %v1639
  %2698 = vmatprep.subr.mxu0 0.0
  %2699 = vmatpush1.msra.mxu0 %v1638
  %2700 = vmatprep.subr.mxu0 0.0
  %2701 = vmatpush1.msra.mxu0 %v1637
  %2702 = vmatprep.subr.mxu0 0.0
  %2703 = vmatpush1.msra.mxu0 %v1636
  %2704 = vmatprep.subr.mxu0 0.0
  %2705 = vmatpush1.msra.mxu0 %v1635
  %2706 = vmatprep.subr.mxu0 0.0
  %2707 = vmatpush1.msra.mxu0 %v1634
  %2708 = vmatprep.subr.mxu0 0.0
  %2709 = vmatpush1.msra.mxu0 %v1633
  %2710 = vmatprep.subr.mxu0 0.0
  %2711 = vmatpush1.msra.mxu0 %v1632
  %2712 = vmatprep.subr.mxu0 0.0
  %2713 = vmatpush1.msra.mxu0 %v1631
  %2714 = vmatprep.subr.mxu0 0.0
  %2715 = vmatpush1.msra.mxu0 %v1630
  %2716 = vmatprep.subr.mxu0 0.0
  %2717 = vmatpush2.msra.mxu0 0.0
  %2718 = vmatprep.subr.mxu0 0.0
  %2719 = vmatpush2.msra.mxu0 0.0
  %2720 = vmatprep.subr.mxu0 0.0
  %2721 = vmatpush2.msra.mxu0 0.0
  %2722 = vmatprep.subr.mxu0 0.0
  %2723 = vmatpush2.msra.mxu0 0.0
  %2724 = vmatprep.subr.mxu0 0.0
  %2725 = vmatpush2.msra.mxu0 0.0
  %2726 = vmatprep.subr.mxu0 0.0
  %2727 = vmatpush2.msra.mxu0 0.0
  %2728 = vmatprep.subr.mxu0 0.0
  %2729 = vmatpush2.msra.mxu0 0.0
  %2730 = vmatprep.subr.mxu0 0.0
  %2731 = vmatpush2.msra.mxu0 0.0
  %2732 = vmatprep.subr.mxu0 0.0
  %2733 = vmatpush2.msra.mxu0 0.0
  %2734 = vmatprep.subr.mxu0 0.0
  %2735 = vmatpush2.msra.mxu0 0.0
  %2736 = vmatprep.subr.mxu0 0.0
  %2737 = vmatpush2.msra.mxu0 0.0
  %2738 = vmatprep.subr.mxu0 0.0
  %2739 = vmatpush2.msra.mxu0 0.0
  %2740 = vmatprep.subr.mxu0 0.0
  %2741 = vmatpush2.msra.mxu0 0.0
  %2742 = vmatprep.subr.mxu0 0.0
  %2743 = vmatpush2.msra.mxu0 0.0
  %2744 = vmatprep.subr.mxu0 0.0
  %2745 = vmatpush2.msra.mxu0 0.0
  %2746 = vmatprep.subr.mxu0 0.0
  %2747 = vmatpush2.msra.mxu0 0.0
  %2748 = vmatprep.mubr.f32.mxu0 0.0
  %2749 = vmatmul.mubr.f32.gmra.mxu0 %v2681
  %v2750 = vpop.f32.mrf.mxu0
  %v2751 = vadd.f32 0.0, %v2750
  %v2752 = vpop.f32.mrf.mxu0
  %2753 = vdwg.mxu0
  %vm2754 = vcmp.gt.f32.partialorder %v2751, 0.0
  %v2755 = vmul.f32 %v2751, 0.2
  %v2756 = vsel %vm2754, %v2751, %v2755
  %v2757 = vld [vmem:[%s33] sm:$0xff]
  %v2758 = vld [vmem:[%s33 + $0x8] sm:$0xff]
  %v2759 = vld [vmem:[%s35] sm:$0xff]
  %v2760 = vld [vmem:[%s35 + $0x8] sm:$0xff]
  %2762 = vset.pattern.permute.xlu0 0
  %2763 = vperm.xlu0 %2762, %v2759
  %v2764 = vpop.permute.xlu0 %2763
  %2767 = vset.pattern.permute.xlu0 0
  %2768 = vperm.xlu0 %2767, %v2760
  %v2769 = vpop.permute.xlu0 %2768
  %v2772 = vsel %vm240, %v2757, 0
  %v2775 = vsel %vm240, %v2758, 0
  %2777 = vmatprep.subr.mxu0 0.0
  %2778 = vmatpush1.msra.mxu0 0.0
  %2779 = vmatprep.subr.mxu0 0.0
  %2780 = vmatpush1.msra.mxu0 0.0
  %2781 = vmatprep.subr.mxu0 0.0
  %2782 = vmatpush1.msra.mxu0 0.0
  %2783 = vmatprep.subr.mxu0 0.0
  %2784 = vmatpush1.msra.mxu0 0.0
  %2785 = vmatprep.subr.mxu0 0.0
  %2786 = vmatpush1.msra.mxu0 0.0
  %2787 = vmatprep.subr.mxu0 0.0
  %2788 = vmatpush1.msra.mxu0 0.0
  %2789 = vmatprep.subr.mxu0 0.0
  %2790 = vmatpush1.msra.mxu0 0.0
  %2791 = vmatprep.subr.mxu0 0.0
  %2792 = vmatpush1.msra.mxu0 0.0
  %2793 = vmatprep.subr.mxu0 0.0
  %2794 = vmatpush1.msra.mxu0 0.0
  %2795 = vmatprep.subr.mxu0 0.0
  %2796 = vmatpush1.msra.mxu0 0.0
  %2797 = vmatprep.subr.mxu0 0.0
  %2798 = vmatpush1.msra.mxu0 0.0
  %2799 = vmatprep.subr.mxu0 0.0
  %2800 = vmatpush1.msra.mxu0 0.0
  %2801 = vmatprep.subr.mxu0 0.0
  %2802 = vmatpush1.msra.mxu0 0.0
  %2803 = vmatprep.subr.mxu0 0.0
  %2804 = vmatpush1.msra.mxu0 0.0
  %2805 = vmatprep.subr.mxu0 0.0
  %2806 = vmatpush1.msra.mxu0 %v2756
  %2807 = vmatprep.subr.mxu0 0.0
  %2808 = vmatpush1.msra.mxu0 %v1629
  %2809 = vmatprep.subr.mxu0 0.0
  %2810 = vmatpush2.msra.mxu0 0.0
  %2811 = vmatprep.subr.mxu0 0.0
  %2812 = vmatpush2.msra.mxu0 0.0
  %2813 = vmatprep.subr.mxu0 0.0
  %2814 = vmatpush2.msra.mxu0 0.0
  %2815 = vmatprep.subr.mxu0 0.0
  %2816 = vmatpush2.msra.mxu0 0.0
  %2817 = vmatprep.subr.mxu0 0.0
  %2818 = vmatpush2.msra.mxu0 0.0
  %2819 = vmatprep.subr.mxu0 0.0
  %2820 = vmatpush2.msra.mxu0 0.0
  %2821 = vmatprep.subr.mxu0 0.0
  %2822 = vmatpush2.msra.mxu0 0.0
  %2823 = vmatprep.subr.mxu0 0.0
  %2824 = vmatpush2.msra.mxu0 0.0
  %2825 = vmatprep.subr.mxu0 0.0
  %2826 = vmatpush2.msra.mxu0 0.0
  %2827 = vmatprep.subr.mxu0 0.0
  %2828 = vmatpush2.msra.mxu0 0.0
  %2829 = vmatprep.subr.mxu0 0.0
  %2830 = vmatpush2.msra.mxu0 0.0
  %2831 = vmatprep.subr.mxu0 0.0
  %2832 = vmatpush2.msra.mxu0 0.0
  %2833 = vmatprep.subr.mxu0 0.0
  %2834 = vmatpush2.msra.mxu0 0.0
  %2835 = vmatprep.subr.mxu0 0.0
  %2836 = vmatpush2.msra.mxu0 0.0
  %2837 = vmatprep.subr.mxu0 0.0
  %2838 = vmatpush2.msra.mxu0 0.0
  %2839 = vmatprep.subr.mxu0 0.0
  %2840 = vmatpush2.msra.mxu0 0.0
  %2841 = vmatprep.mubr.f32.mxu0 0.0
  %2842 = vmatmul.mubr.f32.gmra.mxu0 %v2772
  %v2843 = vpop.f32.mrf.mxu0
  %v2844 = vadd.f32 %v2764, %v2843
  %v2845 = vpop.f32.mrf.mxu0
  %2846 = vmatprep.mubr.f32.mxu0 0.0
  %2847 = vmatmul.mubr.f32.gmra.mxu0 %v2775
  %v2848 = vpop.f32.mrf.mxu0
  %v2849 = vadd.f32 %v2769, %v2848
  %v2850 = vpop.f32.mrf.mxu0
  %2851 = vdwg.mxu0
  %v2852 = vadd.f32 %v2844, %v226
  %v2853 = vadd.f32 %v2849, %v231
  %v2854 = vld [vmem:[%s37] sm:$0xff]
  %v2855 = vld [vmem:[%s37 + $0x8] sm:$0xff]
  %v2856 = vld [vmem:[%s39] sm:$0xff]
  %v2857 = vld [vmem:[%s39 + $0x8] sm:$0xff]
  %2858 = vmatprep.subr.mxu0 0.0
  %2859 = vmatpush1.msra.mxu0 0.0
  %2860 = vmatprep.subr.mxu0 0.0
  %2861 = vmatpush1.msra.mxu0 0.0
  %2862 = vmatprep.subr.mxu0 0.0
  %2863 = vmatpush1.msra.mxu0 0.0
  %2864 = vmatprep.subr.mxu0 0.0
  %2865 = vmatpush1.msra.mxu0 0.0
  %2866 = vmatprep.subr.mxu0 0.0
  %2867 = vmatpush1.msra.mxu0 0.0
  %2868 = vmatprep.subr.mxu0 0.0
  %2869 = vmatpush1.msra.mxu0 0.0
  %2870 = vmatprep.subr.mxu0 0.0
  %2871 = vmatpush1.msra.mxu0 0.0
  %2872 = vmatprep.subr.mxu0 0.0
  %2873 = vmatpush1.msra.mxu0 0.0
  %2874 = vmatprep.subr.mxu0 0.0
  %2875 = vmatpush1.msra.mxu0 0.0
  %2876 = vmatprep.subr.mxu0 0.0
  %2877 = vmatpush1.msra.mxu0 0.0
  %2878 = vmatprep.subr.mxu0 0.0
  %2879 = vmatpush1.msra.mxu0 0.0
  %2880 = vmatprep.subr.mxu0 0.0
  %2881 = vmatpush1.msra.mxu0 0.0
  %2882 = vmatprep.subr.mxu0 0.0
  %2883 = vmatpush1.msra.mxu0 0.0
  %2884 = vmatprep.subr.mxu0 0.0
  %2885 = vmatpush1.msra.mxu0 0.0
  %2886 = vmatprep.subr.mxu0 0.0
  %2887 = vmatpush1.msra.mxu0 %v2853
  %2888 = vmatprep.subr.mxu0 0.0
  %2889 = vmatpush1.msra.mxu0 %v2852
  %2890 = vmatprep.subr.mxu0 0.0
  %2891 = vmatpush2.msra.mxu0 0.0
  %2892 = vmatprep.subr.mxu0 0.0
  %2893 = vmatpush2.msra.mxu0 0.0
  %2894 = vmatprep.subr.mxu0 0.0
  %2895 = vmatpush2.msra.mxu0 0.0
  %2896 = vmatprep.subr.mxu0 0.0
  %2897 = vmatpush2.msra.mxu0 0.0
  %2898 = vmatprep.subr.mxu0 0.0
  %2899 = vmatpush2.msra.mxu0 0.0
  %2900 = vmatprep.subr.mxu0 0.0
  %2901 = vmatpush2.msra.mxu0 0.0
  %2902 = vmatprep.subr.mxu0 0.0
  %2903 = vmatpush2.msra.mxu0 0.0
  %2904 = vmatprep.subr.mxu0 0.0
  %2905 = vmatpush2.msra.mxu0 0.0
  %2906 = vmatprep.subr.mxu0 0.0
  %2907 = vmatpush2.msra.mxu0 0.0
  %2908 = vmatprep.subr.mxu0 0.0
  %2909 = vmatpush2.msra.mxu0 0.0
  %2910 = vmatprep.subr.mxu0 0.0
  %2911 = vmatpush2.msra.mxu0 0.0
  %2912 = vmatprep.subr.mxu0 0.0
  %2913 = vmatpush2.msra.mxu0 0.0
  %2914 = vmatprep.subr.mxu0 0.0
  %2915 = vmatpush2.msra.mxu0 0.0
  %2916 = vmatprep.subr.mxu0 0.0
  %2917 = vmatpush2.msra.mxu0 0.0
  %2918 = vmatprep.subr.mxu0 0.0
  %2919 = vmatpush2.msra.mxu0 0.0
  %2920 = vmatprep.subr.mxu0 0.0
  %2921 = vmatpush2.msra.mxu0 0.0
  %2922 = vmatprep.mubr.f32.mxu0 0.0
  %2923 = vmatmul.mubr.f32.gmra.mxu0 %v242
  %v2924 = vpop.f32.mrf.mxu0
  %v2925 = vadd.f32 0.0, %v2924
  %v2926 = vpop.f32.mrf.mxu0
  %2927 = vmatprep.mubr.f32.mxu0 0.0
  %2928 = vmatmul.mubr.f32.gmra.mxu0 %v245
  %v2929 = vpop.f32.mrf.mxu0
  %v2930 = vadd.f32 0.0, %v2929
  %v2931 = vpop.f32.mrf.mxu0
  %2932 = vdwg.mxu0
  %v2933 = vsub.f32 %v2852, %v2925
  %v2934 = vsub.f32 %v2853, %v2930
  %v2935 = vmul.f32 %v2933, %v2933
  %v2936 = vmul.f32 %v2934, %v2934
  %2937 = vmatprep.subr.mxu0 0.0
  %2938 = vmatpush1.msra.mxu0 0.0
  %2939 = vmatprep.subr.mxu0 0.0
  %2940 = vmatpush1.msra.mxu0 0.0
  %2941 = vmatprep.subr.mxu0 0.0
  %2942 = vmatpush1.msra.mxu0 0.0
  %2943 = vmatprep.subr.mxu0 0.0
  %2944 = vmatpush1.msra.mxu0 0.0
  %2945 = vmatprep.subr.mxu0 0.0
  %2946 = vmatpush1.msra.mxu0 0.0
  %2947 = vmatprep.subr.mxu0 0.0
  %2948 = vmatpush1.msra.mxu0 0.0
  %2949 = vmatprep.subr.mxu0 0.0
  %2950 = vmatpush1.msra.mxu0 0.0
  %2951 = vmatprep.subr.mxu0 0.0
  %2952 = vmatpush1.msra.mxu0 0.0
  %2953 = vmatprep.subr.mxu0 0.0
  %2954 = vmatpush1.msra.mxu0 0.0
  %2955 = vmatprep.subr.mxu0 0.0
  %2956 = vmatpush1.msra.mxu0 0.0
  %2957 = vmatprep.subr.mxu0 0.0
  %2958 = vmatpush1.msra.mxu0 0.0
  %2959 = vmatprep.subr.mxu0 0.0
  %2960 = vmatpush1.msra.mxu0 0.0
  %2961 = vmatprep.subr.mxu0 0.0
  %2962 = vmatpush1.msra.mxu0 0.0
  %2963 = vmatprep.subr.mxu0 0.0
  %2964 = vmatpush1.msra.mxu0 0.0
  %2965 = vmatprep.subr.mxu0 0.0
  %2966 = vmatpush1.msra.mxu0 %v2936
  %2967 = vmatprep.subr.mxu0 0.0
  %2968 = vmatpush1.msra.mxu0 %v2935
  %2969 = vmatprep.subr.mxu0 0.0
  %2970 = vmatpush2.msra.mxu0 0.0
  %2971 = vmatprep.subr.mxu0 0.0
  %2972 = vmatpush2.msra.mxu0 0.0
  %2973 = vmatprep.subr.mxu0 0.0
  %2974 = vmatpush2.msra.mxu0 0.0
  %2975 = vmatprep.subr.mxu0 0.0
  %2976 = vmatpush2.msra.mxu0 0.0
  %2977 = vmatprep.subr.mxu0 0.0
  %2978 = vmatpush2.msra.mxu0 0.0
  %2979 = vmatprep.subr.mxu0 0.0
  %2980 = vmatpush2.msra.mxu0 0.0
  %2981 = vmatprep.subr.mxu0 0.0
  %2982 = vmatpush2.msra.mxu0 0.0
  %2983 = vmatprep.subr.mxu0 0.0
  %2984 = vmatpush2.msra.mxu0 0.0
  %2985 = vmatprep.subr.mxu0 0.0
  %2986 = vmatpush2.msra.mxu0 0.0
  %2987 = vmatprep.subr.mxu0 0.0
  %2988 = vmatpush2.msra.mxu0 0.0
  %2989 = vmatprep.subr.mxu0 0.0
  %2990 = vmatpush2.msra.mxu0 0.0
  %2991 = vmatprep.subr.mxu0 0.0
  %2992 = vmatpush2.msra.mxu0 0.0
  %2993 = vmatprep.subr.mxu0 0.0
  %2994 = vmatpush2.msra.mxu0 0.0
  %2995 = vmatprep.subr.mxu0 0.0
  %2996 = vmatpush2.msra.mxu0 0.0
  %2997 = vmatprep.subr.mxu0 0.0
  %2998 = vmatpush2.msra.mxu0 0.0
  %2999 = vmatprep.subr.mxu0 0.0
  %3000 = vmatpush2.msra.mxu0 0.0
  %3001 = vmatprep.mubr.f32.mxu0 0.0
  %3002 = vmatmul.mubr.f32.gmra.mxu0 %v242
  %v3003 = vpop.f32.mrf.mxu0
  %v3004 = vadd.f32 1e-05, %v3003
  %v3005 = vpop.f32.mrf.mxu0
  %3006 = vmatprep.mubr.f32.mxu0 0.0
  %3007 = vmatmul.mubr.f32.gmra.mxu0 %v245
  %v3008 = vpop.f32.mrf.mxu0
  %v3009 = vadd.f32 1e-05, %v3008
  %v3010 = vpop.f32.mrf.mxu0
  %3011 = vdwg.mxu0
  %v3012 = vrsqrt.pop %v3004
  %v3013 = vrsqrt.pop %v3009
  %v3014 = vmul.f32 %v2933, %v3012
  %v3015 = vmul.f32 %v2934, %v3013
  %3017 = vset.pattern.permute.xlu0 0
  %3018 = vperm.xlu0 %3017, %v2856
  %v3019 = vpop.permute.xlu0 %3018
  %3022 = vset.pattern.permute.xlu0 0
  %3023 = vperm.xlu0 %3022, %v2857
  %v3024 = vpop.permute.xlu0 %3023
  %v3027 = vsel %vm240, %v2854, 0
  %v3030 = vsel %vm240, %v2855, 0
  %3032 = vmatprep.subr.mxu0 0.0
  %3033 = vmatpush1.msra.mxu0 0.0
  %3034 = vmatprep.subr.mxu0 0.0
  %3035 = vmatpush1.msra.mxu0 0.0
  %3036 = vmatprep.subr.mxu0 0.0
  %3037 = vmatpush1.msra.mxu0 0.0
  %3038 = vmatprep.subr.mxu0 0.0
  %3039 = vmatpush1.msra.mxu0 0.0
  %3040 = vmatprep.subr.mxu0 0.0
  %3041 = vmatpush1.msra.mxu0 0.0
  %3042 = vmatprep.subr.mxu0 0.0
  %3043 = vmatpush1.msra.mxu0 0.0
  %3044 = vmatprep.subr.mxu0 0.0
  %3045 = vmatpush1.msra.mxu0 0.0
  %3046 = vmatprep.subr.mxu0 0.0
  %3047 = vmatpush1.msra.mxu0 0.0
  %3048 = vmatprep.subr.mxu0 0.0
  %3049 = vmatpush1.msra.mxu0 0.0
  %3050 = vmatprep.subr.mxu0 0.0
  %3051 = vmatpush1.msra.mxu0 0.0
  %3052 = vmatprep.subr.mxu0 0.0
  %3053 = vmatpush1.msra.mxu0 0.0
  %3054 = vmatprep.subr.mxu0 0.0
  %3055 = vmatpush1.msra.mxu0 0.0
  %3056 = vmatprep.subr.mxu0 0.0
  %3057 = vmatpush1.msra.mxu0 0.0
  %3058 = vmatprep.subr.mxu0 0.0
  %3059 = vmatpush1.msra.mxu0 0.0
  %3060 = vmatprep.subr.mxu0 0.0
  %3061 = vmatpush1.msra.mxu0 %v3015
  %3062 = vmatprep.subr.mxu0 0.0
  %3063 = vmatpush1.msra.mxu0 %v3014
  %3064 = vmatprep.subr.mxu0 0.0
  %3065 = vmatpush2.msra.mxu0 0.0
  %3066 = vmatprep.subr.mxu0 0.0
  %3067 = vmatpush2.msra.mxu0 0.0
  %3068 = vmatprep.subr.mxu0 0.0
  %3069 = vmatpush2.msra.mxu0 0.0
  %3070 = vmatprep.subr.mxu0 0.0
  %3071 = vmatpush2.msra.mxu0 0.0
  %3072 = vmatprep.subr.mxu0 0.0
  %3073 = vmatpush2.msra.mxu0 0.0
  %3074 = vmatprep.subr.mxu0 0.0
  %3075 = vmatpush2.msra.mxu0 0.0
  %3076 = vmatprep.subr.mxu0 0.0
  %3077 = vmatpush2.msra.mxu0 0.0
  %3078 = vmatprep.subr.mxu0 0.0
  %3079 = vmatpush2.msra.mxu0 0.0
  %3080 = vmatprep.subr.mxu0 0.0
  %3081 = vmatpush2.msra.mxu0 0.0
  %3082 = vmatprep.subr.mxu0 0.0
  %3083 = vmatpush2.msra.mxu0 0.0
  %3084 = vmatprep.subr.mxu0 0.0
  %3085 = vmatpush2.msra.mxu0 0.0
  %3086 = vmatprep.subr.mxu0 0.0
  %3087 = vmatpush2.msra.mxu0 0.0
  %3088 = vmatprep.subr.mxu0 0.0
  %3089 = vmatpush2.msra.mxu0 0.0
  %3090 = vmatprep.subr.mxu0 0.0
  %3091 = vmatpush2.msra.mxu0 0.0
  %3092 = vmatprep.subr.mxu0 0.0
  %3093 = vmatpush2.msra.mxu0 0.0
  %3094 = vmatprep.subr.mxu0 0.0
  %3095 = vmatpush2.msra.mxu0 0.0
  %3096 = vmatprep.mubr.f32.mxu0 0.0
  %3097 = vmatmul.mubr.f32.gmra.mxu0 %v3027
  %v3098 = vpop.f32.mrf.mxu0
  %v3099 = vadd.f32 %v3019, %v3098
  %v3100 = vpop.f32.mrf.mxu0
  %3101 = vmatprep.mubr.f32.mxu0 0.0
  %3102 = vmatmul.mubr.f32.gmra.mxu0 %v3030
  %v3103 = vpop.f32.mrf.mxu0
  %v3104 = vadd.f32 %v3024, %v3103
  %v3105 = vpop.f32.mrf.mxu0
  %3106 = vdwg.mxu0
  %vm3107 = vcmp.gt.f32.partialorder %v3099, 0.0
  %vm3108 = vcmp.gt.f32.partialorder %v3104, 0.0
  %v3109 = vmul.f32 %v3099, 0.2
  %v3110 = vmul.f32 %v3104, 0.2
  %v3111 = vsel %vm3107, %v3099, %v3109
  %v3112 = vsel %vm3108, %v3104, %v3110
  %v3113 = vld [vmem:[%s49] sm:$0xff]
  %v3114 = vld [vmem:[%s49 + $0x8] sm:$0xff]
  %v3115 = vld [vmem:[%s49 + $0x10] sm:$0xff]
  %v3116 = vld [vmem:[%s49 + $0x18] sm:$0xff]
  %v3117 = vld [vmem:[%s49 + $0x20] sm:$0xff]
  %v3118 = vld [vmem:[%s49 + $0x28] sm:$0xff]
  %v3119 = vld [vmem:[%s49 + $0x30] sm:$0xff]
  %v3120 = vld [vmem:[%s49 + $0x38] sm:$0xff]
  %v3121 = vld [vmem:[%s49 + $0x40] sm:$0xff]
  %v3122 = vld [vmem:[%s49 + $0x48] sm:$0xff]
  %v3123 = vld [vmem:[%s49 + $0x50] sm:$0xff]
  %v3124 = vld [vmem:[%s49 + $0x58] sm:$0xff]
  %v3125 = vld [vmem:[%s49 + $0x60] sm:$0xff]
  %v3126 = vld [vmem:[%s49 + $0x68] sm:$0xff]
  %v3127 = vld [vmem:[%s49 + $0x70] sm:$0xff]
  %v3128 = vld [vmem:[%s49 + $0x78] sm:$0xff]
  %v3129 = vld [vmem:[%s41] sm:$0xff]
  %v3130 = vld [vmem:[%s41 + $0x8] sm:$0xff]
  %v3131 = vld [vmem:[%s41 + $0x10] sm:$0xff]
  %v3132 = vld [vmem:[%s41 + $0x18] sm:$0xff]
  %v3134 = vsel %vm522, %v3129, 0
  %v3137 = vsel %vm522, %v3130, 0
  %v3140 = vsel %vm522, %v3131, 0
  %v3143 = vsel %vm522, %v3132, 0
  %3145 = vmatprep.subr.mxu0 0.0
  %3146 = vmatpush1.msra.mxu0 0.0
  %3147 = vmatprep.subr.mxu0 0.0
  %3148 = vmatpush1.msra.mxu0 0.0
  %3149 = vmatprep.subr.mxu0 0.0
  %3150 = vmatpush1.msra.mxu0 0.0
  %3151 = vmatprep.subr.mxu0 0.0
  %3152 = vmatpush1.msra.mxu0 0.0
  %3153 = vmatprep.subr.mxu0 0.0
  %3154 = vmatpush1.msra.mxu0 0.0
  %3155 = vmatprep.subr.mxu0 0.0
  %3156 = vmatpush1.msra.mxu0 0.0
  %3157 = vmatprep.subr.mxu0 0.0
  %3158 = vmatpush1.msra.mxu0 0.0
  %3159 = vmatprep.subr.mxu0 0.0
  %3160 = vmatpush1.msra.mxu0 0.0
  %3161 = vmatprep.subr.mxu0 0.0
  %3162 = vmatpush1.msra.mxu0 0.0
  %3163 = vmatprep.subr.mxu0 0.0
  %3164 = vmatpush1.msra.mxu0 0.0
  %3165 = vmatprep.subr.mxu0 0.0
  %3166 = vmatpush1.msra.mxu0 0.0
  %3167 = vmatprep.subr.mxu0 0.0
  %3168 = vmatpush1.msra.mxu0 0.0
  %3169 = vmatprep.subr.mxu0 0.0
  %3170 = vmatpush1.msra.mxu0 0.0
  %3171 = vmatprep.subr.mxu0 0.0
  %3172 = vmatpush1.msra.mxu0 0.0
  %3173 = vmatprep.subr.mxu0 0.0
  %3174 = vmatpush1.msra.mxu0 0.0
  %3175 = vmatprep.subr.mxu0 0.0
  %3176 = vmatpush1.msra.mxu0 %v3111
  %3177 = vmatprep.subr.mxu0 0.0
  %3178 = vmatpush2.msra.mxu0 0.0
  %3179 = vmatprep.subr.mxu0 0.0
  %3180 = vmatpush2.msra.mxu0 0.0
  %3181 = vmatprep.subr.mxu0 0.0
  %3182 = vmatpush2.msra.mxu0 0.0
  %3183 = vmatprep.subr.mxu0 0.0
  %3184 = vmatpush2.msra.mxu0 0.0
  %3185 = vmatprep.subr.mxu0 0.0
  %3186 = vmatpush2.msra.mxu0 0.0
  %3187 = vmatprep.subr.mxu0 0.0
  %3188 = vmatpush2.msra.mxu0 0.0
  %3189 = vmatprep.subr.mxu0 0.0
  %3190 = vmatpush2.msra.mxu0 0.0
  %3191 = vmatprep.subr.mxu0 0.0
  %3192 = vmatpush2.msra.mxu0 0.0
  %3193 = vmatprep.subr.mxu0 0.0
  %3194 = vmatpush2.msra.mxu0 0.0
  %3195 = vmatprep.subr.mxu0 0.0
  %3196 = vmatpush2.msra.mxu0 0.0
  %3197 = vmatprep.subr.mxu0 0.0
  %3198 = vmatpush2.msra.mxu0 0.0
  %3199 = vmatprep.subr.mxu0 0.0
  %3200 = vmatpush2.msra.mxu0 0.0
  %3201 = vmatprep.subr.mxu0 0.0
  %3202 = vmatpush2.msra.mxu0 0.0
  %3203 = vmatprep.subr.mxu0 0.0
  %3204 = vmatpush2.msra.mxu0 0.0
  %3205 = vmatprep.subr.mxu0 0.0
  %3206 = vmatpush2.msra.mxu0 0.0
  %3207 = vmatprep.subr.mxu0 0.0
  %3208 = vmatpush2.msra.mxu0 0.0
  %3209 = vmatprep.mubr.f32.mxu0 0.0
  %3210 = vmatmul.mubr.f32.gmra.mxu0 %v3134
  %v3211 = vpop.f32.mrf.mxu0
  %v3212 = vadd.f32 0.0, %v3211
  %v3213 = vpop.f32.mrf.mxu0
  %3214 = vmatprep.mubr.f32.mxu0 0.0
  %3215 = vmatmul.mubr.f32.gmra.mxu0 %v3137
  %v3216 = vpop.f32.mrf.mxu0
  %v3217 = vadd.f32 0.0, %v3216
  %v3218 = vpop.f32.mrf.mxu0
  %3219 = vmatprep.mubr.f32.mxu0 0.0
  %3220 = vmatmul.mubr.f32.gmra.mxu0 %v3140
  %v3221 = vpop.f32.mrf.mxu0
  %v3222 = vadd.f32 0.0, %v3221
  %v3223 = vpop.f32.mrf.mxu0
  %3224 = vmatprep.mubr.f32.mxu0 0.0
  %3225 = vmatmul.mubr.f32.gmra.mxu0 %v3143
  %v3226 = vpop.f32.mrf.mxu0
  %v3227 = vadd.f32 0.0, %v3226
  %v3228 = vpop.f32.mrf.mxu0
  %3229 = vdwg.mxu0
  %3230 = vmatprep.subr.mxu0 0.0
  %3231 = vmatpush1.msra.mxu0 %v3128
  %3232 = vmatprep.subr.mxu0 0.0
  %3233 = vmatpush1.msra.mxu0 %v3127
  %3234 = vmatprep.subr.mxu0 0.0
  %3235 = vmatpush1.msra.mxu0 %v3126
  %3236 = vmatprep.subr.mxu0 0.0
  %3237 = vmatpush1.msra.mxu0 %v3125
  %3238 = vmatprep.subr.mxu0 0.0
  %3239 = vmatpush1.msra.mxu0 %v3124
  %3240 = vmatprep.subr.mxu0 0.0
  %3241 = vmatpush1.msra.mxu0 %v3123
  %3242 = vmatprep.subr.mxu0 0.0
  %3243 = vmatpush1.msra.mxu0 %v3122
  %3244 = vmatprep.subr.mxu0 0.0
  %3245 = vmatpush1.msra.mxu0 %v3121
  %3246 = vmatprep.subr.mxu0 0.0
  %3247 = vmatpush1.msra.mxu0 %v3120
  %3248 = vmatprep.subr.mxu0 0.0
  %3249 = vmatpush1.msra.mxu0 %v3119
  %3250 = vmatprep.subr.mxu0 0.0
  %3251 = vmatpush1.msra.mxu0 %v3118
  %3252 = vmatprep.subr.mxu0 0.0
  %3253 = vmatpush1.msra.mxu0 %v3117
  %3254 = vmatprep.subr.mxu0 0.0
  %3255 = vmatpush1.msra.mxu0 %v3116
  %3256 = vmatprep.subr.mxu0 0.0
  %3257 = vmatpush1.msra.mxu0 %v3115
  %3258 = vmatprep.subr.mxu0 0.0
  %3259 = vmatpush1.msra.mxu0 %v3114
  %3260 = vmatprep.subr.mxu0 0.0
  %3261 = vmatpush1.msra.mxu0 %v3113
  %3262 = vmatprep.subr.mxu0 0.0
  %3263 = vmatpush2.msra.mxu0 0.0
  %3264 = vmatprep.subr.mxu0 0.0
  %3265 = vmatpush2.msra.mxu0 0.0
  %3266 = vmatprep.subr.mxu0 0.0
  %3267 = vmatpush2.msra.mxu0 0.0
  %3268 = vmatprep.subr.mxu0 0.0
  %3269 = vmatpush2.msra.mxu0 0.0
  %3270 = vmatprep.subr.mxu0 0.0
  %3271 = vmatpush2.msra.mxu0 0.0
  %3272 = vmatprep.subr.mxu0 0.0
  %3273 = vmatpush2.msra.mxu0 0.0
  %3274 = vmatprep.subr.mxu0 0.0
  %3275 = vmatpush2.msra.mxu0 0.0
  %3276 = vmatprep.subr.mxu0 0.0
  %3277 = vmatpush2.msra.mxu0 0.0
  %3278 = vmatprep.subr.mxu0 0.0
  %3279 = vmatpush2.msra.mxu0 0.0
  %3280 = vmatprep.subr.mxu0 0.0
  %3281 = vmatpush2.msra.mxu0 0.0
  %3282 = vmatprep.subr.mxu0 0.0
  %3283 = vmatpush2.msra.mxu0 0.0
  %3284 = vmatprep.subr.mxu0 0.0
  %3285 = vmatpush2.msra.mxu0 0.0
  %3286 = vmatprep.subr.mxu0 0.0
  %3287 = vmatpush2.msra.mxu0 0.0
  %3288 = vmatprep.subr.mxu0 0.0
  %3289 = vmatpush2.msra.mxu0 0.0
  %3290 = vmatprep.subr.mxu0 0.0
  %3291 = vmatpush2.msra.mxu0 0.0
  %3292 = vmatprep.subr.mxu0 0.0
  %3293 = vmatpush2.msra.mxu0 0.0
  %3294 = vmatprep.mubr.f32.mxu0 0.0
  %3295 = vmatmul.mubr.f32.gmra.mxu0 %v3212
  %v3296 = vpop.f32.mrf.mxu0
  %v3297 = vadd.f32 0.0, %v3296
  %v3298 = vpop.f32.mrf.mxu0
  %3299 = vmatprep.mubr.f32.mxu0 0.0
  %3300 = vmatmul.mubr.f32.gmra.mxu0 %v3217
  %v3301 = vpop.f32.mrf.mxu0
  %v3302 = vadd.f32 0.0, %v3301
  %v3303 = vpop.f32.mrf.mxu0
  %3304 = vmatprep.mubr.f32.mxu0 0.0
  %3305 = vmatmul.mubr.f32.gmra.mxu0 %v3222
  %v3306 = vpop.f32.mrf.mxu0
  %v3307 = vadd.f32 0.0, %v3306
  %v3308 = vpop.f32.mrf.mxu0
  %3309 = vmatprep.mubr.f32.mxu0 0.0
  %3310 = vmatmul.mubr.f32.gmra.mxu0 %v3227
  %v3311 = vpop.f32.mrf.mxu0
  %v3312 = vadd.f32 0.0, %v3311
  %v3313 = vpop.f32.mrf.mxu0
  %3314 = vdwg.mxu0
  %v3315 = vld [vmem:[%s43] sm:$0xff]
  %v3316 = vld [vmem:[%s43 + $0x8] sm:$0xff]
  %v3317 = vld [vmem:[%s43 + $0x10] sm:$0xff]
  %v3318 = vld [vmem:[%s43 + $0x18] sm:$0xff]
  %v3320 = vsel %vm152, %v3315, 0
  %v3323 = vsel %vm152, %v3316, 0
  %v3326 = vsel %vm152, %v3317, 0
  %v3329 = vsel %vm152, %v3318, 0
  %3331 = vmatprep.subr.mxu0 0.0
  %3332 = vmatpush1.msra.mxu0 0.0
  %3333 = vmatprep.subr.mxu0 0.0
  %3334 = vmatpush1.msra.mxu0 0.0
  %3335 = vmatprep.subr.mxu0 0.0
  %3336 = vmatpush1.msra.mxu0 0.0
  %3337 = vmatprep.subr.mxu0 0.0
  %3338 = vmatpush1.msra.mxu0 0.0
  %3339 = vmatprep.subr.mxu0 0.0
  %3340 = vmatpush1.msra.mxu0 0.0
  %3341 = vmatprep.subr.mxu0 0.0
  %3342 = vmatpush1.msra.mxu0 0.0
  %3343 = vmatprep.subr.mxu0 0.0
  %3344 = vmatpush1.msra.mxu0 0.0
  %3345 = vmatprep.subr.mxu0 0.0
  %3346 = vmatpush1.msra.mxu0 0.0
  %3347 = vmatprep.subr.mxu0 0.0
  %3348 = vmatpush1.msra.mxu0 0.0
  %3349 = vmatprep.subr.mxu0 0.0
  %3350 = vmatpush1.msra.mxu0 0.0
  %3351 = vmatprep.subr.mxu0 0.0
  %3352 = vmatpush1.msra.mxu0 0.0
  %3353 = vmatprep.subr.mxu0 0.0
  %3354 = vmatpush1.msra.mxu0 0.0
  %3355 = vmatprep.subr.mxu0 0.0
  %3356 = vmatpush1.msra.mxu0 %v3312
  %3357 = vmatprep.subr.mxu0 0.0
  %3358 = vmatpush1.msra.mxu0 %v3307
  %3359 = vmatprep.subr.mxu0 0.0
  %3360 = vmatpush1.msra.mxu0 %v3302
  %3361 = vmatprep.subr.mxu0 0.0
  %3362 = vmatpush1.msra.mxu0 %v3297
  %3363 = vmatprep.subr.mxu0 0.0
  %3364 = vmatpush2.msra.mxu0 0.0
  %3365 = vmatprep.subr.mxu0 0.0
  %3366 = vmatpush2.msra.mxu0 0.0
  %3367 = vmatprep.subr.mxu0 0.0
  %3368 = vmatpush2.msra.mxu0 0.0
  %3369 = vmatprep.subr.mxu0 0.0
  %3370 = vmatpush2.msra.mxu0 0.0
  %3371 = vmatprep.subr.mxu0 0.0
  %3372 = vmatpush2.msra.mxu0 0.0
  %3373 = vmatprep.subr.mxu0 0.0
  %3374 = vmatpush2.msra.mxu0 0.0
  %3375 = vmatprep.subr.mxu0 0.0
  %3376 = vmatpush2.msra.mxu0 0.0
  %3377 = vmatprep.subr.mxu0 0.0
  %3378 = vmatpush2.msra.mxu0 0.0
  %3379 = vmatprep.subr.mxu0 0.0
  %3380 = vmatpush2.msra.mxu0 0.0
  %3381 = vmatprep.subr.mxu0 0.0
  %3382 = vmatpush2.msra.mxu0 0.0
  %3383 = vmatprep.subr.mxu0 0.0
  %3384 = vmatpush2.msra.mxu0 0.0
  %3385 = vmatprep.subr.mxu0 0.0
  %3386 = vmatpush2.msra.mxu0 0.0
  %3387 = vmatprep.subr.mxu0 0.0
  %3388 = vmatpush2.msra.mxu0 0.0
  %3389 = vmatprep.subr.mxu0 0.0
  %3390 = vmatpush2.msra.mxu0 0.0
  %3391 = vmatprep.subr.mxu0 0.0
  %3392 = vmatpush2.msra.mxu0 0.0
  %3393 = vmatprep.subr.mxu0 0.0
  %3394 = vmatpush2.msra.mxu0 0.0
  %3395 = vmatprep.mubr.f32.mxu0 0.0
  %3396 = vmatmul.mubr.f32.gmra.mxu0 %v3320
  %v3397 = vpop.f32.mrf.mxu0
  %v3398 = vadd.f32 0.0, %v3397
  %v3399 = vpop.f32.mrf.mxu0
  %3400 = vmatprep.mubr.f32.mxu0 0.0
  %3401 = vmatmul.mubr.f32.gmra.mxu0 %v3323
  %v3402 = vpop.f32.mrf.mxu0
  %v3403 = vadd.f32 0.0, %v3402
  %v3404 = vpop.f32.mrf.mxu0
  %3405 = vmatprep.mubr.f32.mxu0 0.0
  %3406 = vmatmul.mubr.f32.gmra.mxu0 %v3326
  %v3407 = vpop.f32.mrf.mxu0
  %v3408 = vadd.f32 0.0, %v3407
  %v3409 = vpop.f32.mrf.mxu0
  %3410 = vmatprep.mubr.f32.mxu0 0.0
  %3411 = vmatmul.mubr.f32.gmra.mxu0 %v3329
  %v3412 = vpop.f32.mrf.mxu0
  %v3413 = vadd.f32 0.0, %v3412
  %v3414 = vpop.f32.mrf.mxu0
  %3415 = vdwg.mxu0
  %3416 = vmatprep.subr.mxu0 0.0
  %3417 = vmatpush1.msra.mxu0 %v3128
  %3418 = vmatprep.subr.mxu0 0.0
  %3419 = vmatpush1.msra.mxu0 %v3127
  %3420 = vmatprep.subr.mxu0 0.0
  %3421 = vmatpush1.msra.mxu0 %v3126
  %3422 = vmatprep.subr.mxu0 0.0
  %3423 = vmatpush1.msra.mxu0 %v3125
  %3424 = vmatprep.subr.mxu0 0.0
  %3425 = vmatpush1.msra.mxu0 %v3124
  %3426 = vmatprep.subr.mxu0 0.0
  %3427 = vmatpush1.msra.mxu0 %v3123
  %3428 = vmatprep.subr.mxu0 0.0
  %3429 = vmatpush1.msra.mxu0 %v3122
  %3430 = vmatprep.subr.mxu0 0.0
  %3431 = vmatpush1.msra.mxu0 %v3121
  %3432 = vmatprep.subr.mxu0 0.0
  %3433 = vmatpush1.msra.mxu0 %v3120
  %3434 = vmatprep.subr.mxu0 0.0
  %3435 = vmatpush1.msra.mxu0 %v3119
  %3436 = vmatprep.subr.mxu0 0.0
  %3437 = vmatpush1.msra.mxu0 %v3118
  %3438 = vmatprep.subr.mxu0 0.0
  %3439 = vmatpush1.msra.mxu0 %v3117
  %3440 = vmatprep.subr.mxu0 0.0
  %3441 = vmatpush1.msra.mxu0 %v3116
  %3442 = vmatprep.subr.mxu0 0.0
  %3443 = vmatpush1.msra.mxu0 %v3115
  %3444 = vmatprep.subr.mxu0 0.0
  %3445 = vmatpush1.msra.mxu0 %v3114
  %3446 = vmatprep.subr.mxu0 0.0
  %3447 = vmatpush1.msra.mxu0 %v3113
  %3448 = vmatprep.subr.mxu0 0.0
  %3449 = vmatpush2.msra.mxu0 0.0
  %3450 = vmatprep.subr.mxu0 0.0
  %3451 = vmatpush2.msra.mxu0 0.0
  %3452 = vmatprep.subr.mxu0 0.0
  %3453 = vmatpush2.msra.mxu0 0.0
  %3454 = vmatprep.subr.mxu0 0.0
  %3455 = vmatpush2.msra.mxu0 0.0
  %3456 = vmatprep.subr.mxu0 0.0
  %3457 = vmatpush2.msra.mxu0 0.0
  %3458 = vmatprep.subr.mxu0 0.0
  %3459 = vmatpush2.msra.mxu0 0.0
  %3460 = vmatprep.subr.mxu0 0.0
  %3461 = vmatpush2.msra.mxu0 0.0
  %3462 = vmatprep.subr.mxu0 0.0
  %3463 = vmatpush2.msra.mxu0 0.0
  %3464 = vmatprep.subr.mxu0 0.0
  %3465 = vmatpush2.msra.mxu0 0.0
  %3466 = vmatprep.subr.mxu0 0.0
  %3467 = vmatpush2.msra.mxu0 0.0
  %3468 = vmatprep.subr.mxu0 0.0
  %3469 = vmatpush2.msra.mxu0 0.0
  %3470 = vmatprep.subr.mxu0 0.0
  %3471 = vmatpush2.msra.mxu0 0.0
  %3472 = vmatprep.subr.mxu0 0.0
  %3473 = vmatpush2.msra.mxu0 0.0
  %3474 = vmatprep.subr.mxu0 0.0
  %3475 = vmatpush2.msra.mxu0 0.0
  %3476 = vmatprep.subr.mxu0 0.0
  %3477 = vmatpush2.msra.mxu0 0.0
  %3478 = vmatprep.subr.mxu0 0.0
  %3479 = vmatpush2.msra.mxu0 0.0
  %3480 = vmatprep.mubr.f32.mxu0 0.0
  %3481 = vmatmul.mubr.f32.gmra.mxu0 %v3398
  %v3482 = vpop.f32.mrf.mxu0
  %v3483 = vadd.f32 0.0, %v3482
  %v3484 = vpop.f32.mrf.mxu0
  %3485 = vmatprep.mubr.f32.mxu0 0.0
  %3486 = vmatmul.mubr.f32.gmra.mxu0 %v3403
  %v3487 = vpop.f32.mrf.mxu0
  %v3488 = vadd.f32 0.0, %v3487
  %v3489 = vpop.f32.mrf.mxu0
  %3490 = vmatprep.mubr.f32.mxu0 0.0
  %3491 = vmatmul.mubr.f32.gmra.mxu0 %v3408
  %v3492 = vpop.f32.mrf.mxu0
  %v3493 = vadd.f32 0.0, %v3492
  %v3494 = vpop.f32.mrf.mxu0
  %3495 = vmatprep.mubr.f32.mxu0 0.0
  %3496 = vmatmul.mubr.f32.gmra.mxu0 %v3413
  %v3497 = vpop.f32.mrf.mxu0
  %v3498 = vadd.f32 0.0, %v3497
  %v3499 = vpop.f32.mrf.mxu0
  %3500 = vdwg.mxu0
  %vm3501 = vcmp.gt.f32.partialorder %v3483, 0.0
  %vm3502 = vcmp.gt.f32.partialorder %v3488, 0.0
  %vm3503 = vcmp.gt.f32.partialorder %v3493, 0.0
  %vm3504 = vcmp.gt.f32.partialorder %v3498, 0.0
  %v3505 = vmul.f32 %v3483, 0.2
  %v3506 = vmul.f32 %v3488, 0.2
  %v3507 = vmul.f32 %v3493, 0.2
  %v3508 = vmul.f32 %v3498, 0.2
  %v3509 = vsel %vm3501, %v3483, %v3505
  %v3510 = vsel %vm3502, %v3488, %v3506
  %v3511 = vsel %vm3503, %v3493, %v3507
  %v3512 = vsel %vm3504, %v3498, %v3508
  %v3513 = vld [vmem:[%s45] sm:$0xff]
  %v3514 = vld [vmem:[%s45 + $0x8] sm:$0xff]
  %v3515 = vld [vmem:[%s45 + $0x10] sm:$0xff]
  %v3516 = vld [vmem:[%s45 + $0x18] sm:$0xff]
  %v3518 = vsel %vm152, %v3513, 0
  %v3521 = vsel %vm152, %v3514, 0
  %v3524 = vsel %vm152, %v3515, 0
  %v3527 = vsel %vm152, %v3516, 0
  %3529 = vmatprep.subr.mxu0 0.0
  %3530 = vmatpush1.msra.mxu0 0.0
  %3531 = vmatprep.subr.mxu0 0.0
  %3532 = vmatpush1.msra.mxu0 0.0
  %3533 = vmatprep.subr.mxu0 0.0
  %3534 = vmatpush1.msra.mxu0 0.0
  %3535 = vmatprep.subr.mxu0 0.0
  %3536 = vmatpush1.msra.mxu0 0.0
  %3537 = vmatprep.subr.mxu0 0.0
  %3538 = vmatpush1.msra.mxu0 0.0
  %3539 = vmatprep.subr.mxu0 0.0
  %3540 = vmatpush1.msra.mxu0 0.0
  %3541 = vmatprep.subr.mxu0 0.0
  %3542 = vmatpush1.msra.mxu0 0.0
  %3543 = vmatprep.subr.mxu0 0.0
  %3544 = vmatpush1.msra.mxu0 0.0
  %3545 = vmatprep.subr.mxu0 0.0
  %3546 = vmatpush1.msra.mxu0 0.0
  %3547 = vmatprep.subr.mxu0 0.0
  %3548 = vmatpush1.msra.mxu0 0.0
  %3549 = vmatprep.subr.mxu0 0.0
  %3550 = vmatpush1.msra.mxu0 0.0
  %3551 = vmatprep.subr.mxu0 0.0
  %3552 = vmatpush1.msra.mxu0 0.0
  %3553 = vmatprep.subr.mxu0 0.0
  %3554 = vmatpush1.msra.mxu0 %v3512
  %3555 = vmatprep.subr.mxu0 0.0
  %3556 = vmatpush1.msra.mxu0 %v3511
  %3557 = vmatprep.subr.mxu0 0.0
  %3558 = vmatpush1.msra.mxu0 %v3510
  %3559 = vmatprep.subr.mxu0 0.0
  %3560 = vmatpush1.msra.mxu0 %v3509
  %3561 = vmatprep.subr.mxu0 0.0
  %3562 = vmatpush2.msra.mxu0 0.0
  %3563 = vmatprep.subr.mxu0 0.0
  %3564 = vmatpush2.msra.mxu0 0.0
  %3565 = vmatprep.subr.mxu0 0.0
  %3566 = vmatpush2.msra.mxu0 0.0
  %3567 = vmatprep.subr.mxu0 0.0
  %3568 = vmatpush2.msra.mxu0 0.0
  %3569 = vmatprep.subr.mxu0 0.0
  %3570 = vmatpush2.msra.mxu0 0.0
  %3571 = vmatprep.subr.mxu0 0.0
  %3572 = vmatpush2.msra.mxu0 0.0
  %3573 = vmatprep.subr.mxu0 0.0
  %3574 = vmatpush2.msra.mxu0 0.0
  %3575 = vmatprep.subr.mxu0 0.0
  %3576 = vmatpush2.msra.mxu0 0.0
  %3577 = vmatprep.subr.mxu0 0.0
  %3578 = vmatpush2.msra.mxu0 0.0
  %3579 = vmatprep.subr.mxu0 0.0
  %3580 = vmatpush2.msra.mxu0 0.0
  %3581 = vmatprep.subr.mxu0 0.0
  %3582 = vmatpush2.msra.mxu0 0.0
  %3583 = vmatprep.subr.mxu0 0.0
  %3584 = vmatpush2.msra.mxu0 0.0
  %3585 = vmatprep.subr.mxu0 0.0
  %3586 = vmatpush2.msra.mxu0 0.0
  %3587 = vmatprep.subr.mxu0 0.0
  %3588 = vmatpush2.msra.mxu0 0.0
  %3589 = vmatprep.subr.mxu0 0.0
  %3590 = vmatpush2.msra.mxu0 0.0
  %3591 = vmatprep.subr.mxu0 0.0
  %3592 = vmatpush2.msra.mxu0 0.0
  %3593 = vmatprep.mubr.f32.mxu0 0.0
  %3594 = vmatmul.mubr.f32.gmra.mxu0 %v3518
  %v3595 = vpop.f32.mrf.mxu0
  %v3596 = vadd.f32 0.0, %v3595
  %v3597 = vpop.f32.mrf.mxu0
  %3598 = vmatprep.mubr.f32.mxu0 0.0
  %3599 = vmatmul.mubr.f32.gmra.mxu0 %v3521
  %v3600 = vpop.f32.mrf.mxu0
  %v3601 = vadd.f32 0.0, %v3600
  %v3602 = vpop.f32.mrf.mxu0
  %3603 = vmatprep.mubr.f32.mxu0 0.0
  %3604 = vmatmul.mubr.f32.gmra.mxu0 %v3524
  %v3605 = vpop.f32.mrf.mxu0
  %v3606 = vadd.f32 0.0, %v3605
  %v3607 = vpop.f32.mrf.mxu0
  %3608 = vmatprep.mubr.f32.mxu0 0.0
  %3609 = vmatmul.mubr.f32.gmra.mxu0 %v3527
  %v3610 = vpop.f32.mrf.mxu0
  %v3611 = vadd.f32 0.0, %v3610
  %v3612 = vpop.f32.mrf.mxu0
  %3613 = vdwg.mxu0
  %3614 = vmatprep.subr.mxu0 0.0
  %3615 = vmatpush1.msra.mxu0 %v3128
  %3616 = vmatprep.subr.mxu0 0.0
  %3617 = vmatpush1.msra.mxu0 %v3127
  %3618 = vmatprep.subr.mxu0 0.0
  %3619 = vmatpush1.msra.mxu0 %v3126
  %3620 = vmatprep.subr.mxu0 0.0
  %3621 = vmatpush1.msra.mxu0 %v3125
  %3622 = vmatprep.subr.mxu0 0.0
  %3623 = vmatpush1.msra.mxu0 %v3124
  %3624 = vmatprep.subr.mxu0 0.0
  %3625 = vmatpush1.msra.mxu0 %v3123
  %3626 = vmatprep.subr.mxu0 0.0
  %3627 = vmatpush1.msra.mxu0 %v3122
  %3628 = vmatprep.subr.mxu0 0.0
  %3629 = vmatpush1.msra.mxu0 %v3121
  %3630 = vmatprep.subr.mxu0 0.0
  %3631 = vmatpush1.msra.mxu0 %v3120
  %3632 = vmatprep.subr.mxu0 0.0
  %3633 = vmatpush1.msra.mxu0 %v3119
  %3634 = vmatprep.subr.mxu0 0.0
  %3635 = vmatpush1.msra.mxu0 %v3118
  %3636 = vmatprep.subr.mxu0 0.0
  %3637 = vmatpush1.msra.mxu0 %v3117
  %3638 = vmatprep.subr.mxu0 0.0
  %3639 = vmatpush1.msra.mxu0 %v3116
  %3640 = vmatprep.subr.mxu0 0.0
  %3641 = vmatpush1.msra.mxu0 %v3115
  %3642 = vmatprep.subr.mxu0 0.0
  %3643 = vmatpush1.msra.mxu0 %v3114
  %3644 = vmatprep.subr.mxu0 0.0
  %3645 = vmatpush1.msra.mxu0 %v3113
  %3646 = vmatprep.subr.mxu0 0.0
  %3647 = vmatpush2.msra.mxu0 0.0
  %3648 = vmatprep.subr.mxu0 0.0
  %3649 = vmatpush2.msra.mxu0 0.0
  %3650 = vmatprep.subr.mxu0 0.0
  %3651 = vmatpush2.msra.mxu0 0.0
  %3652 = vmatprep.subr.mxu0 0.0
  %3653 = vmatpush2.msra.mxu0 0.0
  %3654 = vmatprep.subr.mxu0 0.0
  %3655 = vmatpush2.msra.mxu0 0.0
  %3656 = vmatprep.subr.mxu0 0.0
  %3657 = vmatpush2.msra.mxu0 0.0
  %3658 = vmatprep.subr.mxu0 0.0
  %3659 = vmatpush2.msra.mxu0 0.0
  %3660 = vmatprep.subr.mxu0 0.0
  %3661 = vmatpush2.msra.mxu0 0.0
  %3662 = vmatprep.subr.mxu0 0.0
  %3663 = vmatpush2.msra.mxu0 0.0
  %3664 = vmatprep.subr.mxu0 0.0
  %3665 = vmatpush2.msra.mxu0 0.0
  %3666 = vmatprep.subr.mxu0 0.0
  %3667 = vmatpush2.msra.mxu0 0.0
  %3668 = vmatprep.subr.mxu0 0.0
  %3669 = vmatpush2.msra.mxu0 0.0
  %3670 = vmatprep.subr.mxu0 0.0
  %3671 = vmatpush2.msra.mxu0 0.0
  %3672 = vmatprep.subr.mxu0 0.0
  %3673 = vmatpush2.msra.mxu0 0.0
  %3674 = vmatprep.subr.mxu0 0.0
  %3675 = vmatpush2.msra.mxu0 0.0
  %3676 = vmatprep.subr.mxu0 0.0
  %3677 = vmatpush2.msra.mxu0 0.0
  %3678 = vmatprep.mubr.f32.mxu0 0.0
  %3679 = vmatmul.mubr.f32.gmra.mxu0 %v3596
  %v3680 = vpop.f32.mrf.mxu0
  %v3681 = vadd.f32 0.0, %v3680
  %v3682 = vpop.f32.mrf.mxu0
  %3683 = vmatprep.mubr.f32.mxu0 0.0
  %3684 = vmatmul.mubr.f32.gmra.mxu0 %v3601
  %v3685 = vpop.f32.mrf.mxu0
  %v3686 = vadd.f32 0.0, %v3685
  %v3687 = vpop.f32.mrf.mxu0
  %3688 = vmatprep.mubr.f32.mxu0 0.0
  %3689 = vmatmul.mubr.f32.gmra.mxu0 %v3606
  %v3690 = vpop.f32.mrf.mxu0
  %v3691 = vadd.f32 0.0, %v3690
  %v3692 = vpop.f32.mrf.mxu0
  %3693 = vmatprep.mubr.f32.mxu0 0.0
  %3694 = vmatmul.mubr.f32.gmra.mxu0 %v3611
  %v3695 = vpop.f32.mrf.mxu0
  %v3696 = vadd.f32 0.0, %v3695
  %v3697 = vpop.f32.mrf.mxu0
  %3698 = vdwg.mxu0
  %v3699 = vadd.f32 %v3297, %v3681
  %v3700 = vadd.f32 %v3302, %v3686
  %v3701 = vadd.f32 %v3307, %v3691
  %v3702 = vadd.f32 %v3312, %v3696
  %s3703 = scalar_lea.vmem %s43, 32
  %v3704 = vld [vmem:[%s3703] sm:$0xff]
  %v3705 = vld [vmem:[%s3703 + $0x8] sm:$0xff]
  %v3706 = vld [vmem:[%s3703 + $0x10] sm:$0xff]
  %v3707 = vld [vmem:[%s3703 + $0x18] sm:$0xff]
  %v3709 = vsel %vm152, %v3704, 0
  %v3712 = vsel %vm152, %v3705, 0
  %v3715 = vsel %vm152, %v3706, 0
  %v3718 = vsel %vm152, %v3707, 0
  %3720 = vmatprep.subr.mxu0 0.0
  %3721 = vmatpush1.msra.mxu0 0.0
  %3722 = vmatprep.subr.mxu0 0.0
  %3723 = vmatpush1.msra.mxu0 0.0
  %3724 = vmatprep.subr.mxu0 0.0
  %3725 = vmatpush1.msra.mxu0 0.0
  %3726 = vmatprep.subr.mxu0 0.0
  %3727 = vmatpush1.msra.mxu0 0.0
  %3728 = vmatprep.subr.mxu0 0.0
  %3729 = vmatpush1.msra.mxu0 0.0
  %3730 = vmatprep.subr.mxu0 0.0
  %3731 = vmatpush1.msra.mxu0 0.0
  %3732 = vmatprep.subr.mxu0 0.0
  %3733 = vmatpush1.msra.mxu0 0.0
  %3734 = vmatprep.subr.mxu0 0.0
  %3735 = vmatpush1.msra.mxu0 0.0
  %3736 = vmatprep.subr.mxu0 0.0
  %3737 = vmatpush1.msra.mxu0 0.0
  %3738 = vmatprep.subr.mxu0 0.0
  %3739 = vmatpush1.msra.mxu0 0.0
  %3740 = vmatprep.subr.mxu0 0.0
  %3741 = vmatpush1.msra.mxu0 0.0
  %3742 = vmatprep.subr.mxu0 0.0
  %3743 = vmatpush1.msra.mxu0 0.0
  %3744 = vmatprep.subr.mxu0 0.0
  %3745 = vmatpush1.msra.mxu0 %v3702
  %3746 = vmatprep.subr.mxu0 0.0
  %3747 = vmatpush1.msra.mxu0 %v3701
  %3748 = vmatprep.subr.mxu0 0.0
  %3749 = vmatpush1.msra.mxu0 %v3700
  %3750 = vmatprep.subr.mxu0 0.0
  %3751 = vmatpush1.msra.mxu0 %v3699
  %3752 = vmatprep.subr.mxu0 0.0
  %3753 = vmatpush2.msra.mxu0 0.0
  %3754 = vmatprep.subr.mxu0 0.0
  %3755 = vmatpush2.msra.mxu0 0.0
  %3756 = vmatprep.subr.mxu0 0.0
  %3757 = vmatpush2.msra.mxu0 0.0
  %3758 = vmatprep.subr.mxu0 0.0
  %3759 = vmatpush2.msra.mxu0 0.0
  %3760 = vmatprep.subr.mxu0 0.0
  %3761 = vmatpush2.msra.mxu0 0.0
  %3762 = vmatprep.subr.mxu0 0.0
  %3763 = vmatpush2.msra.mxu0 0.0
  %3764 = vmatprep.subr.mxu0 0.0
  %3765 = vmatpush2.msra.mxu0 0.0
  %3766 = vmatprep.subr.mxu0 0.0
  %3767 = vmatpush2.msra.mxu0 0.0
  %3768 = vmatprep.subr.mxu0 0.0
  %3769 = vmatpush2.msra.mxu0 0.0
  %3770 = vmatprep.subr.mxu0 0.0
  %3771 = vmatpush2.msra.mxu0 0.0
  %3772 = vmatprep.subr.mxu0 0.0
  %3773 = vmatpush2.msra.mxu0 0.0
  %3774 = vmatprep.subr.mxu0 0.0
  %3775 = vmatpush2.msra.mxu0 0.0
  %3776 = vmatprep.subr.mxu0 0.0
  %3777 = vmatpush2.msra.mxu0 0.0
  %3778 = vmatprep.subr.mxu0 0.0
  %3779 = vmatpush2.msra.mxu0 0.0
  %3780 = vmatprep.subr.mxu0 0.0
  %3781 = vmatpush2.msra.mxu0 0.0
  %3782 = vmatprep.subr.mxu0 0.0
  %3783 = vmatpush2.msra.mxu0 0.0
  %3784 = vmatprep.mubr.f32.mxu0 0.0
  %3785 = vmatmul.mubr.f32.gmra.mxu0 %v3709
  %v3786 = vpop.f32.mrf.mxu0
  %v3787 = vadd.f32 0.0, %v3786
  %v3788 = vpop.f32.mrf.mxu0
  %3789 = vmatprep.mubr.f32.mxu0 0.0
  %3790 = vmatmul.mubr.f32.gmra.mxu0 %v3712
  %v3791 = vpop.f32.mrf.mxu0
  %v3792 = vadd.f32 0.0, %v3791
  %v3793 = vpop.f32.mrf.mxu0
  %3794 = vmatprep.mubr.f32.mxu0 0.0
  %3795 = vmatmul.mubr.f32.gmra.mxu0 %v3715
  %v3796 = vpop.f32.mrf.mxu0
  %v3797 = vadd.f32 0.0, %v3796
  %v3798 = vpop.f32.mrf.mxu0
  %3799 = vmatprep.mubr.f32.mxu0 0.0
  %3800 = vmatmul.mubr.f32.gmra.mxu0 %v3718
  %v3801 = vpop.f32.mrf.mxu0
  %v3802 = vadd.f32 0.0, %v3801
  %v3803 = vpop.f32.mrf.mxu0
  %3804 = vdwg.mxu0
  %3805 = vmatprep.subr.mxu0 0.0
  %3806 = vmatpush1.msra.mxu0 %v3128
  %3807 = vmatprep.subr.mxu0 0.0
  %3808 = vmatpush1.msra.mxu0 %v3127
  %3809 = vmatprep.subr.mxu0 0.0
  %3810 = vmatpush1.msra.mxu0 %v3126
  %3811 = vmatprep.subr.mxu0 0.0
  %3812 = vmatpush1.msra.mxu0 %v3125
  %3813 = vmatprep.subr.mxu0 0.0
  %3814 = vmatpush1.msra.mxu0 %v3124
  %3815 = vmatprep.subr.mxu0 0.0
  %3816 = vmatpush1.msra.mxu0 %v3123
  %3817 = vmatprep.subr.mxu0 0.0
  %3818 = vmatpush1.msra.mxu0 %v3122
  %3819 = vmatprep.subr.mxu0 0.0
  %3820 = vmatpush1.msra.mxu0 %v3121
  %3821 = vmatprep.subr.mxu0 0.0
  %3822 = vmatpush1.msra.mxu0 %v3120
  %3823 = vmatprep.subr.mxu0 0.0
  %3824 = vmatpush1.msra.mxu0 %v3119
  %3825 = vmatprep.subr.mxu0 0.0
  %3826 = vmatpush1.msra.mxu0 %v3118
  %3827 = vmatprep.subr.mxu0 0.0
  %3828 = vmatpush1.msra.mxu0 %v3117
  %3829 = vmatprep.subr.mxu0 0.0
  %3830 = vmatpush1.msra.mxu0 %v3116
  %3831 = vmatprep.subr.mxu0 0.0
  %3832 = vmatpush1.msra.mxu0 %v3115
  %3833 = vmatprep.subr.mxu0 0.0
  %3834 = vmatpush1.msra.mxu0 %v3114
  %3835 = vmatprep.subr.mxu0 0.0
  %3836 = vmatpush1.msra.mxu0 %v3113
  %3837 = vmatprep.subr.mxu0 0.0
  %3838 = vmatpush2.msra.mxu0 0.0
  %3839 = vmatprep.subr.mxu0 0.0
  %3840 = vmatpush2.msra.mxu0 0.0
  %3841 = vmatprep.subr.mxu0 0.0
  %3842 = vmatpush2.msra.mxu0 0.0
  %3843 = vmatprep.subr.mxu0 0.0
  %3844 = vmatpush2.msra.mxu0 0.0
  %3845 = vmatprep.subr.mxu0 0.0
  %3846 = vmatpush2.msra.mxu0 0.0
  %3847 = vmatprep.subr.mxu0 0.0
  %3848 = vmatpush2.msra.mxu0 0.0
  %3849 = vmatprep.subr.mxu0 0.0
  %3850 = vmatpush2.msra.mxu0 0.0
  %3851 = vmatprep.subr.mxu0 0.0
  %3852 = vmatpush2.msra.mxu0 0.0
  %3853 = vmatprep.subr.mxu0 0.0
  %3854 = vmatpush2.msra.mxu0 0.0
  %3855 = vmatprep.subr.mxu0 0.0
  %3856 = vmatpush2.msra.mxu0 0.0
  %3857 = vmatprep.subr.mxu0 0.0
  %3858 = vmatpush2.msra.mxu0 0.0
  %3859 = vmatprep.subr.mxu0 0.0
  %3860 = vmatpush2.msra.mxu0 0.0
  %3861 = vmatprep.subr.mxu0 0.0
  %3862 = vmatpush2.msra.mxu0 0.0
  %3863 = vmatprep.subr.mxu0 0.0
  %3864 = vmatpush2.msra.mxu0 0.0
  %3865 = vmatprep.subr.mxu0 0.0
  %3866 = vmatpush2.msra.mxu0 0.0
  %3867 = vmatprep.subr.mxu0 0.0
  %3868 = vmatpush2.msra.mxu0 0.0
  %3869 = vmatprep.mubr.f32.mxu0 0.0
  %3870 = vmatmul.mubr.f32.gmra.mxu0 %v3787
  %v3871 = vpop.f32.mrf.mxu0
  %v3872 = vadd.f32 0.0, %v3871
  %v3873 = vpop.f32.mrf.mxu0
  %3874 = vmatprep.mubr.f32.mxu0 0.0
  %3875 = vmatmul.mubr.f32.gmra.mxu0 %v3792
  %v3876 = vpop.f32.mrf.mxu0
  %v3877 = vadd.f32 0.0, %v3876
  %v3878 = vpop.f32.mrf.mxu0
  %3879 = vmatprep.mubr.f32.mxu0 0.0
  %3880 = vmatmul.mubr.f32.gmra.mxu0 %v3797
  %v3881 = vpop.f32.mrf.mxu0
  %v3882 = vadd.f32 0.0, %v3881
  %v3883 = vpop.f32.mrf.mxu0
  %3884 = vmatprep.mubr.f32.mxu0 0.0
  %3885 = vmatmul.mubr.f32.gmra.mxu0 %v3802
  %v3886 = vpop.f32.mrf.mxu0
  %v3887 = vadd.f32 0.0, %v3886
  %v3888 = vpop.f32.mrf.mxu0
  %3889 = vdwg.mxu0
  %vm3890 = vcmp.gt.f32.partialorder %v3872, 0.0
  %vm3891 = vcmp.gt.f32.partialorder %v3877, 0.0
  %vm3892 = vcmp.gt.f32.partialorder %v3882, 0.0
  %vm3893 = vcmp.gt.f32.partialorder %v3887, 0.0
  %v3894 = vmul.f32 %v3872, 0.2
  %v3895 = vmul.f32 %v3877, 0.2
  %v3896 = vmul.f32 %v3882, 0.2
  %v3897 = vmul.f32 %v3887, 0.2
  %v3898 = vsel %vm3890, %v3872, %v3894
  %v3899 = vsel %vm3891, %v3877, %v3895
  %v3900 = vsel %vm3892, %v3882, %v3896
  %v3901 = vsel %vm3893, %v3887, %v3897
  %s3902 = scalar_lea.vmem %s45, 32
  %v3903 = vld [vmem:[%s3902] sm:$0xff]
  %v3904 = vld [vmem:[%s3902 + $0x8] sm:$0xff]
  %v3905 = vld [vmem:[%s3902 + $0x10] sm:$0xff]
  %v3906 = vld [vmem:[%s3902 + $0x18] sm:$0xff]
  %v3908 = vsel %vm152, %v3903, 0
  %v3911 = vsel %vm152, %v3904, 0
  %v3914 = vsel %vm152, %v3905, 0
  %v3917 = vsel %vm152, %v3906, 0
  %3919 = vmatprep.subr.mxu0 0.0
  %3920 = vmatpush1.msra.mxu0 0.0
  %3921 = vmatprep.subr.mxu0 0.0
  %3922 = vmatpush1.msra.mxu0 0.0
  %3923 = vmatprep.subr.mxu0 0.0
  %3924 = vmatpush1.msra.mxu0 0.0
  %3925 = vmatprep.subr.mxu0 0.0
  %3926 = vmatpush1.msra.mxu0 0.0
  %3927 = vmatprep.subr.mxu0 0.0
  %3928 = vmatpush1.msra.mxu0 0.0
  %3929 = vmatprep.subr.mxu0 0.0
  %3930 = vmatpush1.msra.mxu0 0.0
  %3931 = vmatprep.subr.mxu0 0.0
  %3932 = vmatpush1.msra.mxu0 0.0
  %3933 = vmatprep.subr.mxu0 0.0
  %3934 = vmatpush1.msra.mxu0 0.0
  %3935 = vmatprep.subr.mxu0 0.0
  %3936 = vmatpush1.msra.mxu0 0.0
  %3937 = vmatprep.subr.mxu0 0.0
  %3938 = vmatpush1.msra.mxu0 0.0
  %3939 = vmatprep.subr.mxu0 0.0
  %3940 = vmatpush1.msra.mxu0 0.0
  %3941 = vmatprep.subr.mxu0 0.0
  %3942 = vmatpush1.msra.mxu0 0.0
  %3943 = vmatprep.subr.mxu0 0.0
  %3944 = vmatpush1.msra.mxu0 %v3901
  %3945 = vmatprep.subr.mxu0 0.0
  %3946 = vmatpush1.msra.mxu0 %v3900
  %3947 = vmatprep.subr.mxu0 0.0
  %3948 = vmatpush1.msra.mxu0 %v3899
  %3949 = vmatprep.subr.mxu0 0.0
  %3950 = vmatpush1.msra.mxu0 %v3898
  %3951 = vmatprep.subr.mxu0 0.0
  %3952 = vmatpush2.msra.mxu0 0.0
  %3953 = vmatprep.subr.mxu0 0.0
  %3954 = vmatpush2.msra.mxu0 0.0
  %3955 = vmatprep.subr.mxu0 0.0
  %3956 = vmatpush2.msra.mxu0 0.0
  %3957 = vmatprep.subr.mxu0 0.0
  %3958 = vmatpush2.msra.mxu0 0.0
  %3959 = vmatprep.subr.mxu0 0.0
  %3960 = vmatpush2.msra.mxu0 0.0
  %3961 = vmatprep.subr.mxu0 0.0
  %3962 = vmatpush2.msra.mxu0 0.0
  %3963 = vmatprep.subr.mxu0 0.0
  %3964 = vmatpush2.msra.mxu0 0.0
  %3965 = vmatprep.subr.mxu0 0.0
  %3966 = vmatpush2.msra.mxu0 0.0
  %3967 = vmatprep.subr.mxu0 0.0
  %3968 = vmatpush2.msra.mxu0 0.0
  %3969 = vmatprep.subr.mxu0 0.0
  %3970 = vmatpush2.msra.mxu0 0.0
  %3971 = vmatprep.subr.mxu0 0.0
  %3972 = vmatpush2.msra.mxu0 0.0
  %3973 = vmatprep.subr.mxu0 0.0
  %3974 = vmatpush2.msra.mxu0 0.0
  %3975 = vmatprep.subr.mxu0 0.0
  %3976 = vmatpush2.msra.mxu0 0.0
  %3977 = vmatprep.subr.mxu0 0.0
  %3978 = vmatpush2.msra.mxu0 0.0
  %3979 = vmatprep.subr.mxu0 0.0
  %3980 = vmatpush2.msra.mxu0 0.0
  %3981 = vmatprep.subr.mxu0 0.0
  %3982 = vmatpush2.msra.mxu0 0.0
  %3983 = vmatprep.mubr.f32.mxu0 0.0
  %3984 = vmatmul.mubr.f32.gmra.mxu0 %v3908
  %v3985 = vpop.f32.mrf.mxu0
  %v3986 = vadd.f32 0.0, %v3985
  %v3987 = vpop.f32.mrf.mxu0
  %3988 = vmatprep.mubr.f32.mxu0 0.0
  %3989 = vmatmul.mubr.f32.gmra.mxu0 %v3911
  %v3990 = vpop.f32.mrf.mxu0
  %v3991 = vadd.f32 0.0, %v3990
  %v3992 = vpop.f32.mrf.mxu0
  %3993 = vmatprep.mubr.f32.mxu0 0.0
  %3994 = vmatmul.mubr.f32.gmra.mxu0 %v3914
  %v3995 = vpop.f32.mrf.mxu0
  %v3996 = vadd.f32 0.0, %v3995
  %v3997 = vpop.f32.mrf.mxu0
  %3998 = vmatprep.mubr.f32.mxu0 0.0
  %3999 = vmatmul.mubr.f32.gmra.mxu0 %v3917
  %v4000 = vpop.f32.mrf.mxu0
  %v4001 = vadd.f32 0.0, %v4000
  %v4002 = vpop.f32.mrf.mxu0
  %4003 = vdwg.mxu0
  %4004 = vmatprep.subr.mxu0 0.0
  %4005 = vmatpush1.msra.mxu0 %v3128
  %4006 = vmatprep.subr.mxu0 0.0
  %4007 = vmatpush1.msra.mxu0 %v3127
  %4008 = vmatprep.subr.mxu0 0.0
  %4009 = vmatpush1.msra.mxu0 %v3126
  %4010 = vmatprep.subr.mxu0 0.0
  %4011 = vmatpush1.msra.mxu0 %v3125
  %4012 = vmatprep.subr.mxu0 0.0
  %4013 = vmatpush1.msra.mxu0 %v3124
  %4014 = vmatprep.subr.mxu0 0.0
  %4015 = vmatpush1.msra.mxu0 %v3123
  %4016 = vmatprep.subr.mxu0 0.0
  %4017 = vmatpush1.msra.mxu0 %v3122
  %4018 = vmatprep.subr.mxu0 0.0
  %4019 = vmatpush1.msra.mxu0 %v3121
  %4020 = vmatprep.subr.mxu0 0.0
  %4021 = vmatpush1.msra.mxu0 %v3120
  %4022 = vmatprep.subr.mxu0 0.0
  %4023 = vmatpush1.msra.mxu0 %v3119
  %4024 = vmatprep.subr.mxu0 0.0
  %4025 = vmatpush1.msra.mxu0 %v3118
  %4026 = vmatprep.subr.mxu0 0.0
  %4027 = vmatpush1.msra.mxu0 %v3117
  %4028 = vmatprep.subr.mxu0 0.0
  %4029 = vmatpush1.msra.mxu0 %v3116
  %4030 = vmatprep.subr.mxu0 0.0
  %4031 = vmatpush1.msra.mxu0 %v3115
  %4032 = vmatprep.subr.mxu0 0.0
  %4033 = vmatpush1.msra.mxu0 %v3114
  %4034 = vmatprep.subr.mxu0 0.0
  %4035 = vmatpush1.msra.mxu0 %v3113
  %4036 = vmatprep.subr.mxu0 0.0
  %4037 = vmatpush2.msra.mxu0 0.0
  %4038 = vmatprep.subr.mxu0 0.0
  %4039 = vmatpush2.msra.mxu0 0.0
  %4040 = vmatprep.subr.mxu0 0.0
  %4041 = vmatpush2.msra.mxu0 0.0
  %4042 = vmatprep.subr.mxu0 0.0
  %4043 = vmatpush2.msra.mxu0 0.0
  %4044 = vmatprep.subr.mxu0 0.0
  %4045 = vmatpush2.msra.mxu0 0.0
  %4046 = vmatprep.subr.mxu0 0.0
  %4047 = vmatpush2.msra.mxu0 0.0
  %4048 = vmatprep.subr.mxu0 0.0
  %4049 = vmatpush2.msra.mxu0 0.0
  %4050 = vmatprep.subr.mxu0 0.0
  %4051 = vmatpush2.msra.mxu0 0.0
  %4052 = vmatprep.subr.mxu0 0.0
  %4053 = vmatpush2.msra.mxu0 0.0
  %4054 = vmatprep.subr.mxu0 0.0
  %4055 = vmatpush2.msra.mxu0 0.0
  %4056 = vmatprep.subr.mxu0 0.0
  %4057 = vmatpush2.msra.mxu0 0.0
  %4058 = vmatprep.subr.mxu0 0.0
  %4059 = vmatpush2.msra.mxu0 0.0
  %4060 = vmatprep.subr.mxu0 0.0
  %4061 = vmatpush2.msra.mxu0 0.0
  %4062 = vmatprep.subr.mxu0 0.0
  %4063 = vmatpush2.msra.mxu0 0.0
  %4064 = vmatprep.subr.mxu0 0.0
  %4065 = vmatpush2.msra.mxu0 0.0
  %4066 = vmatprep.subr.mxu0 0.0
  %4067 = vmatpush2.msra.mxu0 0.0
  %4068 = vmatprep.mubr.f32.mxu0 0.0
  %4069 = vmatmul.mubr.f32.gmra.mxu0 %v3986
  %v4070 = vpop.f32.mrf.mxu0
  %v4071 = vadd.f32 0.0, %v4070
  %v4072 = vpop.f32.mrf.mxu0
  %4073 = vmatprep.mubr.f32.mxu0 0.0
  %4074 = vmatmul.mubr.f32.gmra.mxu0 %v3991
  %v4075 = vpop.f32.mrf.mxu0
  %v4076 = vadd.f32 0.0, %v4075
  %v4077 = vpop.f32.mrf.mxu0
  %4078 = vmatprep.mubr.f32.mxu0 0.0
  %4079 = vmatmul.mubr.f32.gmra.mxu0 %v3996
  %v4080 = vpop.f32.mrf.mxu0
  %v4081 = vadd.f32 0.0, %v4080
  %v4082 = vpop.f32.mrf.mxu0
  %4083 = vmatprep.mubr.f32.mxu0 0.0
  %4084 = vmatmul.mubr.f32.gmra.mxu0 %v4001
  %v4085 = vpop.f32.mrf.mxu0
  %v4086 = vadd.f32 0.0, %v4085
  %v4087 = vpop.f32.mrf.mxu0
  %4088 = vdwg.mxu0
  %v4089 = vadd.f32 %v3699, %v4071
  %v4090 = vadd.f32 %v3700, %v4076
  %v4091 = vadd.f32 %v3701, %v4081
  %v4092 = vadd.f32 %v3702, %v4086
  %v4093 = vld [vmem:[%s47] sm:$0xff]
  %v4095 = vsel %vm152, %v4093, 0
  %4097 = vmatprep.subr.mxu0 0.0
  %4098 = vmatpush1.msra.mxu0 0.0
  %4099 = vmatprep.subr.mxu0 0.0
  %4100 = vmatpush1.msra.mxu0 0.0
  %4101 = vmatprep.subr.mxu0 0.0
  %4102 = vmatpush1.msra.mxu0 0.0
  %4103 = vmatprep.subr.mxu0 0.0
  %4104 = vmatpush1.msra.mxu0 0.0
  %4105 = vmatprep.subr.mxu0 0.0
  %4106 = vmatpush1.msra.mxu0 0.0
  %4107 = vmatprep.subr.mxu0 0.0
  %4108 = vmatpush1.msra.mxu0 0.0
  %4109 = vmatprep.subr.mxu0 0.0
  %4110 = vmatpush1.msra.mxu0 0.0
  %4111 = vmatprep.subr.mxu0 0.0
  %4112 = vmatpush1.msra.mxu0 0.0
  %4113 = vmatprep.subr.mxu0 0.0
  %4114 = vmatpush1.msra.mxu0 0.0
  %4115 = vmatprep.subr.mxu0 0.0
  %4116 = vmatpush1.msra.mxu0 0.0
  %4117 = vmatprep.subr.mxu0 0.0
  %4118 = vmatpush1.msra.mxu0 0.0
  %4119 = vmatprep.subr.mxu0 0.0
  %4120 = vmatpush1.msra.mxu0 0.0
  %4121 = vmatprep.subr.mxu0 0.0
  %4122 = vmatpush1.msra.mxu0 %v4092
  %4123 = vmatprep.subr.mxu0 0.0
  %4124 = vmatpush1.msra.mxu0 %v4091
  %4125 = vmatprep.subr.mxu0 0.0
  %4126 = vmatpush1.msra.mxu0 %v4090
  %4127 = vmatprep.subr.mxu0 0.0
  %4128 = vmatpush1.msra.mxu0 %v4089
  %4129 = vmatprep.subr.mxu0 0.0
  %4130 = vmatpush2.msra.mxu0 0.0
  %4131 = vmatprep.subr.mxu0 0.0
  %4132 = vmatpush2.msra.mxu0 0.0
  %4133 = vmatprep.subr.mxu0 0.0
  %4134 = vmatpush2.msra.mxu0 0.0
  %4135 = vmatprep.subr.mxu0 0.0
  %4136 = vmatpush2.msra.mxu0 0.0
  %4137 = vmatprep.subr.mxu0 0.0
  %4138 = vmatpush2.msra.mxu0 0.0
  %4139 = vmatprep.subr.mxu0 0.0
  %4140 = vmatpush2.msra.mxu0 0.0
  %4141 = vmatprep.subr.mxu0 0.0
  %4142 = vmatpush2.msra.mxu0 0.0
  %4143 = vmatprep.subr.mxu0 0.0
  %4144 = vmatpush2.msra.mxu0 0.0
  %4145 = vmatprep.subr.mxu0 0.0
  %4146 = vmatpush2.msra.mxu0 0.0
  %4147 = vmatprep.subr.mxu0 0.0
  %4148 = vmatpush2.msra.mxu0 0.0
  %4149 = vmatprep.subr.mxu0 0.0
  %4150 = vmatpush2.msra.mxu0 0.0
  %4151 = vmatprep.subr.mxu0 0.0
  %4152 = vmatpush2.msra.mxu0 0.0
  %4153 = vmatprep.subr.mxu0 0.0
  %4154 = vmatpush2.msra.mxu0 0.0
  %4155 = vmatprep.subr.mxu0 0.0
  %4156 = vmatpush2.msra.mxu0 0.0
  %4157 = vmatprep.subr.mxu0 0.0
  %4158 = vmatpush2.msra.mxu0 0.0
  %4159 = vmatprep.subr.mxu0 0.0
  %4160 = vmatpush2.msra.mxu0 0.0
  %4161 = vmatprep.mubr.f32.mxu0 0.0
  %4162 = vmatmul.mubr.f32.gmra.mxu0 %v4095
  %v4163 = vpop.f32.mrf.mxu0
  %v4164 = vadd.f32 0.0, %v4163
  %v4165 = vpop.f32.mrf.mxu0
  %4166 = vdwg.mxu0
  %4167 = vmatprep.subr.mxu0 0.0
  %4168 = vmatpush1.msra.mxu0 %v3128
  %4169 = vmatprep.subr.mxu0 0.0
  %4170 = vmatpush1.msra.mxu0 %v3127
  %4171 = vmatprep.subr.mxu0 0.0
  %4172 = vmatpush1.msra.mxu0 %v3126
  %4173 = vmatprep.subr.mxu0 0.0
  %4174 = vmatpush1.msra.mxu0 %v3125
  %4175 = vmatprep.subr.mxu0 0.0
  %4176 = vmatpush1.msra.mxu0 %v3124
  %4177 = vmatprep.subr.mxu0 0.0
  %4178 = vmatpush1.msra.mxu0 %v3123
  %4179 = vmatprep.subr.mxu0 0.0
  %4180 = vmatpush1.msra.mxu0 %v3122
  %4181 = vmatprep.subr.mxu0 0.0
  %4182 = vmatpush1.msra.mxu0 %v3121
  %4183 = vmatprep.subr.mxu0 0.0
  %4184 = vmatpush1.msra.mxu0 %v3120
  %4185 = vmatprep.subr.mxu0 0.0
  %4186 = vmatpush1.msra.mxu0 %v3119
  %4187 = vmatprep.subr.mxu0 0.0
  %4188 = vmatpush1.msra.mxu0 %v3118
  %4189 = vmatprep.subr.mxu0 0.0
  %4190 = vmatpush1.msra.mxu0 %v3117
  %4191 = vmatprep.subr.mxu0 0.0
  %4192 = vmatpush1.msra.mxu0 %v3116
  %4193 = vmatprep.subr.mxu0 0.0
  %4194 = vmatpush1.msra.mxu0 %v3115
  %4195 = vmatprep.subr.mxu0 0.0
  %4196 = vmatpush1.msra.mxu0 %v3114
  %4197 = vmatprep.subr.mxu0 0.0
  %4198 = vmatpush1.msra.mxu0 %v3113
  %4199 = vmatprep.subr.mxu0 0.0
  %4200 = vmatpush2.msra.mxu0 0.0
  %4201 = vmatprep.subr.mxu0 0.0
  %4202 = vmatpush2.msra.mxu0 0.0
  %4203 = vmatprep.subr.mxu0 0.0
  %4204 = vmatpush2.msra.mxu0 0.0
  %4205 = vmatprep.subr.mxu0 0.0
  %4206 = vmatpush2.msra.mxu0 0.0
  %4207 = vmatprep.subr.mxu0 0.0
  %4208 = vmatpush2.msra.mxu0 0.0
  %4209 = vmatprep.subr.mxu0 0.0
  %4210 = vmatpush2.msra.mxu0 0.0
  %4211 = vmatprep.subr.mxu0 0.0
  %4212 = vmatpush2.msra.mxu0 0.0
  %4213 = vmatprep.subr.mxu0 0.0
  %4214 = vmatpush2.msra.mxu0 0.0
  %4215 = vmatprep.subr.mxu0 0.0
  %4216 = vmatpush2.msra.mxu0 0.0
  %4217 = vmatprep.subr.mxu0 0.0
  %4218 = vmatpush2.msra.mxu0 0.0
  %4219 = vmatprep.subr.mxu0 0.0
  %4220 = vmatpush2.msra.mxu0 0.0
  %4221 = vmatprep.subr.mxu0 0.0
  %4222 = vmatpush2.msra.mxu0 0.0
  %4223 = vmatprep.subr.mxu0 0.0
  %4224 = vmatpush2.msra.mxu0 0.0
  %4225 = vmatprep.subr.mxu0 0.0
  %4226 = vmatpush2.msra.mxu0 0.0
  %4227 = vmatprep.subr.mxu0 0.0
  %4228 = vmatpush2.msra.mxu0 0.0
  %4229 = vmatprep.subr.mxu0 0.0
  %4230 = vmatpush2.msra.mxu0 0.0
  %4231 = vmatprep.mubr.f32.mxu0 0.0
  %4232 = vmatmul.mubr.f32.gmra.mxu0 %v4164
  %v4233 = vpop.f32.mrf.mxu0
  %v4234 = vadd.f32 0.0, %v4233
  %v4235 = vpop.f32.mrf.mxu0
  %4236 = vdwg.mxu0
  %vm4237 = vcmp.gt.f32.partialorder %v4234, 0.0
  %v4238 = vmul.f32 %v4234, 0.2
  %v4239 = vsel %vm4237, %v4234, %v4238
  %v4240 = vld [vmem:[%s59] sm:$0xff]
  %v4241 = vld [vmem:[%s59 + $0x8] sm:$0xff]
  %v4242 = vld [vmem:[%s59 + $0x10] sm:$0xff]
  %v4243 = vld [vmem:[%s59 + $0x18] sm:$0xff]
  %v4244 = vld [vmem:[%s59 + $0x20] sm:$0xff]
  %v4245 = vld [vmem:[%s59 + $0x28] sm:$0xff]
  %v4246 = vld [vmem:[%s59 + $0x30] sm:$0xff]
  %v4247 = vld [vmem:[%s59 + $0x38] sm:$0xff]
  %v4248 = vld [vmem:[%s59 + $0x40] sm:$0xff]
  %v4249 = vld [vmem:[%s59 + $0x48] sm:$0xff]
  %v4250 = vld [vmem:[%s59 + $0x50] sm:$0xff]
  %v4251 = vld [vmem:[%s59 + $0x58] sm:$0xff]
  %v4252 = vld [vmem:[%s59 + $0x60] sm:$0xff]
  %v4253 = vld [vmem:[%s59 + $0x68] sm:$0xff]
  %v4254 = vld [vmem:[%s59 + $0x70] sm:$0xff]
  %v4255 = vld [vmem:[%s59 + $0x78] sm:$0xff]
  %v4256 = vld [vmem:[%s51] sm:$0xff]
  %v4257 = vld [vmem:[%s51 + $0x8] sm:$0xff]
  %v4258 = vld [vmem:[%s51 + $0x10] sm:$0xff]
  %v4259 = vld [vmem:[%s51 + $0x18] sm:$0xff]
  %v4261 = vsel %vm522, %v4256, 0
  %v4264 = vsel %vm522, %v4257, 0
  %v4267 = vsel %vm522, %v4258, 0
  %v4270 = vsel %vm522, %v4259, 0
  %4272 = vmatprep.subr.mxu0 0.0
  %4273 = vmatpush1.msra.mxu0 0.0
  %4274 = vmatprep.subr.mxu0 0.0
  %4275 = vmatpush1.msra.mxu0 0.0
  %4276 = vmatprep.subr.mxu0 0.0
  %4277 = vmatpush1.msra.mxu0 0.0
  %4278 = vmatprep.subr.mxu0 0.0
  %4279 = vmatpush1.msra.mxu0 0.0
  %4280 = vmatprep.subr.mxu0 0.0
  %4281 = vmatpush1.msra.mxu0 0.0
  %4282 = vmatprep.subr.mxu0 0.0
  %4283 = vmatpush1.msra.mxu0 0.0
  %4284 = vmatprep.subr.mxu0 0.0
  %4285 = vmatpush1.msra.mxu0 0.0
  %4286 = vmatprep.subr.mxu0 0.0
  %4287 = vmatpush1.msra.mxu0 0.0
  %4288 = vmatprep.subr.mxu0 0.0
  %4289 = vmatpush1.msra.mxu0 0.0
  %4290 = vmatprep.subr.mxu0 0.0
  %4291 = vmatpush1.msra.mxu0 0.0
  %4292 = vmatprep.subr.mxu0 0.0
  %4293 = vmatpush1.msra.mxu0 0.0
  %4294 = vmatprep.subr.mxu0 0.0
  %4295 = vmatpush1.msra.mxu0 0.0
  %4296 = vmatprep.subr.mxu0 0.0
  %4297 = vmatpush1.msra.mxu0 0.0
  %4298 = vmatprep.subr.mxu0 0.0
  %4299 = vmatpush1.msra.mxu0 0.0
  %4300 = vmatprep.subr.mxu0 0.0
  %4301 = vmatpush1.msra.mxu0 0.0
  %4302 = vmatprep.subr.mxu0 0.0
  %4303 = vmatpush1.msra.mxu0 %v3112
  %4304 = vmatprep.subr.mxu0 0.0
  %4305 = vmatpush2.msra.mxu0 0.0
  %4306 = vmatprep.subr.mxu0 0.0
  %4307 = vmatpush2.msra.mxu0 0.0
  %4308 = vmatprep.subr.mxu0 0.0
  %4309 = vmatpush2.msra.mxu0 0.0
  %4310 = vmatprep.subr.mxu0 0.0
  %4311 = vmatpush2.msra.mxu0 0.0
  %4312 = vmatprep.subr.mxu0 0.0
  %4313 = vmatpush2.msra.mxu0 0.0
  %4314 = vmatprep.subr.mxu0 0.0
  %4315 = vmatpush2.msra.mxu0 0.0
  %4316 = vmatprep.subr.mxu0 0.0
  %4317 = vmatpush2.msra.mxu0 0.0
  %4318 = vmatprep.subr.mxu0 0.0
  %4319 = vmatpush2.msra.mxu0 0.0
  %4320 = vmatprep.subr.mxu0 0.0
  %4321 = vmatpush2.msra.mxu0 0.0
  %4322 = vmatprep.subr.mxu0 0.0
  %4323 = vmatpush2.msra.mxu0 0.0
  %4324 = vmatprep.subr.mxu0 0.0
  %4325 = vmatpush2.msra.mxu0 0.0
  %4326 = vmatprep.subr.mxu0 0.0
  %4327 = vmatpush2.msra.mxu0 0.0
  %4328 = vmatprep.subr.mxu0 0.0
  %4329 = vmatpush2.msra.mxu0 0.0
  %4330 = vmatprep.subr.mxu0 0.0
  %4331 = vmatpush2.msra.mxu0 0.0
  %4332 = vmatprep.subr.mxu0 0.0
  %4333 = vmatpush2.msra.mxu0 0.0
  %4334 = vmatprep.subr.mxu0 0.0
  %4335 = vmatpush2.msra.mxu0 0.0
  %4336 = vmatprep.mubr.f32.mxu0 0.0
  %4337 = vmatmul.mubr.f32.gmra.mxu0 %v4261
  %v4338 = vpop.f32.mrf.mxu0
  %v4339 = vadd.f32 0.0, %v4338
  %v4340 = vpop.f32.mrf.mxu0
  %4341 = vmatprep.mubr.f32.mxu0 0.0
  %4342 = vmatmul.mubr.f32.gmra.mxu0 %v4264
  %v4343 = vpop.f32.mrf.mxu0
  %v4344 = vadd.f32 0.0, %v4343
  %v4345 = vpop.f32.mrf.mxu0
  %4346 = vmatprep.mubr.f32.mxu0 0.0
  %4347 = vmatmul.mubr.f32.gmra.mxu0 %v4267
  %v4348 = vpop.f32.mrf.mxu0
  %v4349 = vadd.f32 0.0, %v4348
  %v4350 = vpop.f32.mrf.mxu0
  %4351 = vmatprep.mubr.f32.mxu0 0.0
  %4352 = vmatmul.mubr.f32.gmra.mxu0 %v4270
  %v4353 = vpop.f32.mrf.mxu0
  %v4354 = vadd.f32 0.0, %v4353
  %v4355 = vpop.f32.mrf.mxu0
  %4356 = vdwg.mxu0
  %4357 = vmatprep.subr.mxu0 0.0
  %4358 = vmatpush1.msra.mxu0 %v4255
  %4359 = vmatprep.subr.mxu0 0.0
  %4360 = vmatpush1.msra.mxu0 %v4254
  %4361 = vmatprep.subr.mxu0 0.0
  %4362 = vmatpush1.msra.mxu0 %v4253
  %4363 = vmatprep.subr.mxu0 0.0
  %4364 = vmatpush1.msra.mxu0 %v4252
  %4365 = vmatprep.subr.mxu0 0.0
  %4366 = vmatpush1.msra.mxu0 %v4251
  %4367 = vmatprep.subr.mxu0 0.0
  %4368 = vmatpush1.msra.mxu0 %v4250
  %4369 = vmatprep.subr.mxu0 0.0
  %4370 = vmatpush1.msra.mxu0 %v4249
  %4371 = vmatprep.subr.mxu0 0.0
  %4372 = vmatpush1.msra.mxu0 %v4248
  %4373 = vmatprep.subr.mxu0 0.0
  %4374 = vmatpush1.msra.mxu0 %v4247
  %4375 = vmatprep.subr.mxu0 0.0
  %4376 = vmatpush1.msra.mxu0 %v4246
  %4377 = vmatprep.subr.mxu0 0.0
  %4378 = vmatpush1.msra.mxu0 %v4245
  %4379 = vmatprep.subr.mxu0 0.0
  %4380 = vmatpush1.msra.mxu0 %v4244
  %4381 = vmatprep.subr.mxu0 0.0
  %4382 = vmatpush1.msra.mxu0 %v4243
  %4383 = vmatprep.subr.mxu0 0.0
  %4384 = vmatpush1.msra.mxu0 %v4242
  %4385 = vmatprep.subr.mxu0 0.0
  %4386 = vmatpush1.msra.mxu0 %v4241
  %4387 = vmatprep.subr.mxu0 0.0
  %4388 = vmatpush1.msra.mxu0 %v4240
  %4389 = vmatprep.subr.mxu0 0.0
  %4390 = vmatpush2.msra.mxu0 0.0
  %4391 = vmatprep.subr.mxu0 0.0
  %4392 = vmatpush2.msra.mxu0 0.0
  %4393 = vmatprep.subr.mxu0 0.0
  %4394 = vmatpush2.msra.mxu0 0.0
  %4395 = vmatprep.subr.mxu0 0.0
  %4396 = vmatpush2.msra.mxu0 0.0
  %4397 = vmatprep.subr.mxu0 0.0
  %4398 = vmatpush2.msra.mxu0 0.0
  %4399 = vmatprep.subr.mxu0 0.0
  %4400 = vmatpush2.msra.mxu0 0.0
  %4401 = vmatprep.subr.mxu0 0.0
  %4402 = vmatpush2.msra.mxu0 0.0
  %4403 = vmatprep.subr.mxu0 0.0
  %4404 = vmatpush2.msra.mxu0 0.0
  %4405 = vmatprep.subr.mxu0 0.0
  %4406 = vmatpush2.msra.mxu0 0.0
  %4407 = vmatprep.subr.mxu0 0.0
  %4408 = vmatpush2.msra.mxu0 0.0
  %4409 = vmatprep.subr.mxu0 0.0
  %4410 = vmatpush2.msra.mxu0 0.0
  %4411 = vmatprep.subr.mxu0 0.0
  %4412 = vmatpush2.msra.mxu0 0.0
  %4413 = vmatprep.subr.mxu0 0.0
  %4414 = vmatpush2.msra.mxu0 0.0
  %4415 = vmatprep.subr.mxu0 0.0
  %4416 = vmatpush2.msra.mxu0 0.0
  %4417 = vmatprep.subr.mxu0 0.0
  %4418 = vmatpush2.msra.mxu0 0.0
  %4419 = vmatprep.subr.mxu0 0.0
  %4420 = vmatpush2.msra.mxu0 0.0
  %4421 = vmatprep.mubr.f32.mxu0 0.0
  %4422 = vmatmul.mubr.f32.gmra.mxu0 %v4339
  %v4423 = vpop.f32.mrf.mxu0
  %v4424 = vadd.f32 0.0, %v4423
  %v4425 = vpop.f32.mrf.mxu0
  %4426 = vmatprep.mubr.f32.mxu0 0.0
  %4427 = vmatmul.mubr.f32.gmra.mxu0 %v4344
  %v4428 = vpop.f32.mrf.mxu0
  %v4429 = vadd.f32 0.0, %v4428
  %v4430 = vpop.f32.mrf.mxu0
  %4431 = vmatprep.mubr.f32.mxu0 0.0
  %4432 = vmatmul.mubr.f32.gmra.mxu0 %v4349
  %v4433 = vpop.f32.mrf.mxu0
  %v4434 = vadd.f32 0.0, %v4433
  %v4435 = vpop.f32.mrf.mxu0
  %4436 = vmatprep.mubr.f32.mxu0 0.0
  %4437 = vmatmul.mubr.f32.gmra.mxu0 %v4354
  %v4438 = vpop.f32.mrf.mxu0
  %v4439 = vadd.f32 0.0, %v4438
  %v4440 = vpop.f32.mrf.mxu0
  %4441 = vdwg.mxu0
  %v4442 = vld [vmem:[%s53] sm:$0xff]
  %v4443 = vld [vmem:[%s53 + $0x8] sm:$0xff]
  %v4444 = vld [vmem:[%s53 + $0x10] sm:$0xff]
  %v4445 = vld [vmem:[%s53 + $0x18] sm:$0xff]
  %v4447 = vsel %vm152, %v4442, 0
  %v4450 = vsel %vm152, %v4443, 0
  %v4453 = vsel %vm152, %v4444, 0
  %v4456 = vsel %vm152, %v4445, 0
  %4458 = vmatprep.subr.mxu0 0.0
  %4459 = vmatpush1.msra.mxu0 0.0
  %4460 = vmatprep.subr.mxu0 0.0
  %4461 = vmatpush1.msra.mxu0 0.0
  %4462 = vmatprep.subr.mxu0 0.0
  %4463 = vmatpush1.msra.mxu0 0.0
  %4464 = vmatprep.subr.mxu0 0.0
  %4465 = vmatpush1.msra.mxu0 0.0
  %4466 = vmatprep.subr.mxu0 0.0
  %4467 = vmatpush1.msra.mxu0 0.0
  %4468 = vmatprep.subr.mxu0 0.0
  %4469 = vmatpush1.msra.mxu0 0.0
  %4470 = vmatprep.subr.mxu0 0.0
  %4471 = vmatpush1.msra.mxu0 0.0
  %4472 = vmatprep.subr.mxu0 0.0
  %4473 = vmatpush1.msra.mxu0 0.0
  %4474 = vmatprep.subr.mxu0 0.0
  %4475 = vmatpush1.msra.mxu0 0.0
  %4476 = vmatprep.subr.mxu0 0.0
  %4477 = vmatpush1.msra.mxu0 0.0
  %4478 = vmatprep.subr.mxu0 0.0
  %4479 = vmatpush1.msra.mxu0 0.0
  %4480 = vmatprep.subr.mxu0 0.0
  %4481 = vmatpush1.msra.mxu0 0.0
  %4482 = vmatprep.subr.mxu0 0.0
  %4483 = vmatpush1.msra.mxu0 %v4439
  %4484 = vmatprep.subr.mxu0 0.0
  %4485 = vmatpush1.msra.mxu0 %v4434
  %4486 = vmatprep.subr.mxu0 0.0
  %4487 = vmatpush1.msra.mxu0 %v4429
  %4488 = vmatprep.subr.mxu0 0.0
  %4489 = vmatpush1.msra.mxu0 %v4424
  %4490 = vmatprep.subr.mxu0 0.0
  %4491 = vmatpush2.msra.mxu0 0.0
  %4492 = vmatprep.subr.mxu0 0.0
  %4493 = vmatpush2.msra.mxu0 0.0
  %4494 = vmatprep.subr.mxu0 0.0
  %4495 = vmatpush2.msra.mxu0 0.0
  %4496 = vmatprep.subr.mxu0 0.0
  %4497 = vmatpush2.msra.mxu0 0.0
  %4498 = vmatprep.subr.mxu0 0.0
  %4499 = vmatpush2.msra.mxu0 0.0
  %4500 = vmatprep.subr.mxu0 0.0
  %4501 = vmatpush2.msra.mxu0 0.0
  %4502 = vmatprep.subr.mxu0 0.0
  %4503 = vmatpush2.msra.mxu0 0.0
  %4504 = vmatprep.subr.mxu0 0.0
  %4505 = vmatpush2.msra.mxu0 0.0
  %4506 = vmatprep.subr.mxu0 0.0
  %4507 = vmatpush2.msra.mxu0 0.0
  %4508 = vmatprep.subr.mxu0 0.0
  %4509 = vmatpush2.msra.mxu0 0.0
  %4510 = vmatprep.subr.mxu0 0.0
  %4511 = vmatpush2.msra.mxu0 0.0
  %4512 = vmatprep.subr.mxu0 0.0
  %4513 = vmatpush2.msra.mxu0 0.0
  %4514 = vmatprep.subr.mxu0 0.0
  %4515 = vmatpush2.msra.mxu0 0.0
  %4516 = vmatprep.subr.mxu0 0.0
  %4517 = vmatpush2.msra.mxu0 0.0
  %4518 = vmatprep.subr.mxu0 0.0
  %4519 = vmatpush2.msra.mxu0 0.0
  %4520 = vmatprep.subr.mxu0 0.0
  %4521 = vmatpush2.msra.mxu0 0.0
  %4522 = vmatprep.mubr.f32.mxu0 0.0
  %4523 = vmatmul.mubr.f32.gmra.mxu0 %v4447
  %v4524 = vpop.f32.mrf.mxu0
  %v4525 = vadd.f32 0.0, %v4524
  %v4526 = vpop.f32.mrf.mxu0
  %4527 = vmatprep.mubr.f32.mxu0 0.0
  %4528 = vmatmul.mubr.f32.gmra.mxu0 %v4450
  %v4529 = vpop.f32.mrf.mxu0
  %v4530 = vadd.f32 0.0, %v4529
  %v4531 = vpop.f32.mrf.mxu0
  %4532 = vmatprep.mubr.f32.mxu0 0.0
  %4533 = vmatmul.mubr.f32.gmra.mxu0 %v4453
  %v4534 = vpop.f32.mrf.mxu0
  %v4535 = vadd.f32 0.0, %v4534
  %v4536 = vpop.f32.mrf.mxu0
  %4537 = vmatprep.mubr.f32.mxu0 0.0
  %4538 = vmatmul.mubr.f32.gmra.mxu0 %v4456
  %v4539 = vpop.f32.mrf.mxu0
  %v4540 = vadd.f32 0.0, %v4539
  %v4541 = vpop.f32.mrf.mxu0
  %4542 = vdwg.mxu0
  %4543 = vmatprep.subr.mxu0 0.0
  %4544 = vmatpush1.msra.mxu0 %v4255
  %4545 = vmatprep.subr.mxu0 0.0
  %4546 = vmatpush1.msra.mxu0 %v4254
  %4547 = vmatprep.subr.mxu0 0.0
  %4548 = vmatpush1.msra.mxu0 %v4253
  %4549 = vmatprep.subr.mxu0 0.0
  %4550 = vmatpush1.msra.mxu0 %v4252
  %4551 = vmatprep.subr.mxu0 0.0
  %4552 = vmatpush1.msra.mxu0 %v4251
  %4553 = vmatprep.subr.mxu0 0.0
  %4554 = vmatpush1.msra.mxu0 %v4250
  %4555 = vmatprep.subr.mxu0 0.0
  %4556 = vmatpush1.msra.mxu0 %v4249
  %4557 = vmatprep.subr.mxu0 0.0
  %4558 = vmatpush1.msra.mxu0 %v4248
  %4559 = vmatprep.subr.mxu0 0.0
  %4560 = vmatpush1.msra.mxu0 %v4247
  %4561 = vmatprep.subr.mxu0 0.0
  %4562 = vmatpush1.msra.mxu0 %v4246
  %4563 = vmatprep.subr.mxu0 0.0
  %4564 = vmatpush1.msra.mxu0 %v4245
  %4565 = vmatprep.subr.mxu0 0.0
  %4566 = vmatpush1.msra.mxu0 %v4244
  %4567 = vmatprep.subr.mxu0 0.0
  %4568 = vmatpush1.msra.mxu0 %v4243
  %4569 = vmatprep.subr.mxu0 0.0
  %4570 = vmatpush1.msra.mxu0 %v4242
  %4571 = vmatprep.subr.mxu0 0.0
  %4572 = vmatpush1.msra.mxu0 %v4241
  %4573 = vmatprep.subr.mxu0 0.0
  %4574 = vmatpush1.msra.mxu0 %v4240
  %4575 = vmatprep.subr.mxu0 0.0
  %4576 = vmatpush2.msra.mxu0 0.0
  %4577 = vmatprep.subr.mxu0 0.0
  %4578 = vmatpush2.msra.mxu0 0.0
  %4579 = vmatprep.subr.mxu0 0.0
  %4580 = vmatpush2.msra.mxu0 0.0
  %4581 = vmatprep.subr.mxu0 0.0
  %4582 = vmatpush2.msra.mxu0 0.0
  %4583 = vmatprep.subr.mxu0 0.0
  %4584 = vmatpush2.msra.mxu0 0.0
  %4585 = vmatprep.subr.mxu0 0.0
  %4586 = vmatpush2.msra.mxu0 0.0
  %4587 = vmatprep.subr.mxu0 0.0
  %4588 = vmatpush2.msra.mxu0 0.0
  %4589 = vmatprep.subr.mxu0 0.0
  %4590 = vmatpush2.msra.mxu0 0.0
  %4591 = vmatprep.subr.mxu0 0.0
  %4592 = vmatpush2.msra.mxu0 0.0
  %4593 = vmatprep.subr.mxu0 0.0
  %4594 = vmatpush2.msra.mxu0 0.0
  %4595 = vmatprep.subr.mxu0 0.0
  %4596 = vmatpush2.msra.mxu0 0.0
  %4597 = vmatprep.subr.mxu0 0.0
  %4598 = vmatpush2.msra.mxu0 0.0
  %4599 = vmatprep.subr.mxu0 0.0
  %4600 = vmatpush2.msra.mxu0 0.0
  %4601 = vmatprep.subr.mxu0 0.0
  %4602 = vmatpush2.msra.mxu0 0.0
  %4603 = vmatprep.subr.mxu0 0.0
  %4604 = vmatpush2.msra.mxu0 0.0
  %4605 = vmatprep.subr.mxu0 0.0
  %4606 = vmatpush2.msra.mxu0 0.0
  %4607 = vmatprep.mubr.f32.mxu0 0.0
  %4608 = vmatmul.mubr.f32.gmra.mxu0 %v4525
  %v4609 = vpop.f32.mrf.mxu0
  %v4610 = vadd.f32 0.0, %v4609
  %v4611 = vpop.f32.mrf.mxu0
  %4612 = vmatprep.mubr.f32.mxu0 0.0
  %4613 = vmatmul.mubr.f32.gmra.mxu0 %v4530
  %v4614 = vpop.f32.mrf.mxu0
  %v4615 = vadd.f32 0.0, %v4614
  %v4616 = vpop.f32.mrf.mxu0
  %4617 = vmatprep.mubr.f32.mxu0 0.0
  %4618 = vmatmul.mubr.f32.gmra.mxu0 %v4535
  %v4619 = vpop.f32.mrf.mxu0
  %v4620 = vadd.f32 0.0, %v4619
  %v4621 = vpop.f32.mrf.mxu0
  %4622 = vmatprep.mubr.f32.mxu0 0.0
  %4623 = vmatmul.mubr.f32.gmra.mxu0 %v4540
  %v4624 = vpop.f32.mrf.mxu0
  %v4625 = vadd.f32 0.0, %v4624
  %v4626 = vpop.f32.mrf.mxu0
  %4627 = vdwg.mxu0
  %vm4628 = vcmp.gt.f32.partialorder %v4610, 0.0
  %vm4629 = vcmp.gt.f32.partialorder %v4615, 0.0
  %vm4630 = vcmp.gt.f32.partialorder %v4620, 0.0
  %vm4631 = vcmp.gt.f32.partialorder %v4625, 0.0
  %v4632 = vmul.f32 %v4610, 0.2
  %v4633 = vmul.f32 %v4615, 0.2
  %v4634 = vmul.f32 %v4620, 0.2
  %v4635 = vmul.f32 %v4625, 0.2
  %v4636 = vsel %vm4628, %v4610, %v4632
  %v4637 = vsel %vm4629, %v4615, %v4633
  %v4638 = vsel %vm4630, %v4620, %v4634
  %v4639 = vsel %vm4631, %v4625, %v4635
  %v4640 = vld [vmem:[%s55] sm:$0xff]
  %v4641 = vld [vmem:[%s55 + $0x8] sm:$0xff]
  %v4642 = vld [vmem:[%s55 + $0x10] sm:$0xff]
  %v4643 = vld [vmem:[%s55 + $0x18] sm:$0xff]
  %v4645 = vsel %vm152, %v4640, 0
  %v4648 = vsel %vm152, %v4641, 0
  %v4651 = vsel %vm152, %v4642, 0
  %v4654 = vsel %vm152, %v4643, 0
  %4656 = vmatprep.subr.mxu0 0.0
  %4657 = vmatpush1.msra.mxu0 0.0
  %4658 = vmatprep.subr.mxu0 0.0
  %4659 = vmatpush1.msra.mxu0 0.0
  %4660 = vmatprep.subr.mxu0 0.0
  %4661 = vmatpush1.msra.mxu0 0.0
  %4662 = vmatprep.subr.mxu0 0.0
  %4663 = vmatpush1.msra.mxu0 0.0
  %4664 = vmatprep.subr.mxu0 0.0
  %4665 = vmatpush1.msra.mxu0 0.0
  %4666 = vmatprep.subr.mxu0 0.0
  %4667 = vmatpush1.msra.mxu0 0.0
  %4668 = vmatprep.subr.mxu0 0.0
  %4669 = vmatpush1.msra.mxu0 0.0
  %4670 = vmatprep.subr.mxu0 0.0
  %4671 = vmatpush1.msra.mxu0 0.0
  %4672 = vmatprep.subr.mxu0 0.0
  %4673 = vmatpush1.msra.mxu0 0.0
  %4674 = vmatprep.subr.mxu0 0.0
  %4675 = vmatpush1.msra.mxu0 0.0
  %4676 = vmatprep.subr.mxu0 0.0
  %4677 = vmatpush1.msra.mxu0 0.0
  %4678 = vmatprep.subr.mxu0 0.0
  %4679 = vmatpush1.msra.mxu0 0.0
  %4680 = vmatprep.subr.mxu0 0.0
  %4681 = vmatpush1.msra.mxu0 %v4639
  %4682 = vmatprep.subr.mxu0 0.0
  %4683 = vmatpush1.msra.mxu0 %v4638
  %4684 = vmatprep.subr.mxu0 0.0
  %4685 = vmatpush1.msra.mxu0 %v4637
  %4686 = vmatprep.subr.mxu0 0.0
  %4687 = vmatpush1.msra.mxu0 %v4636
  %4688 = vmatprep.subr.mxu0 0.0
  %4689 = vmatpush2.msra.mxu0 0.0
  %4690 = vmatprep.subr.mxu0 0.0
  %4691 = vmatpush2.msra.mxu0 0.0
  %4692 = vmatprep.subr.mxu0 0.0
  %4693 = vmatpush2.msra.mxu0 0.0
  %4694 = vmatprep.subr.mxu0 0.0
  %4695 = vmatpush2.msra.mxu0 0.0
  %4696 = vmatprep.subr.mxu0 0.0
  %4697 = vmatpush2.msra.mxu0 0.0
  %4698 = vmatprep.subr.mxu0 0.0
  %4699 = vmatpush2.msra.mxu0 0.0
  %4700 = vmatprep.subr.mxu0 0.0
  %4701 = vmatpush2.msra.mxu0 0.0
  %4702 = vmatprep.subr.mxu0 0.0
  %4703 = vmatpush2.msra.mxu0 0.0
  %4704 = vmatprep.subr.mxu0 0.0
  %4705 = vmatpush2.msra.mxu0 0.0
  %4706 = vmatprep.subr.mxu0 0.0
  %4707 = vmatpush2.msra.mxu0 0.0
  %4708 = vmatprep.subr.mxu0 0.0
  %4709 = vmatpush2.msra.mxu0 0.0
  %4710 = vmatprep.subr.mxu0 0.0
  %4711 = vmatpush2.msra.mxu0 0.0
  %4712 = vmatprep.subr.mxu0 0.0
  %4713 = vmatpush2.msra.mxu0 0.0
  %4714 = vmatprep.subr.mxu0 0.0
  %4715 = vmatpush2.msra.mxu0 0.0
  %4716 = vmatprep.subr.mxu0 0.0
  %4717 = vmatpush2.msra.mxu0 0.0
  %4718 = vmatprep.subr.mxu0 0.0
  %4719 = vmatpush2.msra.mxu0 0.0
  %4720 = vmatprep.mubr.f32.mxu0 0.0
  %4721 = vmatmul.mubr.f32.gmra.mxu0 %v4645
  %v4722 = vpop.f32.mrf.mxu0
  %v4723 = vadd.f32 0.0, %v4722
  %v4724 = vpop.f32.mrf.mxu0
  %4725 = vmatprep.mubr.f32.mxu0 0.0
  %4726 = vmatmul.mubr.f32.gmra.mxu0 %v4648
  %v4727 = vpop.f32.mrf.mxu0
  %v4728 = vadd.f32 0.0, %v4727
  %v4729 = vpop.f32.mrf.mxu0
  %4730 = vmatprep.mubr.f32.mxu0 0.0
  %4731 = vmatmul.mubr.f32.gmra.mxu0 %v4651
  %v4732 = vpop.f32.mrf.mxu0
  %v4733 = vadd.f32 0.0, %v4732
  %v4734 = vpop.f32.mrf.mxu0
  %4735 = vmatprep.mubr.f32.mxu0 0.0
  %4736 = vmatmul.mubr.f32.gmra.mxu0 %v4654
  %v4737 = vpop.f32.mrf.mxu0
  %v4738 = vadd.f32 0.0, %v4737
  %v4739 = vpop.f32.mrf.mxu0
  %4740 = vdwg.mxu0
  %4741 = vmatprep.subr.mxu0 0.0
  %4742 = vmatpush1.msra.mxu0 %v4255
  %4743 = vmatprep.subr.mxu0 0.0
  %4744 = vmatpush1.msra.mxu0 %v4254
  %4745 = vmatprep.subr.mxu0 0.0
  %4746 = vmatpush1.msra.mxu0 %v4253
  %4747 = vmatprep.subr.mxu0 0.0
  %4748 = vmatpush1.msra.mxu0 %v4252
  %4749 = vmatprep.subr.mxu0 0.0
  %4750 = vmatpush1.msra.mxu0 %v4251
  %4751 = vmatprep.subr.mxu0 0.0
  %4752 = vmatpush1.msra.mxu0 %v4250
  %4753 = vmatprep.subr.mxu0 0.0
  %4754 = vmatpush1.msra.mxu0 %v4249
  %4755 = vmatprep.subr.mxu0 0.0
  %4756 = vmatpush1.msra.mxu0 %v4248
  %4757 = vmatprep.subr.mxu0 0.0
  %4758 = vmatpush1.msra.mxu0 %v4247
  %4759 = vmatprep.subr.mxu0 0.0
  %4760 = vmatpush1.msra.mxu0 %v4246
  %4761 = vmatprep.subr.mxu0 0.0
  %4762 = vmatpush1.msra.mxu0 %v4245
  %4763 = vmatprep.subr.mxu0 0.0
  %4764 = vmatpush1.msra.mxu0 %v4244
  %4765 = vmatprep.subr.mxu0 0.0
  %4766 = vmatpush1.msra.mxu0 %v4243
  %4767 = vmatprep.subr.mxu0 0.0
  %4768 = vmatpush1.msra.mxu0 %v4242
  %4769 = vmatprep.subr.mxu0 0.0
  %4770 = vmatpush1.msra.mxu0 %v4241
  %4771 = vmatprep.subr.mxu0 0.0
  %4772 = vmatpush1.msra.mxu0 %v4240
  %4773 = vmatprep.subr.mxu0 0.0
  %4774 = vmatpush2.msra.mxu0 0.0
  %4775 = vmatprep.subr.mxu0 0.0
  %4776 = vmatpush2.msra.mxu0 0.0
  %4777 = vmatprep.subr.mxu0 0.0
  %4778 = vmatpush2.msra.mxu0 0.0
  %4779 = vmatprep.subr.mxu0 0.0
  %4780 = vmatpush2.msra.mxu0 0.0
  %4781 = vmatprep.subr.mxu0 0.0
  %4782 = vmatpush2.msra.mxu0 0.0
  %4783 = vmatprep.subr.mxu0 0.0
  %4784 = vmatpush2.msra.mxu0 0.0
  %4785 = vmatprep.subr.mxu0 0.0
  %4786 = vmatpush2.msra.mxu0 0.0
  %4787 = vmatprep.subr.mxu0 0.0
  %4788 = vmatpush2.msra.mxu0 0.0
  %4789 = vmatprep.subr.mxu0 0.0
  %4790 = vmatpush2.msra.mxu0 0.0
  %4791 = vmatprep.subr.mxu0 0.0
  %4792 = vmatpush2.msra.mxu0 0.0
  %4793 = vmatprep.subr.mxu0 0.0
  %4794 = vmatpush2.msra.mxu0 0.0
  %4795 = vmatprep.subr.mxu0 0.0
  %4796 = vmatpush2.msra.mxu0 0.0
  %4797 = vmatprep.subr.mxu0 0.0
  %4798 = vmatpush2.msra.mxu0 0.0
  %4799 = vmatprep.subr.mxu0 0.0
  %4800 = vmatpush2.msra.mxu0 0.0
  %4801 = vmatprep.subr.mxu0 0.0
  %4802 = vmatpush2.msra.mxu0 0.0
  %4803 = vmatprep.subr.mxu0 0.0
  %4804 = vmatpush2.msra.mxu0 0.0
  %4805 = vmatprep.mubr.f32.mxu0 0.0
  %4806 = vmatmul.mubr.f32.gmra.mxu0 %v4723
  %v4807 = vpop.f32.mrf.mxu0
  %v4808 = vadd.f32 0.0, %v4807
  %v4809 = vpop.f32.mrf.mxu0
  %4810 = vmatprep.mubr.f32.mxu0 0.0
  %4811 = vmatmul.mubr.f32.gmra.mxu0 %v4728
  %v4812 = vpop.f32.mrf.mxu0
  %v4813 = vadd.f32 0.0, %v4812
  %v4814 = vpop.f32.mrf.mxu0
  %4815 = vmatprep.mubr.f32.mxu0 0.0
  %4816 = vmatmul.mubr.f32.gmra.mxu0 %v4733
  %v4817 = vpop.f32.mrf.mxu0
  %v4818 = vadd.f32 0.0, %v4817
  %v4819 = vpop.f32.mrf.mxu0
  %4820 = vmatprep.mubr.f32.mxu0 0.0
  %4821 = vmatmul.mubr.f32.gmra.mxu0 %v4738
  %v4822 = vpop.f32.mrf.mxu0
  %v4823 = vadd.f32 0.0, %v4822
  %v4824 = vpop.f32.mrf.mxu0
  %4825 = vdwg.mxu0
  %v4826 = vadd.f32 %v4424, %v4808
  %v4827 = vadd.f32 %v4429, %v4813
  %v4828 = vadd.f32 %v4434, %v4818
  %v4829 = vadd.f32 %v4439, %v4823
  %s4830 = scalar_lea.vmem %s53, 32
  %v4831 = vld [vmem:[%s4830] sm:$0xff]
  %v4832 = vld [vmem:[%s4830 + $0x8] sm:$0xff]
  %v4833 = vld [vmem:[%s4830 + $0x10] sm:$0xff]
  %v4834 = vld [vmem:[%s4830 + $0x18] sm:$0xff]
  %v4836 = vsel %vm152, %v4831, 0
  %v4839 = vsel %vm152, %v4832, 0
  %v4842 = vsel %vm152, %v4833, 0
  %v4845 = vsel %vm152, %v4834, 0
  %4847 = vmatprep.subr.mxu0 0.0
  %4848 = vmatpush1.msra.mxu0 0.0
  %4849 = vmatprep.subr.mxu0 0.0
  %4850 = vmatpush1.msra.mxu0 0.0
  %4851 = vmatprep.subr.mxu0 0.0
  %4852 = vmatpush1.msra.mxu0 0.0
  %4853 = vmatprep.subr.mxu0 0.0
  %4854 = vmatpush1.msra.mxu0 0.0
  %4855 = vmatprep.subr.mxu0 0.0
  %4856 = vmatpush1.msra.mxu0 0.0
  %4857 = vmatprep.subr.mxu0 0.0
  %4858 = vmatpush1.msra.mxu0 0.0
  %4859 = vmatprep.subr.mxu0 0.0
  %4860 = vmatpush1.msra.mxu0 0.0
  %4861 = vmatprep.subr.mxu0 0.0
  %4862 = vmatpush1.msra.mxu0 0.0
  %4863 = vmatprep.subr.mxu0 0.0
  %4864 = vmatpush1.msra.mxu0 0.0
  %4865 = vmatprep.subr.mxu0 0.0
  %4866 = vmatpush1.msra.mxu0 0.0
  %4867 = vmatprep.subr.mxu0 0.0
  %4868 = vmatpush1.msra.mxu0 0.0
  %4869 = vmatprep.subr.mxu0 0.0
  %4870 = vmatpush1.msra.mxu0 0.0
  %4871 = vmatprep.subr.mxu0 0.0
  %4872 = vmatpush1.msra.mxu0 %v4829
  %4873 = vmatprep.subr.mxu0 0.0
  %4874 = vmatpush1.msra.mxu0 %v4828
  %4875 = vmatprep.subr.mxu0 0.0
  %4876 = vmatpush1.msra.mxu0 %v4827
  %4877 = vmatprep.subr.mxu0 0.0
  %4878 = vmatpush1.msra.mxu0 %v4826
  %4879 = vmatprep.subr.mxu0 0.0
  %4880 = vmatpush2.msra.mxu0 0.0
  %4881 = vmatprep.subr.mxu0 0.0
  %4882 = vmatpush2.msra.mxu0 0.0
  %4883 = vmatprep.subr.mxu0 0.0
  %4884 = vmatpush2.msra.mxu0 0.0
  %4885 = vmatprep.subr.mxu0 0.0
  %4886 = vmatpush2.msra.mxu0 0.0
  %4887 = vmatprep.subr.mxu0 0.0
  %4888 = vmatpush2.msra.mxu0 0.0
  %4889 = vmatprep.subr.mxu0 0.0
  %4890 = vmatpush2.msra.mxu0 0.0
  %4891 = vmatprep.subr.mxu0 0.0
  %4892 = vmatpush2.msra.mxu0 0.0
  %4893 = vmatprep.subr.mxu0 0.0
  %4894 = vmatpush2.msra.mxu0 0.0
  %4895 = vmatprep.subr.mxu0 0.0
  %4896 = vmatpush2.msra.mxu0 0.0
  %4897 = vmatprep.subr.mxu0 0.0
  %4898 = vmatpush2.msra.mxu0 0.0
  %4899 = vmatprep.subr.mxu0 0.0
  %4900 = vmatpush2.msra.mxu0 0.0
  %4901 = vmatprep.subr.mxu0 0.0
  %4902 = vmatpush2.msra.mxu0 0.0
  %4903 = vmatprep.subr.mxu0 0.0
  %4904 = vmatpush2.msra.mxu0 0.0
  %4905 = vmatprep.subr.mxu0 0.0
  %4906 = vmatpush2.msra.mxu0 0.0
  %4907 = vmatprep.subr.mxu0 0.0
  %4908 = vmatpush2.msra.mxu0 0.0
  %4909 = vmatprep.subr.mxu0 0.0
  %4910 = vmatpush2.msra.mxu0 0.0
  %4911 = vmatprep.mubr.f32.mxu0 0.0
  %4912 = vmatmul.mubr.f32.gmra.mxu0 %v4836
  %v4913 = vpop.f32.mrf.mxu0
  %v4914 = vadd.f32 0.0, %v4913
  %v4915 = vpop.f32.mrf.mxu0
  %4916 = vmatprep.mubr.f32.mxu0 0.0
  %4917 = vmatmul.mubr.f32.gmra.mxu0 %v4839
  %v4918 = vpop.f32.mrf.mxu0
  %v4919 = vadd.f32 0.0, %v4918
  %v4920 = vpop.f32.mrf.mxu0
  %4921 = vmatprep.mubr.f32.mxu0 0.0
  %4922 = vmatmul.mubr.f32.gmra.mxu0 %v4842
  %v4923 = vpop.f32.mrf.mxu0
  %v4924 = vadd.f32 0.0, %v4923
  %v4925 = vpop.f32.mrf.mxu0
  %4926 = vmatprep.mubr.f32.mxu0 0.0
  %4927 = vmatmul.mubr.f32.gmra.mxu0 %v4845
  %v4928 = vpop.f32.mrf.mxu0
  %v4929 = vadd.f32 0.0, %v4928
  %v4930 = vpop.f32.mrf.mxu0
  %4931 = vdwg.mxu0
  %4932 = vmatprep.subr.mxu0 0.0
  %4933 = vmatpush1.msra.mxu0 %v4255
  %4934 = vmatprep.subr.mxu0 0.0
  %4935 = vmatpush1.msra.mxu0 %v4254
  %4936 = vmatprep.subr.mxu0 0.0
  %4937 = vmatpush1.msra.mxu0 %v4253
  %4938 = vmatprep.subr.mxu0 0.0
  %4939 = vmatpush1.msra.mxu0 %v4252
  %4940 = vmatprep.subr.mxu0 0.0
  %4941 = vmatpush1.msra.mxu0 %v4251
  %4942 = vmatprep.subr.mxu0 0.0
  %4943 = vmatpush1.msra.mxu0 %v4250
  %4944 = vmatprep.subr.mxu0 0.0
  %4945 = vmatpush1.msra.mxu0 %v4249
  %4946 = vmatprep.subr.mxu0 0.0
  %4947 = vmatpush1.msra.mxu0 %v4248
  %4948 = vmatprep.subr.mxu0 0.0
  %4949 = vmatpush1.msra.mxu0 %v4247
  %4950 = vmatprep.subr.mxu0 0.0
  %4951 = vmatpush1.msra.mxu0 %v4246
  %4952 = vmatprep.subr.mxu0 0.0
  %4953 = vmatpush1.msra.mxu0 %v4245
  %4954 = vmatprep.subr.mxu0 0.0
  %4955 = vmatpush1.msra.mxu0 %v4244
  %4956 = vmatprep.subr.mxu0 0.0
  %4957 = vmatpush1.msra.mxu0 %v4243
  %4958 = vmatprep.subr.mxu0 0.0
  %4959 = vmatpush1.msra.mxu0 %v4242
  %4960 = vmatprep.subr.mxu0 0.0
  %4961 = vmatpush1.msra.mxu0 %v4241
  %4962 = vmatprep.subr.mxu0 0.0
  %4963 = vmatpush1.msra.mxu0 %v4240
  %4964 = vmatprep.subr.mxu0 0.0
  %4965 = vmatpush2.msra.mxu0 0.0
  %4966 = vmatprep.subr.mxu0 0.0
  %4967 = vmatpush2.msra.mxu0 0.0
  %4968 = vmatprep.subr.mxu0 0.0
  %4969 = vmatpush2.msra.mxu0 0.0
  %4970 = vmatprep.subr.mxu0 0.0
  %4971 = vmatpush2.msra.mxu0 0.0
  %4972 = vmatprep.subr.mxu0 0.0
  %4973 = vmatpush2.msra.mxu0 0.0
  %4974 = vmatprep.subr.mxu0 0.0
  %4975 = vmatpush2.msra.mxu0 0.0
  %4976 = vmatprep.subr.mxu0 0.0
  %4977 = vmatpush2.msra.mxu0 0.0
  %4978 = vmatprep.subr.mxu0 0.0
  %4979 = vmatpush2.msra.mxu0 0.0
  %4980 = vmatprep.subr.mxu0 0.0
  %4981 = vmatpush2.msra.mxu0 0.0
  %4982 = vmatprep.subr.mxu0 0.0
  %4983 = vmatpush2.msra.mxu0 0.0
  %4984 = vmatprep.subr.mxu0 0.0
  %4985 = vmatpush2.msra.mxu0 0.0
  %4986 = vmatprep.subr.mxu0 0.0
  %4987 = vmatpush2.msra.mxu0 0.0
  %4988 = vmatprep.subr.mxu0 0.0
  %4989 = vmatpush2.msra.mxu0 0.0
  %4990 = vmatprep.subr.mxu0 0.0
  %4991 = vmatpush2.msra.mxu0 0.0
  %4992 = vmatprep.subr.mxu0 0.0
  %4993 = vmatpush2.msra.mxu0 0.0
  %4994 = vmatprep.subr.mxu0 0.0
  %4995 = vmatpush2.msra.mxu0 0.0
  %4996 = vmatprep.mubr.f32.mxu0 0.0
  %4997 = vmatmul.mubr.f32.gmra.mxu0 %v4914
  %v4998 = vpop.f32.mrf.mxu0
  %v4999 = vadd.f32 0.0, %v4998
  %v5000 = vpop.f32.mrf.mxu0
  %5001 = vmatprep.mubr.f32.mxu0 0.0
  %5002 = vmatmul.mubr.f32.gmra.mxu0 %v4919
  %v5003 = vpop.f32.mrf.mxu0
  %v5004 = vadd.f32 0.0, %v5003
  %v5005 = vpop.f32.mrf.mxu0
  %5006 = vmatprep.mubr.f32.mxu0 0.0
  %5007 = vmatmul.mubr.f32.gmra.mxu0 %v4924
  %v5008 = vpop.f32.mrf.mxu0
  %v5009 = vadd.f32 0.0, %v5008
  %v5010 = vpop.f32.mrf.mxu0
  %5011 = vmatprep.mubr.f32.mxu0 0.0
  %5012 = vmatmul.mubr.f32.gmra.mxu0 %v4929
  %v5013 = vpop.f32.mrf.mxu0
  %v5014 = vadd.f32 0.0, %v5013
  %v5015 = vpop.f32.mrf.mxu0
  %5016 = vdwg.mxu0
  %vm5017 = vcmp.gt.f32.partialorder %v4999, 0.0
  %vm5018 = vcmp.gt.f32.partialorder %v5004, 0.0
  %vm5019 = vcmp.gt.f32.partialorder %v5009, 0.0
  %vm5020 = vcmp.gt.f32.partialorder %v5014, 0.0
  %v5021 = vmul.f32 %v4999, 0.2
  %v5022 = vmul.f32 %v5004, 0.2
  %v5023 = vmul.f32 %v5009, 0.2
  %v5024 = vmul.f32 %v5014, 0.2
  %v5025 = vsel %vm5017, %v4999, %v5021
  %v5026 = vsel %vm5018, %v5004, %v5022
  %v5027 = vsel %vm5019, %v5009, %v5023
  %v5028 = vsel %vm5020, %v5014, %v5024
  %s5029 = scalar_lea.vmem %s55, 32
  %v5030 = vld [vmem:[%s5029] sm:$0xff]
  %v5031 = vld [vmem:[%s5029 + $0x8] sm:$0xff]
  %v5032 = vld [vmem:[%s5029 + $0x10] sm:$0xff]
  %v5033 = vld [vmem:[%s5029 + $0x18] sm:$0xff]
  %v5035 = vsel %vm152, %v5030, 0
  %v5038 = vsel %vm152, %v5031, 0
  %v5041 = vsel %vm152, %v5032, 0
  %v5044 = vsel %vm152, %v5033, 0
  %5046 = vmatprep.subr.mxu0 0.0
  %5047 = vmatpush1.msra.mxu0 0.0
  %5048 = vmatprep.subr.mxu0 0.0
  %5049 = vmatpush1.msra.mxu0 0.0
  %5050 = vmatprep.subr.mxu0 0.0
  %5051 = vmatpush1.msra.mxu0 0.0
  %5052 = vmatprep.subr.mxu0 0.0
  %5053 = vmatpush1.msra.mxu0 0.0
  %5054 = vmatprep.subr.mxu0 0.0
  %5055 = vmatpush1.msra.mxu0 0.0
  %5056 = vmatprep.subr.mxu0 0.0
  %5057 = vmatpush1.msra.mxu0 0.0
  %5058 = vmatprep.subr.mxu0 0.0
  %5059 = vmatpush1.msra.mxu0 0.0
  %5060 = vmatprep.subr.mxu0 0.0
  %5061 = vmatpush1.msra.mxu0 0.0
  %5062 = vmatprep.subr.mxu0 0.0
  %5063 = vmatpush1.msra.mxu0 0.0
  %5064 = vmatprep.subr.mxu0 0.0
  %5065 = vmatpush1.msra.mxu0 0.0
  %5066 = vmatprep.subr.mxu0 0.0
  %5067 = vmatpush1.msra.mxu0 0.0
  %5068 = vmatprep.subr.mxu0 0.0
  %5069 = vmatpush1.msra.mxu0 0.0
  %5070 = vmatprep.subr.mxu0 0.0
  %5071 = vmatpush1.msra.mxu0 %v5028
  %5072 = vmatprep.subr.mxu0 0.0
  %5073 = vmatpush1.msra.mxu0 %v5027
  %5074 = vmatprep.subr.mxu0 0.0
  %5075 = vmatpush1.msra.mxu0 %v5026
  %5076 = vmatprep.subr.mxu0 0.0
  %5077 = vmatpush1.msra.mxu0 %v5025
  %5078 = vmatprep.subr.mxu0 0.0
  %5079 = vmatpush2.msra.mxu0 0.0
  %5080 = vmatprep.subr.mxu0 0.0
  %5081 = vmatpush2.msra.mxu0 0.0
  %5082 = vmatprep.subr.mxu0 0.0
  %5083 = vmatpush2.msra.mxu0 0.0
  %5084 = vmatprep.subr.mxu0 0.0
  %5085 = vmatpush2.msra.mxu0 0.0
  %5086 = vmatprep.subr.mxu0 0.0
  %5087 = vmatpush2.msra.mxu0 0.0
  %5088 = vmatprep.subr.mxu0 0.0
  %5089 = vmatpush2.msra.mxu0 0.0
  %5090 = vmatprep.subr.mxu0 0.0
  %5091 = vmatpush2.msra.mxu0 0.0
  %5092 = vmatprep.subr.mxu0 0.0
  %5093 = vmatpush2.msra.mxu0 0.0
  %5094 = vmatprep.subr.mxu0 0.0
  %5095 = vmatpush2.msra.mxu0 0.0
  %5096 = vmatprep.subr.mxu0 0.0
  %5097 = vmatpush2.msra.mxu0 0.0
  %5098 = vmatprep.subr.mxu0 0.0
  %5099 = vmatpush2.msra.mxu0 0.0
  %5100 = vmatprep.subr.mxu0 0.0
  %5101 = vmatpush2.msra.mxu0 0.0
  %5102 = vmatprep.subr.mxu0 0.0
  %5103 = vmatpush2.msra.mxu0 0.0
  %5104 = vmatprep.subr.mxu0 0.0
  %5105 = vmatpush2.msra.mxu0 0.0
  %5106 = vmatprep.subr.mxu0 0.0
  %5107 = vmatpush2.msra.mxu0 0.0
  %5108 = vmatprep.subr.mxu0 0.0
  %5109 = vmatpush2.msra.mxu0 0.0
  %5110 = vmatprep.mubr.f32.mxu0 0.0
  %5111 = vmatmul.mubr.f32.gmra.mxu0 %v5035
  %v5112 = vpop.f32.mrf.mxu0
  %v5113 = vadd.f32 0.0, %v5112
  %v5114 = vpop.f32.mrf.mxu0
  %5115 = vmatprep.mubr.f32.mxu0 0.0
  %5116 = vmatmul.mubr.f32.gmra.mxu0 %v5038
  %v5117 = vpop.f32.mrf.mxu0
  %v5118 = vadd.f32 0.0, %v5117
  %v5119 = vpop.f32.mrf.mxu0
  %5120 = vmatprep.mubr.f32.mxu0 0.0
  %5121 = vmatmul.mubr.f32.gmra.mxu0 %v5041
  %v5122 = vpop.f32.mrf.mxu0
  %v5123 = vadd.f32 0.0, %v5122
  %v5124 = vpop.f32.mrf.mxu0
  %5125 = vmatprep.mubr.f32.mxu0 0.0
  %5126 = vmatmul.mubr.f32.gmra.mxu0 %v5044
  %v5127 = vpop.f32.mrf.mxu0
  %v5128 = vadd.f32 0.0, %v5127
  %v5129 = vpop.f32.mrf.mxu0
  %5130 = vdwg.mxu0
  %5131 = vmatprep.subr.mxu0 0.0
  %5132 = vmatpush1.msra.mxu0 %v4255
  %5133 = vmatprep.subr.mxu0 0.0
  %5134 = vmatpush1.msra.mxu0 %v4254
  %5135 = vmatprep.subr.mxu0 0.0
  %5136 = vmatpush1.msra.mxu0 %v4253
  %5137 = vmatprep.subr.mxu0 0.0
  %5138 = vmatpush1.msra.mxu0 %v4252
  %5139 = vmatprep.subr.mxu0 0.0
  %5140 = vmatpush1.msra.mxu0 %v4251
  %5141 = vmatprep.subr.mxu0 0.0
  %5142 = vmatpush1.msra.mxu0 %v4250
  %5143 = vmatprep.subr.mxu0 0.0
  %5144 = vmatpush1.msra.mxu0 %v4249
  %5145 = vmatprep.subr.mxu0 0.0
  %5146 = vmatpush1.msra.mxu0 %v4248
  %5147 = vmatprep.subr.mxu0 0.0
  %5148 = vmatpush1.msra.mxu0 %v4247
  %5149 = vmatprep.subr.mxu0 0.0
  %5150 = vmatpush1.msra.mxu0 %v4246
  %5151 = vmatprep.subr.mxu0 0.0
  %5152 = vmatpush1.msra.mxu0 %v4245
  %5153 = vmatprep.subr.mxu0 0.0
  %5154 = vmatpush1.msra.mxu0 %v4244
  %5155 = vmatprep.subr.mxu0 0.0
  %5156 = vmatpush1.msra.mxu0 %v4243
  %5157 = vmatprep.subr.mxu0 0.0
  %5158 = vmatpush1.msra.mxu0 %v4242
  %5159 = vmatprep.subr.mxu0 0.0
  %5160 = vmatpush1.msra.mxu0 %v4241
  %5161 = vmatprep.subr.mxu0 0.0
  %5162 = vmatpush1.msra.mxu0 %v4240
  %5163 = vmatprep.subr.mxu0 0.0
  %5164 = vmatpush2.msra.mxu0 0.0
  %5165 = vmatprep.subr.mxu0 0.0
  %5166 = vmatpush2.msra.mxu0 0.0
  %5167 = vmatprep.subr.mxu0 0.0
  %5168 = vmatpush2.msra.mxu0 0.0
  %5169 = vmatprep.subr.mxu0 0.0
  %5170 = vmatpush2.msra.mxu0 0.0
  %5171 = vmatprep.subr.mxu0 0.0
  %5172 = vmatpush2.msra.mxu0 0.0
  %5173 = vmatprep.subr.mxu0 0.0
  %5174 = vmatpush2.msra.mxu0 0.0
  %5175 = vmatprep.subr.mxu0 0.0
  %5176 = vmatpush2.msra.mxu0 0.0
  %5177 = vmatprep.subr.mxu0 0.0
  %5178 = vmatpush2.msra.mxu0 0.0
  %5179 = vmatprep.subr.mxu0 0.0
  %5180 = vmatpush2.msra.mxu0 0.0
  %5181 = vmatprep.subr.mxu0 0.0
  %5182 = vmatpush2.msra.mxu0 0.0
  %5183 = vmatprep.subr.mxu0 0.0
  %5184 = vmatpush2.msra.mxu0 0.0
  %5185 = vmatprep.subr.mxu0 0.0
  %5186 = vmatpush2.msra.mxu0 0.0
  %5187 = vmatprep.subr.mxu0 0.0
  %5188 = vmatpush2.msra.mxu0 0.0
  %5189 = vmatprep.subr.mxu0 0.0
  %5190 = vmatpush2.msra.mxu0 0.0
  %5191 = vmatprep.subr.mxu0 0.0
  %5192 = vmatpush2.msra.mxu0 0.0
  %5193 = vmatprep.subr.mxu0 0.0
  %5194 = vmatpush2.msra.mxu0 0.0
  %5195 = vmatprep.mubr.f32.mxu0 0.0
  %5196 = vmatmul.mubr.f32.gmra.mxu0 %v5113
  %v5197 = vpop.f32.mrf.mxu0
  %v5198 = vadd.f32 0.0, %v5197
  %v5199 = vpop.f32.mrf.mxu0
  %5200 = vmatprep.mubr.f32.mxu0 0.0
  %5201 = vmatmul.mubr.f32.gmra.mxu0 %v5118
  %v5202 = vpop.f32.mrf.mxu0
  %v5203 = vadd.f32 0.0, %v5202
  %v5204 = vpop.f32.mrf.mxu0
  %5205 = vmatprep.mubr.f32.mxu0 0.0
  %5206 = vmatmul.mubr.f32.gmra.mxu0 %v5123
  %v5207 = vpop.f32.mrf.mxu0
  %v5208 = vadd.f32 0.0, %v5207
  %v5209 = vpop.f32.mrf.mxu0
  %5210 = vmatprep.mubr.f32.mxu0 0.0
  %5211 = vmatmul.mubr.f32.gmra.mxu0 %v5128
  %v5212 = vpop.f32.mrf.mxu0
  %v5213 = vadd.f32 0.0, %v5212
  %v5214 = vpop.f32.mrf.mxu0
  %5215 = vdwg.mxu0
  %v5216 = vadd.f32 %v4826, %v5198
  %v5217 = vadd.f32 %v4827, %v5203
  %v5218 = vadd.f32 %v4828, %v5208
  %v5219 = vadd.f32 %v4829, %v5213
  %v5220 = vld [vmem:[%s57] sm:$0xff]
  %v5222 = vsel %vm152, %v5220, 0
  %5224 = vmatprep.subr.mxu0 0.0
  %5225 = vmatpush1.msra.mxu0 0.0
  %5226 = vmatprep.subr.mxu0 0.0
  %5227 = vmatpush1.msra.mxu0 0.0
  %5228 = vmatprep.subr.mxu0 0.0
  %5229 = vmatpush1.msra.mxu0 0.0
  %5230 = vmatprep.subr.mxu0 0.0
  %5231 = vmatpush1.msra.mxu0 0.0
  %5232 = vmatprep.subr.mxu0 0.0
  %5233 = vmatpush1.msra.mxu0 0.0
  %5234 = vmatprep.subr.mxu0 0.0
  %5235 = vmatpush1.msra.mxu0 0.0
  %5236 = vmatprep.subr.mxu0 0.0
  %5237 = vmatpush1.msra.mxu0 0.0
  %5238 = vmatprep.subr.mxu0 0.0
  %5239 = vmatpush1.msra.mxu0 0.0
  %5240 = vmatprep.subr.mxu0 0.0
  %5241 = vmatpush1.msra.mxu0 0.0
  %5242 = vmatprep.subr.mxu0 0.0
  %5243 = vmatpush1.msra.mxu0 0.0
  %5244 = vmatprep.subr.mxu0 0.0
  %5245 = vmatpush1.msra.mxu0 0.0
  %5246 = vmatprep.subr.mxu0 0.0
  %5247 = vmatpush1.msra.mxu0 0.0
  %5248 = vmatprep.subr.mxu0 0.0
  %5249 = vmatpush1.msra.mxu0 %v5219
  %5250 = vmatprep.subr.mxu0 0.0
  %5251 = vmatpush1.msra.mxu0 %v5218
  %5252 = vmatprep.subr.mxu0 0.0
  %5253 = vmatpush1.msra.mxu0 %v5217
  %5254 = vmatprep.subr.mxu0 0.0
  %5255 = vmatpush1.msra.mxu0 %v5216
  %5256 = vmatprep.subr.mxu0 0.0
  %5257 = vmatpush2.msra.mxu0 0.0
  %5258 = vmatprep.subr.mxu0 0.0
  %5259 = vmatpush2.msra.mxu0 0.0
  %5260 = vmatprep.subr.mxu0 0.0
  %5261 = vmatpush2.msra.mxu0 0.0
  %5262 = vmatprep.subr.mxu0 0.0
  %5263 = vmatpush2.msra.mxu0 0.0
  %5264 = vmatprep.subr.mxu0 0.0
  %5265 = vmatpush2.msra.mxu0 0.0
  %5266 = vmatprep.subr.mxu0 0.0
  %5267 = vmatpush2.msra.mxu0 0.0
  %5268 = vmatprep.subr.mxu0 0.0
  %5269 = vmatpush2.msra.mxu0 0.0
  %5270 = vmatprep.subr.mxu0 0.0
  %5271 = vmatpush2.msra.mxu0 0.0
  %5272 = vmatprep.subr.mxu0 0.0
  %5273 = vmatpush2.msra.mxu0 0.0
  %5274 = vmatprep.subr.mxu0 0.0
  %5275 = vmatpush2.msra.mxu0 0.0
  %5276 = vmatprep.subr.mxu0 0.0
  %5277 = vmatpush2.msra.mxu0 0.0
  %5278 = vmatprep.subr.mxu0 0.0
  %5279 = vmatpush2.msra.mxu0 0.0
  %5280 = vmatprep.subr.mxu0 0.0
  %5281 = vmatpush2.msra.mxu0 0.0
  %5282 = vmatprep.subr.mxu0 0.0
  %5283 = vmatpush2.msra.mxu0 0.0
  %5284 = vmatprep.subr.mxu0 0.0
  %5285 = vmatpush2.msra.mxu0 0.0
  %5286 = vmatprep.subr.mxu0 0.0
  %5287 = vmatpush2.msra.mxu0 0.0
  %5288 = vmatprep.mubr.f32.mxu0 0.0
  %5289 = vmatmul.mubr.f32.gmra.mxu0 %v5222
  %v5290 = vpop.f32.mrf.mxu0
  %v5291 = vadd.f32 0.0, %v5290
  %v5292 = vpop.f32.mrf.mxu0
  %5293 = vdwg.mxu0
  %5294 = vmatprep.subr.mxu0 0.0
  %5295 = vmatpush1.msra.mxu0 %v4255
  %5296 = vmatprep.subr.mxu0 0.0
  %5297 = vmatpush1.msra.mxu0 %v4254
  %5298 = vmatprep.subr.mxu0 0.0
  %5299 = vmatpush1.msra.mxu0 %v4253
  %5300 = vmatprep.subr.mxu0 0.0
  %5301 = vmatpush1.msra.mxu0 %v4252
  %5302 = vmatprep.subr.mxu0 0.0
  %5303 = vmatpush1.msra.mxu0 %v4251
  %5304 = vmatprep.subr.mxu0 0.0
  %5305 = vmatpush1.msra.mxu0 %v4250
  %5306 = vmatprep.subr.mxu0 0.0
  %5307 = vmatpush1.msra.mxu0 %v4249
  %5308 = vmatprep.subr.mxu0 0.0
  %5309 = vmatpush1.msra.mxu0 %v4248
  %5310 = vmatprep.subr.mxu0 0.0
  %5311 = vmatpush1.msra.mxu0 %v4247
  %5312 = vmatprep.subr.mxu0 0.0
  %5313 = vmatpush1.msra.mxu0 %v4246
  %5314 = vmatprep.subr.mxu0 0.0
  %5315 = vmatpush1.msra.mxu0 %v4245
  %5316 = vmatprep.subr.mxu0 0.0
  %5317 = vmatpush1.msra.mxu0 %v4244
  %5318 = vmatprep.subr.mxu0 0.0
  %5319 = vmatpush1.msra.mxu0 %v4243
  %5320 = vmatprep.subr.mxu0 0.0
  %5321 = vmatpush1.msra.mxu0 %v4242
  %5322 = vmatprep.subr.mxu0 0.0
  %5323 = vmatpush1.msra.mxu0 %v4241
  %5324 = vmatprep.subr.mxu0 0.0
  %5325 = vmatpush1.msra.mxu0 %v4240
  %5326 = vmatprep.subr.mxu0 0.0
  %5327 = vmatpush2.msra.mxu0 0.0
  %5328 = vmatprep.subr.mxu0 0.0
  %5329 = vmatpush2.msra.mxu0 0.0
  %5330 = vmatprep.subr.mxu0 0.0
  %5331 = vmatpush2.msra.mxu0 0.0
  %5332 = vmatprep.subr.mxu0 0.0
  %5333 = vmatpush2.msra.mxu0 0.0
  %5334 = vmatprep.subr.mxu0 0.0
  %5335 = vmatpush2.msra.mxu0 0.0
  %5336 = vmatprep.subr.mxu0 0.0
  %5337 = vmatpush2.msra.mxu0 0.0
  %5338 = vmatprep.subr.mxu0 0.0
  %5339 = vmatpush2.msra.mxu0 0.0
  %5340 = vmatprep.subr.mxu0 0.0
  %5341 = vmatpush2.msra.mxu0 0.0
  %5342 = vmatprep.subr.mxu0 0.0
  %5343 = vmatpush2.msra.mxu0 0.0
  %5344 = vmatprep.subr.mxu0 0.0
  %5345 = vmatpush2.msra.mxu0 0.0
  %5346 = vmatprep.subr.mxu0 0.0
  %5347 = vmatpush2.msra.mxu0 0.0
  %5348 = vmatprep.subr.mxu0 0.0
  %5349 = vmatpush2.msra.mxu0 0.0
  %5350 = vmatprep.subr.mxu0 0.0
  %5351 = vmatpush2.msra.mxu0 0.0
  %5352 = vmatprep.subr.mxu0 0.0
  %5353 = vmatpush2.msra.mxu0 0.0
  %5354 = vmatprep.subr.mxu0 0.0
  %5355 = vmatpush2.msra.mxu0 0.0
  %5356 = vmatprep.subr.mxu0 0.0
  %5357 = vmatpush2.msra.mxu0 0.0
  %5358 = vmatprep.mubr.f32.mxu0 0.0
  %5359 = vmatmul.mubr.f32.gmra.mxu0 %v5291
  %v5360 = vpop.f32.mrf.mxu0
  %v5361 = vadd.f32 0.0, %v5360
  %v5362 = vpop.f32.mrf.mxu0
  %5363 = vdwg.mxu0
  %vm5364 = vcmp.gt.f32.partialorder %v5361, 0.0
  %v5365 = vmul.f32 %v5361, 0.2
  %v5366 = vsel %vm5364, %v5361, %v5365
  %v5367 = vld [vmem:[%s61] sm:$0xff]
  %v5368 = vld [vmem:[%s61 + $0x8] sm:$0xff]
  %v5369 = vld [vmem:[%s63] sm:$0xff]
  %v5370 = vld [vmem:[%s63 + $0x8] sm:$0xff]
  %5372 = vset.pattern.permute.xlu0 0
  %5373 = vperm.xlu0 %5372, %v5369
  %v5374 = vpop.permute.xlu0 %5373
  %5377 = vset.pattern.permute.xlu0 0
  %5378 = vperm.xlu0 %5377, %v5370
  %v5379 = vpop.permute.xlu0 %5378
  %v5382 = vsel %vm240, %v5367, 0
  %v5385 = vsel %vm240, %v5368, 0
  %5387 = vmatprep.subr.mxu0 0.0
  %5388 = vmatpush1.msra.mxu0 0.0
  %5389 = vmatprep.subr.mxu0 0.0
  %5390 = vmatpush1.msra.mxu0 0.0
  %5391 = vmatprep.subr.mxu0 0.0
  %5392 = vmatpush1.msra.mxu0 0.0
  %5393 = vmatprep.subr.mxu0 0.0
  %5394 = vmatpush1.msra.mxu0 0.0
  %5395 = vmatprep.subr.mxu0 0.0
  %5396 = vmatpush1.msra.mxu0 0.0
  %5397 = vmatprep.subr.mxu0 0.0
  %5398 = vmatpush1.msra.mxu0 0.0
  %5399 = vmatprep.subr.mxu0 0.0
  %5400 = vmatpush1.msra.mxu0 0.0
  %5401 = vmatprep.subr.mxu0 0.0
  %5402 = vmatpush1.msra.mxu0 0.0
  %5403 = vmatprep.subr.mxu0 0.0
  %5404 = vmatpush1.msra.mxu0 0.0
  %5405 = vmatprep.subr.mxu0 0.0
  %5406 = vmatpush1.msra.mxu0 0.0
  %5407 = vmatprep.subr.mxu0 0.0
  %5408 = vmatpush1.msra.mxu0 0.0
  %5409 = vmatprep.subr.mxu0 0.0
  %5410 = vmatpush1.msra.mxu0 0.0
  %5411 = vmatprep.subr.mxu0 0.0
  %5412 = vmatpush1.msra.mxu0 0.0
  %5413 = vmatprep.subr.mxu0 0.0
  %5414 = vmatpush1.msra.mxu0 0.0
  %5415 = vmatprep.subr.mxu0 0.0
  %5416 = vmatpush1.msra.mxu0 %v5366
  %5417 = vmatprep.subr.mxu0 0.0
  %5418 = vmatpush1.msra.mxu0 %v4239
  %5419 = vmatprep.subr.mxu0 0.0
  %5420 = vmatpush2.msra.mxu0 0.0
  %5421 = vmatprep.subr.mxu0 0.0
  %5422 = vmatpush2.msra.mxu0 0.0
  %5423 = vmatprep.subr.mxu0 0.0
  %5424 = vmatpush2.msra.mxu0 0.0
  %5425 = vmatprep.subr.mxu0 0.0
  %5426 = vmatpush2.msra.mxu0 0.0
  %5427 = vmatprep.subr.mxu0 0.0
  %5428 = vmatpush2.msra.mxu0 0.0
  %5429 = vmatprep.subr.mxu0 0.0
  %5430 = vmatpush2.msra.mxu0 0.0
  %5431 = vmatprep.subr.mxu0 0.0
  %5432 = vmatpush2.msra.mxu0 0.0
  %5433 = vmatprep.subr.mxu0 0.0
  %5434 = vmatpush2.msra.mxu0 0.0
  %5435 = vmatprep.subr.mxu0 0.0
  %5436 = vmatpush2.msra.mxu0 0.0
  %5437 = vmatprep.subr.mxu0 0.0
  %5438 = vmatpush2.msra.mxu0 0.0
  %5439 = vmatprep.subr.mxu0 0.0
  %5440 = vmatpush2.msra.mxu0 0.0
  %5441 = vmatprep.subr.mxu0 0.0
  %5442 = vmatpush2.msra.mxu0 0.0
  %5443 = vmatprep.subr.mxu0 0.0
  %5444 = vmatpush2.msra.mxu0 0.0
  %5445 = vmatprep.subr.mxu0 0.0
  %5446 = vmatpush2.msra.mxu0 0.0
  %5447 = vmatprep.subr.mxu0 0.0
  %5448 = vmatpush2.msra.mxu0 0.0
  %5449 = vmatprep.subr.mxu0 0.0
  %5450 = vmatpush2.msra.mxu0 0.0
  %5451 = vmatprep.mubr.f32.mxu0 0.0
  %5452 = vmatmul.mubr.f32.gmra.mxu0 %v5382
  %v5453 = vpop.f32.mrf.mxu0
  %v5454 = vadd.f32 %v5374, %v5453
  %v5455 = vpop.f32.mrf.mxu0
  %5456 = vmatprep.mubr.f32.mxu0 0.0
  %5457 = vmatmul.mubr.f32.gmra.mxu0 %v5385
  %v5458 = vpop.f32.mrf.mxu0
  %v5459 = vadd.f32 %v5379, %v5458
  %v5460 = vpop.f32.mrf.mxu0
  %5461 = vdwg.mxu0
  %v5462 = vadd.f32 %v5454, %v2852
  %v5463 = vadd.f32 %v5459, %v2853
  %5464 = vst [vmem:[%s65] sm:$0xff] %v5462
  %5465 = vst [vmem:[%s65 + $0x8] sm:$0xff] %v5463
  // Predicated region
  $region130: #{stripgcm_forward.1} parent=0 // pred_check
    _
  $region131: #{stripgcm_forward.1} parent=0 // pred_check_branch
    %5467 = sbr.rel (0) target = $region133
  $region132: #{stripgcm_forward.1} parent=0 // pred_region
    _
  $region133: #{stripgcm_forward.1} parent=0 // pred_fallthru
    _
  // Predicated region
  $region134: #{stripgcm_forward.1} parent=0 // pred_check
    _
  $region135: #{stripgcm_forward.1} parent=0 // pred_check_branch
    %5469 = sbr.rel (0) target = $region137
  $region136: #{stripgcm_forward.1} parent=0 // pred_region
    _
  $region137: #{stripgcm_forward.1} parent=0 // pred_fallthru
    _

</llo_original>
